<compile_context>
chip_gen: v6e
topology: v6e:2x2x1
jax: 0.10.0
libtpu: 0.0.40
codegen_flags: <defaults>
</compile_context>

<pallas_src>
import jax
import jax.numpy as jnp
import numpy as np
from jax import lax
from jax.experimental import pallas as pl
from jax.experimental.pallas import tpu as pltpu


# ---------------------------------------------------------------------------
# Fused kernel: MaxUnpool2d(2,2) + num_layers x (3x3 conv, pad=1, folded BN, ReLU)
# Processes one batch element per grid step; everything stays in VMEM.
# ---------------------------------------------------------------------------
def _make_fused_kernel(num_layers):

    def kernel(x_ref, idx_ref, *refs):
        o_ref = refs[-1]
        wb = refs[:-1]                       # (w0, b0, w1, b1, ...)
        _, H, W, Cin = x_ref.shape
        OH, OW = 2 * H, 2 * W
        P = OH * OW

        x = x_ref[0]                         # (H, W, Cin)  float32
        idx = idx_ref[0]                     # (H, W, Cin)  int32 MaxPool flat indices

        # ---- MaxUnpool2d(kernel=2, stride=2) -------------------------------
        # Each pooled value goes to exactly one of the 4 positions of its 2x2
        # output window; select with an elementwise index match, then interleave
        # the 4 parity taps into the dense (2H, 2W, Cin) image (all in vregs).
        ii = lax.broadcasted_iota(jnp.int32, (H, W, Cin), 0)
        jj = lax.broadcasted_iota(jnp.int32, (H, W, Cin), 1)
        base = (2 * ii) * OW + 2 * jj        # flat index of window's top-left pixel
        row_pairs = []
        for dh in range(2):
            taps = [jnp.where(base + (dh * OW + dw) == idx, x, 0.0)
                    for dw in range(2)]
            # column interleave: (H, W, 2, Cin) -> (H, 2W, Cin)
            row_pairs.append(jnp.stack(taps, axis=2).reshape(H, OW, Cin))
        # row interleave: (H, 2, 2W, Cin) -> (2H, 2W, Cin)
        h = jnp.stack(row_pairs, axis=1).reshape(OH, OW, Cin)

        # ---- conv 3x3 (pad=1) + folded-BN bias + ReLU, one matmul per layer --
        for layer in range(num_layers):
            w_ref, b_ref = wb[2 * layer], wb[2 * layer + 1]
            C = h.shape[-1]
            # in-kernel zero padding (never touches HBM)
            zc = jnp.zeros((OH, 1, C), jnp.float32)
            zr = jnp.zeros((1, OW + 2, C), jnp.float32)
            hp = jnp.concatenate([zc, h, zc], axis=1)
            hp = jnp.concatenate([zr, hp, zr], axis=0)          # (OH+2, OW+2, C)
            # im2col: (P, 9*C), column order (kh, kw, ci) matches weight layout
            patches = jnp.concatenate(
                [hp[kh:kh + OH, kw:kw + OW, :].reshape(P, C)
                 for kh in range(3) for kw in range(3)], axis=-1)
            acc = jnp.dot(patches.astype(w_ref.dtype), w_ref[...],
                          preferred_element_type=jnp.float32)    # one MXU matmul
            act = jnp.maximum(acc + b_ref[...], 0.0)             # bias + ReLU (f32)
            if layer + 1 < num_layers:
                h = act.reshape(OH, OW, act.shape[-1])
            else:
                # lane-dense store: (Cout, 4*H*W); NCHW reshape in wrapper is free
                o_ref[0] = act.T.astype(o_ref.dtype)

    return kernel


# ---------------------------------------------------------------------------
# Wrapper: NCHW in / NCHW out (PyTorch convention).
# ---------------------------------------------------------------------------
def upsample_block_forward(x_nchw, indices_nchw, params,
                           compute_dtype=jnp.float32):
    """params: list of (w2d, bias_row) per ConvBNAct layer (see make_conv_bn_params)."""
    N, Cin, H, W = x_nchw.shape
    OH, OW = 2 * H, 2 * W
    Cout = params[-1][0].shape[-1]

    # NCHW -> NHWC only on the small pooled tensors (channels on the lane axis).
    x = jnp.transpose(x_nchw, (0, 2, 3, 1))
    idx = jnp.transpose(indices_nchw, (0, 2, 3, 1)).astype(jnp.int32)

    in_specs = [
        pl.BlockSpec((1, H, W, Cin), lambda n: (n, 0, 0, 0)),
        pl.BlockSpec((1, H, W, Cin), lambda n: (n, 0, 0, 0)),
    ]
    flat = []
    for w2d, b in params:
        flat += [w2d.astype(compute_dtype), b.astype(jnp.float32)]
        in_specs += [pl.BlockSpec(w2d.shape, lambda n: (0, 0)),   # VMEM-resident
                     pl.BlockSpec(b.shape, lambda n: (0, 0))]

    out = pl.pallas_call(
        _make_fused_kernel(len(params)),
        out_shape=jax.ShapeDtypeStruct((N, Cout, OH * OW), x_nchw.dtype),
        grid=(N,),
        in_specs=in_specs,
        out_specs=pl.BlockSpec((1, Cout, OH * OW), lambda n: (n, 0, 0)),
        compiler_params=pltpu.CompilerParams(
            dimension_semantics=("parallel",)),
    )(x, idx, *flat)

    # (N, Cout, 4HW) -> (N, Cout, 2H, 2W): contiguous reshape, no data movement.
    return out.reshape(N, Cout, OH, OW)


# ---------------------------------------------------------------------------
# Parameter construction (ConvBNAct: Conv2d(3x3, bias=False) + BN(eval) + ReLU).
# BN scale is folded into the conv weight; weight is laid out (9*Cin, Cout) so the
# kernel does a single im2col matmul per layer.
# ---------------------------------------------------------------------------
def make_conv_bn_params(key, cin, cout, eps=1e-5):
    kw, kg, kb, km, kv = jax.random.split(key, 5)
    w_oihw = jax.random.normal(kw, (cout, cin, 3, 3), jnp.float32) * 0.1
    gamma = jax.random.uniform(kg, (cout,), jnp.float32, 0.5, 1.5)
    beta = jax.random.normal(kb, (cout,), jnp.float32) * 0.1
    mean = jax.random.normal(km, (cout,), jnp.float32) * 0.1
    var = jax.random.uniform(kv, (cout,), jnp.float32, 0.5, 1.5)

    scale = gamma / jnp.sqrt(var + eps)
    bias = beta - mean * scale
    # OIHW -> HWIO, fold BN scale, flatten to (kh*kw*cin, cout) for im2col matmul.
    w_hwio = jnp.transpose(w_oihw, (2, 3, 1, 0)) * scale[None, None, None, :]
    w2d = w_hwio.reshape(9 * cin, cout)
    kernel_params = (w2d, bias[None, :])
    raw_params = (w_oihw, gamma, beta, mean, var)
    return kernel_params, raw_params


# ---------------------------------------------------------------------------
# Pure-JAX reference (NCHW) for correctness check.
# ---------------------------------------------------------------------------
def ref_forward(x, idx, raw_params, eps=1e-5):
    N, C, H, W = x.shape
    Ho, Wo = 2 * H, 2 * W
    up = jnp.zeros((N, C, Ho * Wo), x.dtype)
    up = up.at[jnp.arange(N)[:, None, None],
               jnp.arange(C)[None, :, None],
               idx.reshape(N, C, H * W)].set(x.reshape(N, C, H * W))
    y = up.reshape(N, C, Ho, Wo)
    for (w_oihw, gamma, beta, mean, var) in raw_params:
        y = lax.conv_general_dilated(
            y, w_oihw, (1, 1), "SAME",
            dimension_numbers=("NCHW", "OIHW", "NCHW"))
        s = gamma / jnp.sqrt(var + eps)
        b = beta - mean * s
        y = y * s[None, :, None, None] + b[None, :, None, None]
        y = jnp.maximum(y, 0.0)
    return y


if __name__ == "__main__":
    key = jax.random.PRNGKey(0)
    N, Cin, Cout, H, W = 2, 4, 8, 8, 8   # pooled input 8x8 -> unpooled 16x16

    k_x, k_dh, k_dw, k_l1, k_l2 = jax.random.split(key, 5)
    x = jax.random.normal(k_x, (N, Cin, H, W), jnp.float32)

    # valid MaxPool2d(2,2) indices: one position per 2x2 window of the 2Hx2W plane
    dh = jax.random.randint(k_dh, (N, Cin, H, W), 0, 2)
    dw = jax.random.randint(k_dw, (N, Cin, H, W), 0, 2)
    ii = jnp.arange(H)[None, None, :, None]
    jj = jnp.arange(W)[None, None, None, :]
    indices = ((2 * ii + dh) * (2 * W) + (2 * jj + dw)).astype(jnp.int32)

    # extra_conv=False: ConvBNAct(Cin->Cin), ConvBNAct(Cin->Cout)
    p1, r1 = make_conv_bn_params(k_l1, Cin, Cin)
    p2, r2 = make_conv_bn_params(k_l2, Cin, Cout)

    fwd = jax.jit(upsample_block_forward)
    out = jax.block_until_ready(fwd(x, indices, [p1, p2]))

    ref = jax.block_until_ready(ref_forward(x, indices, [r1, r2]))
    assert out.shape == (N, Cout, 2 * H, 2 * W), out.shape
    np.testing.assert_allclose(np.asarray(out), np.asarray(ref),
                               rtol=5e-4, atol=5e-4)
    print("KERNEL_OK")
</pallas_src>

<mosaic_0001>
module attributes {stable_mosaic.version = 11 : i64} {
  func.func @kernel(%arg0: i32, %arg1: memref<1x8x8x4xf32, #tpu.memory_space<vmem>>, %arg2: memref<1x8x8x4xi32, #tpu.memory_space<vmem>>, %arg3: memref<36x4xf32, #tpu.memory_space<vmem>>, %arg4: memref<1x4xf32, #tpu.memory_space<vmem>>, %arg5: memref<36x8xf32, #tpu.memory_space<vmem>>, %arg6: memref<1x8xf32, #tpu.memory_space<vmem>>, %arg7: memref<1x8x256xf32, #tpu.memory_space<vmem>>) attributes {dimension_semantics = [#tpu.dimension_semantics<parallel>], iteration_bounds = array<i64: 2>, scalar_prefetch = 0 : i64, scratch_operands = 0 : i64, tpu.core_type = #tpu.core_type<tc>, window_params = [{transform_indices = @transform_0, window_bounds = array<i64: 1, 8, 8, 4>}, {transform_indices = @transform_1, window_bounds = array<i64: 1, 8, 8, 4>}, {pipeline_mode = #tpu.pipeline_mode<synchronous>, transform_indices = @transform_2, window_bounds = array<i64: 36, 4>}, {pipeline_mode = #tpu.pipeline_mode<synchronous>, transform_indices = @transform_3, window_bounds = array<i64: 1, 4>}, {pipeline_mode = #tpu.pipeline_mode<synchronous>, transform_indices = @transform_4, window_bounds = array<i64: 36, 8>}, {pipeline_mode = #tpu.pipeline_mode<synchronous>, transform_indices = @transform_5, window_bounds = array<i64: 1, 8>}, {transform_indices = @transform_6, window_bounds = array<i64: 1, 8, 256>}]} {
    %c0 = arith.constant 0 : index
    %c0_0 = arith.constant 0 : index
    %c0_1 = arith.constant 0 : index
    %c0_2 = arith.constant 0 : index
    %0 = vector.load %arg1[%c0, %c0_0, %c0_1, %c0_2] : memref<1x8x8x4xf32, #tpu.memory_space<vmem>>, vector<1x8x8x4xf32>
    %1 = vector.shape_cast %0 : vector<1x8x8x4xf32> to vector<8x8x4xf32>
    %c0_3 = arith.constant 0 : index
    %c0_4 = arith.constant 0 : index
    %c0_5 = arith.constant 0 : index
    %c0_6 = arith.constant 0 : index
    %2 = vector.load %arg2[%c0_3, %c0_4, %c0_5, %c0_6] : memref<1x8x8x4xi32, #tpu.memory_space<vmem>>, vector<1x8x8x4xi32>
    %3 = vector.shape_cast %2 : vector<1x8x8x4xi32> to vector<8x8x4xi32>
    %4 = tpu.iota {dimensions = array<i32: 0>} : vector<8x8x4xi32>
    %5 = tpu.iota {dimensions = array<i32: 1>} : vector<8x8x4xi32>
    %c2_i32 = arith.constant 2 : i32
    %6 = vector.broadcast %c2_i32 : i32 to vector<8x8x4xi32>
    %7 = arith.muli %6, %4 : vector<8x8x4xi32>
    %c16_i32 = arith.constant 16 : i32
    %8 = vector.broadcast %c16_i32 : i32 to vector<8x8x4xi32>
    %9 = arith.muli %7, %8 : vector<8x8x4xi32>
    %c2_i32_7 = arith.constant 2 : i32
    %10 = vector.broadcast %c2_i32_7 : i32 to vector<8x8x4xi32>
    %11 = arith.muli %10, %5 : vector<8x8x4xi32>
    %12 = arith.addi %9, %11 : vector<8x8x4xi32>
    %c0_i32 = arith.constant 0 : i32
    %13 = vector.broadcast %c0_i32 : i32 to vector<8x8x4xi32>
    %14 = arith.addi %12, %13 : vector<8x8x4xi32>
    %15 = arith.cmpi eq, %14, %3 : vector<8x8x4xi32>
    %cst = arith.constant 0.000000e+00 : f32
    %16 = vector.broadcast %cst : f32 to vector<8x8x4xf32>
    %17 = arith.select %15, %1, %16 : vector<8x8x4xi1>, vector<8x8x4xf32>
    %c1_i32 = arith.constant 1 : i32
    %18 = vector.broadcast %c1_i32 : i32 to vector<8x8x4xi32>
    %19 = arith.addi %12, %18 : vector<8x8x4xi32>
    %20 = arith.cmpi eq, %19, %3 : vector<8x8x4xi32>
    %cst_8 = arith.constant 0.000000e+00 : f32
    %21 = vector.broadcast %cst_8 : f32 to vector<8x8x4xf32>
    %22 = arith.select %20, %1, %21 : vector<8x8x4xi1>, vector<8x8x4xf32>
    %23 = vector.shape_cast %17 : vector<8x8x4xf32> to vector<8x8x1x4xf32>
    %24 = vector.shape_cast %22 : vector<8x8x4xf32> to vector<8x8x1x4xf32>
    %25 = tpu.concatenate %23, %24 in 2 : vector<8x8x1x4xf32>, vector<8x8x1x4xf32> -> vector<8x8x2x4xf32>
    %26 = vector.shape_cast %25 : vector<8x8x2x4xf32> to vector<8x16x4xf32>
    %c16_i32_9 = arith.constant 16 : i32
    %27 = vector.broadcast %c16_i32_9 : i32 to vector<8x8x4xi32>
    %28 = arith.addi %12, %27 : vector<8x8x4xi32>
    %29 = arith.cmpi eq, %28, %3 : vector<8x8x4xi32>
    %cst_10 = arith.constant 0.000000e+00 : f32
    %30 = vector.broadcast %cst_10 : f32 to vector<8x8x4xf32>
    %31 = arith.select %29, %1, %30 : vector<8x8x4xi1>, vector<8x8x4xf32>
    %c17_i32 = arith.constant 17 : i32
    %32 = vector.broadcast %c17_i32 : i32 to vector<8x8x4xi32>
    %33 = arith.addi %12, %32 : vector<8x8x4xi32>
    %34 = arith.cmpi eq, %33, %3 : vector<8x8x4xi32>
    %cst_11 = arith.constant 0.000000e+00 : f32
    %35 = vector.broadcast %cst_11 : f32 to vector<8x8x4xf32>
    %36 = arith.select %34, %1, %35 : vector<8x8x4xi1>, vector<8x8x4xf32>
    %37 = vector.shape_cast %31 : vector<8x8x4xf32> to vector<8x8x1x4xf32>
    %38 = vector.shape_cast %36 : vector<8x8x4xf32> to vector<8x8x1x4xf32>
    %39 = tpu.concatenate %37, %38 in 2 : vector<8x8x1x4xf32>, vector<8x8x1x4xf32> -> vector<8x8x2x4xf32>
    %40 = vector.shape_cast %39 : vector<8x8x2x4xf32> to vector<8x16x4xf32>
    %41 = vector.shape_cast %26 : vector<8x16x4xf32> to vector<8x1x16x4xf32>
    %42 = vector.shape_cast %40 : vector<8x16x4xf32> to vector<8x1x16x4xf32>
    %43 = tpu.concatenate %41, %42 in 1 : vector<8x1x16x4xf32>, vector<8x1x16x4xf32> -> vector<8x2x16x4xf32>
    %44 = vector.shape_cast %43 : vector<8x2x16x4xf32> to vector<16x16x4xf32>
    %cst_12 = arith.constant 0.000000e+00 : f32
    %45 = vector.broadcast %cst_12 : f32 to vector<16x1x4xf32>
    %cst_13 = arith.constant 0.000000e+00 : f32
    %46 = vector.broadcast %cst_13 : f32 to vector<1x18x4xf32>
    %47 = tpu.concatenate %45, %44, %45 in 1 : vector<16x1x4xf32>, vector<16x16x4xf32>, vector<16x1x4xf32> -> vector<16x18x4xf32>
    %48 = tpu.concatenate %46, %47, %46 in 0 : vector<1x18x4xf32>, vector<16x18x4xf32>, vector<1x18x4xf32> -> vector<18x18x4xf32>
    %49 = vector.extract_strided_slice %48 {offsets = [0, 0, 0], sizes = [16, 16, 4], strides = [1, 1, 1]} : vector<18x18x4xf32> to vector<16x16x4xf32>
    %50 = vector.shape_cast %49 : vector<16x16x4xf32> to vector<256x4xf32>
    %51 = vector.extract_strided_slice %48 {offsets = [0, 1, 0], sizes = [16, 16, 4], strides = [1, 1, 1]} : vector<18x18x4xf32> to vector<16x16x4xf32>
    %52 = vector.shape_cast %51 : vector<16x16x4xf32> to vector<256x4xf32>
    %53 = vector.extract_strided_slice %48 {offsets = [0, 2, 0], sizes = [16, 16, 4], strides = [1, 1, 1]} : vector<18x18x4xf32> to vector<16x16x4xf32>
    %54 = vector.shape_cast %53 : vector<16x16x4xf32> to vector<256x4xf32>
    %55 = vector.extract_strided_slice %48 {offsets = [1, 0, 0], sizes = [16, 16, 4], strides = [1, 1, 1]} : vector<18x18x4xf32> to vector<16x16x4xf32>
    %56 = vector.shape_cast %55 : vector<16x16x4xf32> to vector<256x4xf32>
    %57 = vector.extract_strided_slice %48 {offsets = [1, 1, 0], sizes = [16, 16, 4], strides = [1, 1, 1]} : vector<18x18x4xf32> to vector<16x16x4xf32>
    %58 = vector.shape_cast %57 : vector<16x16x4xf32> to vector<256x4xf32>
    %59 = vector.extract_strided_slice %48 {offsets = [1, 2, 0], sizes = [16, 16, 4], strides = [1, 1, 1]} : vector<18x18x4xf32> to vector<16x16x4xf32>
    %60 = vector.shape_cast %59 : vector<16x16x4xf32> to vector<256x4xf32>
    %61 = vector.extract_strided_slice %48 {offsets = [2, 0, 0], sizes = [16, 16, 4], strides = [1, 1, 1]} : vector<18x18x4xf32> to vector<16x16x4xf32>
    %62 = vector.shape_cast %61 : vector<16x16x4xf32> to vector<256x4xf32>
    %63 = vector.extract_strided_slice %48 {offsets = [2, 1, 0], sizes = [16, 16, 4], strides = [1, 1, 1]} : vector<18x18x4xf32> to vector<16x16x4xf32>
    %64 = vector.shape_cast %63 : vector<16x16x4xf32> to vector<256x4xf32>
    %65 = vector.extract_strided_slice %48 {offsets = [2, 2, 0], sizes = [16, 16, 4], strides = [1, 1, 1]} : vector<18x18x4xf32> to vector<16x16x4xf32>
    %66 = vector.shape_cast %65 : vector<16x16x4xf32> to vector<256x4xf32>
    %67 = tpu.concatenate %50, %52, %54, %56, %58, %60, %62, %64, %66 in 1 : vector<256x4xf32>, vector<256x4xf32>, vector<256x4xf32>, vector<256x4xf32>, vector<256x4xf32>, vector<256x4xf32>, vector<256x4xf32>, vector<256x4xf32>, vector<256x4xf32> -> vector<256x36xf32>
    %c0_14 = arith.constant 0 : index
    %c0_15 = arith.constant 0 : index
    %68 = vector.load %arg3[%c0_14, %c0_15] : memref<36x4xf32, #tpu.memory_space<vmem>>, vector<36x4xf32>
    %cst_16 = arith.constant dense<0.000000e+00> : vector<256x4xf32>
    %69 = tpu.matmul %67, %68, %cst_16 {dimension_numbers = #tpu.dot_dimension_numbers<[1], [0], [0], [1], [0, 0, 1, 1], [], []>} : vector<256x36xf32>, vector<36x4xf32>, vector<256x4xf32> -> vector<256x4xf32>
    %c0_17 = arith.constant 0 : index
    %c0_18 = arith.constant 0 : index
    %70 = vector.load %arg4[%c0_17, %c0_18] : memref<1x4xf32, #tpu.memory_space<vmem>>, vector<1x4xf32>
    %71 = vector.broadcast %70 : vector<1x4xf32> to vector<256x4xf32>
    %72 = arith.addf %69, %71 : vector<256x4xf32>
    %cst_19 = arith.constant 0.000000e+00 : f32
    %73 = vector.broadcast %cst_19 : f32 to vector<256x4xf32>
    %74 = arith.maximumf %72, %73 : vector<256x4xf32>
    %75 = vector.shape_cast %74 : vector<256x4xf32> to vector<16x16x4xf32>
    %cst_20 = arith.constant 0.000000e+00 : f32
    %76 = vector.broadcast %cst_20 : f32 to vector<16x1x4xf32>
    %cst_21 = arith.constant 0.000000e+00 : f32
    %77 = vector.broadcast %cst_21 : f32 to vector<1x18x4xf32>
    %78 = tpu.concatenate %76, %75, %76 in 1 : vector<16x1x4xf32>, vector<16x16x4xf32>, vector<16x1x4xf32> -> vector<16x18x4xf32>
    %79 = tpu.concatenate %77, %78, %77 in 0 : vector<1x18x4xf32>, vector<16x18x4xf32>, vector<1x18x4xf32> -> vector<18x18x4xf32>
    %80 = vector.extract_strided_slice %79 {offsets = [0, 0, 0], sizes = [16, 16, 4], strides = [1, 1, 1]} : vector<18x18x4xf32> to vector<16x16x4xf32>
    %81 = vector.shape_cast %80 : vector<16x16x4xf32> to vector<256x4xf32>
    %82 = vector.extract_strided_slice %79 {offsets = [0, 1, 0], sizes = [16, 16, 4], strides = [1, 1, 1]} : vector<18x18x4xf32> to vector<16x16x4xf32>
    %83 = vector.shape_cast %82 : vector<16x16x4xf32> to vector<256x4xf32>
    %84 = vector.extract_strided_slice %79 {offsets = [0, 2, 0], sizes = [16, 16, 4], strides = [1, 1, 1]} : vector<18x18x4xf32> to vector<16x16x4xf32>
    %85 = vector.shape_cast %84 : vector<16x16x4xf32> to vector<256x4xf32>
    %86 = vector.extract_strided_slice %79 {offsets = [1, 0, 0], sizes = [16, 16, 4], strides = [1, 1, 1]} : vector<18x18x4xf32> to vector<16x16x4xf32>
    %87 = vector.shape_cast %86 : vector<16x16x4xf32> to vector<256x4xf32>
    %88 = vector.extract_strided_slice %79 {offsets = [1, 1, 0], sizes = [16, 16, 4], strides = [1, 1, 1]} : vector<18x18x4xf32> to vector<16x16x4xf32>
    %89 = vector.shape_cast %88 : vector<16x16x4xf32> to vector<256x4xf32>
    %90 = vector.extract_strided_slice %79 {offsets = [1, 2, 0], sizes = [16, 16, 4], strides = [1, 1, 1]} : vector<18x18x4xf32> to vector<16x16x4xf32>
    %91 = vector.shape_cast %90 : vector<16x16x4xf32> to vector<256x4xf32>
    %92 = vector.extract_strided_slice %79 {offsets = [2, 0, 0], sizes = [16, 16, 4], strides = [1, 1, 1]} : vector<18x18x4xf32> to vector<16x16x4xf32>
    %93 = vector.shape_cast %92 : vector<16x16x4xf32> to vector<256x4xf32>
    %94 = vector.extract_strided_slice %79 {offsets = [2, 1, 0], sizes = [16, 16, 4], strides = [1, 1, 1]} : vector<18x18x4xf32> to vector<16x16x4xf32>
    %95 = vector.shape_cast %94 : vector<16x16x4xf32> to vector<256x4xf32>
    %96 = vector.extract_strided_slice %79 {offsets = [2, 2, 0], sizes = [16, 16, 4], strides = [1, 1, 1]} : vector<18x18x4xf32> to vector<16x16x4xf32>
    %97 = vector.shape_cast %96 : vector<16x16x4xf32> to vector<256x4xf32>
    %98 = tpu.concatenate %81, %83, %85, %87, %89, %91, %93, %95, %97 in 1 : vector<256x4xf32>, vector<256x4xf32>, vector<256x4xf32>, vector<256x4xf32>, vector<256x4xf32>, vector<256x4xf32>, vector<256x4xf32>, vector<256x4xf32>, vector<256x4xf32> -> vector<256x36xf32>
    %c0_22 = arith.constant 0 : index
    %c0_23 = arith.constant 0 : index
    %99 = vector.load %arg5[%c0_22, %c0_23] : memref<36x8xf32, #tpu.memory_space<vmem>>, vector<36x8xf32>
    %cst_24 = arith.constant dense<0.000000e+00> : vector<256x8xf32>
    %100 = tpu.matmul %98, %99, %cst_24 {dimension_numbers = #tpu.dot_dimension_numbers<[1], [0], [0], [1], [0, 0, 1, 1], [], []>} : vector<256x36xf32>, vector<36x8xf32>, vector<256x8xf32> -> vector<256x8xf32>
    %c0_25 = arith.constant 0 : index
    %c0_26 = arith.constant 0 : index
    %101 = vector.load %arg6[%c0_25, %c0_26] : memref<1x8xf32, #tpu.memory_space<vmem>>, vector<1x8xf32>
    %102 = vector.broadcast %101 : vector<1x8xf32> to vector<256x8xf32>
    %103 = arith.addf %100, %102 : vector<256x8xf32>
    %cst_27 = arith.constant 0.000000e+00 : f32
    %104 = vector.broadcast %cst_27 : f32 to vector<256x8xf32>
    %105 = arith.maximumf %103, %104 : vector<256x8xf32>
    %106 = tpu.transpose %105, [1, 0] : vector<256x8xf32> -> vector<8x256xf32>
    %c0_28 = arith.constant 0 : index
    %c0_29 = arith.constant 0 : index
    %c0_30 = arith.constant 0 : index
    %107 = vector.load %arg7[%c0_28, %c0_29, %c0_30] : memref<1x8x256xf32, #tpu.memory_space<vmem>>, vector<1x8x256xf32>
    %108 = vector.shape_cast %107 : vector<1x8x256xf32> to vector<8x256xf32>
    %109 = vector.shape_cast %106 : vector<8x256xf32> to vector<1x8x256xf32>
    tpu.vector_store %arg7[%c0_28, %c0_29, %c0_30], %109 {strides = array<i32>} : memref<1x8x256xf32, #tpu.memory_space<vmem>>, vector<1x8x256xf32>,
    return
  }
  func.func @transform_0(%arg0: i32) -> (i32, i32, i32, i32) {
    %c0_i32 = arith.constant 0 : i32
    %c0_i32_0 = arith.constant 0 : i32
    %c0_i32_1 = arith.constant 0 : i32
    %c0_i32_2 = arith.constant 0 : i32
    return %arg0, %c0_i32, %c0_i32_0, %c0_i32_1 : i32, i32, i32, i32
  }
  func.func @transform_1(%arg0: i32) -> (i32, i32, i32, i32) {
    %c0_i32 = arith.constant 0 : i32
    %c0_i32_0 = arith.constant 0 : i32
    %c0_i32_1 = arith.constant 0 : i32
    %c0_i32_2 = arith.constant 0 : i32
    return %arg0, %c0_i32, %c0_i32_0, %c0_i32_1 : i32, i32, i32, i32
  }
  func.func @transform_2(%arg0: i32) -> (i32, i32) {
    %c0_i32 = arith.constant 0 : i32
    %c0_i32_0 = arith.constant 0 : i32
    %c0_i32_1 = arith.constant 0 : i32
    return %c0_i32, %c0_i32_0 : i32, i32
  }
  func.func @transform_3(%arg0: i32) -> (i32, i32) {
    %c0_i32 = arith.constant 0 : i32
    %c0_i32_0 = arith.constant 0 : i32
    %c0_i32_1 = arith.constant 0 : i32
    return %c0_i32, %c0_i32_0 : i32, i32
  }
  func.func @transform_4(%arg0: i32) -> (i32, i32) {
    %c0_i32 = arith.constant 0 : i32
    %c0_i32_0 = arith.constant 0 : i32
    %c0_i32_1 = arith.constant 0 : i32
    return %c0_i32, %c0_i32_0 : i32, i32
  }
  func.func @transform_5(%arg0: i32) -> (i32, i32) {
    %c0_i32 = arith.constant 0 : i32
    %c0_i32_0 = arith.constant 0 : i32
    %c0_i32_1 = arith.constant 0 : i32
    return %c0_i32, %c0_i32_0 : i32, i32
  }
  func.func @transform_6(%arg0: i32) -> (i32, i32, i32) {
    %c0_i32 = arith.constant 0 : i32
    %c0_i32_0 = arith.constant 0 : i32
    %c0_i32_1 = arith.constant 0 : i32
    return %arg0, %c0_i32, %c0_i32_0 : i32, i32, i32
  }
}

</mosaic_0001>

<llo_original>
// kernel: upsample_block_forward.1
$region0: #{upsample_block_forward.1}
  #allocation0 [shape = 'u32[]', space=smem, size = 0x4, offset = 0x4, fixed_abs, tag = 'smem constant byte address 0x4 - core index']
  #allocation1 [shape = 'u32[144,128]{1,0:T(1,128)}', space=vmem, size = 0x12000, scoped, tag = 'internal scratch']
  %s0 = inlined_call_operand.vmem [shape: f32[2,8,8,4], index: 0, kind: input, shape index: {}]
  %s1 = inlined_call_operand.vmem [shape: s32[2,8,8,4], index: 1, kind: input, shape index: {}]
  %s2 = inlined_call_operand.vmem [shape: f32[36,4], index: 2, kind: input, shape index: {}]
  %s3 = inlined_call_operand.vmem [shape: f32[1,4], index: 3, kind: input, shape index: {}]
  %s4 = inlined_call_operand.vmem [shape: f32[36,8], index: 4, kind: input, shape index: {}]
  %s5 = inlined_call_operand.vmem [shape: f32[1,8], index: 5, kind: input, shape index: {}]
  %s6 = inlined_call_operand.vmem [shape: f32[2,8,256], index: 6, kind: output, shape index: {}]
  %s7 = sld [smem:[#allocation0]]
  $region57: #{upsample_block_forward.1} parent=0
    _
  %s9 = ssub.s32 1, %s7
  %s10 = scalar_select 0, %s9, %s7
  loop: start=0, step=1, limit=4
  $region2: #{upsample_block_forward.1} parent=0 // loop_pre_header
    _
  $region3: #{upsample_block_forward.1} parent=0 // loop_header
    %s12 = sphi 0, %s16
    %p13 = scmp.ge.s32.totalorder %s12, 4
    %s22 = sphi 0, %s24
    %s25 = sphi 0, %s22
    %s26 = sphi 0, %s25
    %s42 = sphi 0, %s26
    %s48 = sphi 0, %s50
    %s51 = sphi 0, %s48
    %s52 = sphi 0, %s51
    %s68 = sphi 0, %s52
    %s72 = sphi 0, %s72
    %s74 = sphi 0, %s72
    %s75 = sphi 0, %s74
    %s89 = sphi 0, %s75
    %s93 = sphi 0, %s93
    %s95 = sphi 0, %s93
    %s96 = sphi 0, %s95
    %s110 = sphi 0, %s96
    %s114 = sphi 0, %s114
    %s116 = sphi 0, %s114
    %s117 = sphi 0, %s116
    %s131 = sphi 0, %s117
    %s135 = sphi 0, %s135
    %s137 = sphi 0, %s135
    %s138 = sphi 0, %s137
    %s152 = sphi 0, %s138
    %s158 = sphi 0, %s160
    %s161 = sphi 0, %s158
    %s162 = sphi 0, %s161
    %s178 = sphi 0, %s162
  $region4: #{upsample_block_forward.1} parent=0 // loop_header_branch
    %15 = sbr.rel (%p13) target = $region8
  $region5: #{upsample_block_forward.1} parent=0 // loop_body
    %s17 = ssub.s32 %s12, 1
    %s18 = ssub.s32 %s12, 2
    %s19 = sadd.s32 %s12, 1
    %s20 = ssub.s32 %s12, %s19
    %p21 = scmp.eq.s32.totalorder %s20, 0
    %s23 = sadd.s32 %s22, 1
    %s24 = scalar_select %p21, %s22, %s23
    %p27 = pneg %p21
    %p28 = scmp.eq.s32.totalorder %s12, 1
    %p29 = por %p27, %p28
    %p30 = scmp.ne.s32.totalorder %s22, %s25
    %p31 = scmp.eq.s32.totalorder %s12, 0
    %p32 = por %p30, %p31
    %p33 = scmp.ne.s32.totalorder %s22, %s25
    %p34 = scmp.eq.s32.totalorder %s17, 1
    %p35 = por %p33, %p34
    %p36 = scmp.ne.s32.totalorder %s25, %s26
    %p37 = scmp.eq.s32.totalorder %s17, 0
    %p38 = por %p36, %p37
    %p39 = scmp.ne.s32.totalorder %s25, %s26
    %p40 = scmp.eq.s32.totalorder %s18, 1
    %p41 = por %p39, %p40
    %p43 = scmp.ne.s32.totalorder %s26, %s42
    %p44 = scmp.eq.s32.totalorder %s18, 0
    %p45 = por %p43, %p44
    %s46 = ssub.s32 %s12, %s19
    %p47 = scmp.eq.s32.totalorder %s46, 0
    %s49 = sadd.s32 %s48, 1
    %s50 = scalar_select %p47, %s48, %s49
    %p53 = pneg %p47
    %p54 = scmp.eq.s32.totalorder %s12, 1
    %p55 = por %p53, %p54
    %p56 = scmp.ne.s32.totalorder %s48, %s51
    %p57 = scmp.eq.s32.totalorder %s12, 0
    %p58 = por %p56, %p57
    %p59 = scmp.ne.s32.totalorder %s48, %s51
    %p60 = scmp.eq.s32.totalorder %s17, 1
    %p61 = por %p59, %p60
    %p62 = scmp.ne.s32.totalorder %s51, %s52
    %p63 = scmp.eq.s32.totalorder %s17, 0
    %p64 = por %p62, %p63
    %p65 = scmp.ne.s32.totalorder %s51, %s52
    %p66 = scmp.eq.s32.totalorder %s18, 1
    %p67 = por %p65, %p66
    %p69 = scmp.ne.s32.totalorder %s52, %s68
    %p70 = scmp.eq.s32.totalorder %s18, 0
    %p71 = por %p69, %p70
    %s73 = sadd.s32 %s72, 1
    %p76 = scmp.eq.s32.totalorder %s12, 1
    %p77 = scmp.ne.s32.totalorder %s72, %s74
    %p78 = scmp.eq.s32.totalorder %s12, 0
    %p79 = por %p77, %p78
    %p80 = scmp.ne.s32.totalorder %s72, %s74
    %p81 = scmp.eq.s32.totalorder %s17, 1
    %p82 = por %p80, %p81
    %p83 = scmp.ne.s32.totalorder %s74, %s75
    %p84 = scmp.eq.s32.totalorder %s17, 0
    %p85 = por %p83, %p84
    %p86 = scmp.ne.s32.totalorder %s74, %s75
    %p87 = scmp.eq.s32.totalorder %s18, 1
    %p88 = por %p86, %p87
    %p90 = scmp.ne.s32.totalorder %s75, %s89
    %p91 = scmp.eq.s32.totalorder %s18, 0
    %p92 = por %p90, %p91
    %s94 = sadd.s32 %s93, 1
    %p97 = scmp.eq.s32.totalorder %s12, 1
    %p98 = scmp.ne.s32.totalorder %s93, %s95
    %p99 = scmp.eq.s32.totalorder %s12, 0
    %p100 = por %p98, %p99
    %p101 = scmp.ne.s32.totalorder %s93, %s95
    %p102 = scmp.eq.s32.totalorder %s17, 1
    %p103 = por %p101, %p102
    %p104 = scmp.ne.s32.totalorder %s95, %s96
    %p105 = scmp.eq.s32.totalorder %s17, 0
    %p106 = por %p104, %p105
    %p107 = scmp.ne.s32.totalorder %s95, %s96
    %p108 = scmp.eq.s32.totalorder %s18, 1
    %p109 = por %p107, %p108
    %p111 = scmp.ne.s32.totalorder %s96, %s110
    %p112 = scmp.eq.s32.totalorder %s18, 0
    %p113 = por %p111, %p112
    %s115 = sadd.s32 %s114, 1
    %p118 = scmp.eq.s32.totalorder %s12, 1
    %p119 = scmp.ne.s32.totalorder %s114, %s116
    %p120 = scmp.eq.s32.totalorder %s12, 0
    %p121 = por %p119, %p120
    %p122 = scmp.ne.s32.totalorder %s114, %s116
    %p123 = scmp.eq.s32.totalorder %s17, 1
    %p124 = por %p122, %p123
    %p125 = scmp.ne.s32.totalorder %s116, %s117
    %p126 = scmp.eq.s32.totalorder %s17, 0
    %p127 = por %p125, %p126
    %p128 = scmp.ne.s32.totalorder %s116, %s117
    %p129 = scmp.eq.s32.totalorder %s18, 1
    %p130 = por %p128, %p129
    %p132 = scmp.ne.s32.totalorder %s117, %s131
    %p133 = scmp.eq.s32.totalorder %s18, 0
    %p134 = por %p132, %p133
    %s136 = sadd.s32 %s135, 1
    %p139 = scmp.eq.s32.totalorder %s12, 1
    %p140 = scmp.ne.s32.totalorder %s135, %s137
    %p141 = scmp.eq.s32.totalorder %s12, 0
    %p142 = por %p140, %p141
    %p143 = scmp.ne.s32.totalorder %s135, %s137
    %p144 = scmp.eq.s32.totalorder %s17, 1
    %p145 = por %p143, %p144
    %p146 = scmp.ne.s32.totalorder %s137, %s138
    %p147 = scmp.eq.s32.totalorder %s17, 0
    %p148 = por %p146, %p147
    %p149 = scmp.ne.s32.totalorder %s137, %s138
    %p150 = scmp.eq.s32.totalorder %s18, 1
    %p151 = por %p149, %p150
    %p153 = scmp.ne.s32.totalorder %s138, %s152
    %p154 = scmp.eq.s32.totalorder %s18, 0
    %p155 = por %p153, %p154
    %s156 = ssub.s32 %s12, %s19
    %p157 = scmp.eq.s32.totalorder %s156, 0
    %s159 = sadd.s32 %s158, 1
    %s160 = scalar_select %p157, %s158, %s159
    %p163 = pneg %p157
    %p164 = scmp.eq.s32.totalorder %s12, 1
    %p165 = por %p163, %p164
    %p166 = scmp.ne.s32.totalorder %s158, %s161
    %p167 = scmp.eq.s32.totalorder %s12, 0
    %p168 = por %p166, %p167
    %p169 = scmp.ne.s32.totalorder %s158, %s161
    %p170 = scmp.eq.s32.totalorder %s17, 1
    %p171 = por %p169, %p170
    %p172 = scmp.ne.s32.totalorder %s161, %s162
    %p173 = scmp.eq.s32.totalorder %s17, 0
    %p174 = por %p172, %p173
    %p175 = scmp.ne.s32.totalorder %s161, %s162
    %p176 = scmp.eq.s32.totalorder %s18, 1
    %p177 = por %p175, %p176
    %p179 = scmp.ne.s32.totalorder %s162, %s178
    %p180 = scmp.eq.s32.totalorder %s18, 0
    %p181 = por %p179, %p180
    %p182 = scmp.le.s32.totalorder 1, %s12
    %p183 = scmp.lt.s32.totalorder %s12, 3
    %p184 = pnand %p182, %p183
    %p185 = pneg %p184
    // Predicated region
    $region9: #{upsample_block_forward.1} parent=5 // pred_check
      _
    $region10: #{upsample_block_forward.1} parent=5 // pred_check_branch
      %187 = sbr.rel (%p184) target = $region12
    $region11: #{upsample_block_forward.1} parent=5 // pred_region
      %s188 = ssub.s32 %s12, 1
      // Predicated region
      $region13: #{upsample_block_forward.1} parent=11 // pred_check
        %p189 = pneg %p85
      $region14: #{upsample_block_forward.1} parent=11 // pred_check_branch
        %191 = sbr.rel (%p189) target = $region16
      $region15: #{upsample_block_forward.1} parent=11 // pred_region
        _
      $region16: #{upsample_block_forward.1} parent=11 // pred_fallthru
        _
      // Predicated region
      $region17: #{upsample_block_forward.1} parent=11 // pred_check
        %p192 = pneg %p106
      $region18: #{upsample_block_forward.1} parent=11 // pred_check_branch
        %194 = sbr.rel (%p192) target = $region20
      $region19: #{upsample_block_forward.1} parent=11 // pred_region
        _
      $region20: #{upsample_block_forward.1} parent=11 // pred_fallthru
        _
      // Predicated region
      $region21: #{upsample_block_forward.1} parent=11 // pred_check
        %p195 = pneg %p127
      $region22: #{upsample_block_forward.1} parent=11 // pred_check_branch
        %197 = sbr.rel (%p195) target = $region24
      $region23: #{upsample_block_forward.1} parent=11 // pred_region
        _
      $region24: #{upsample_block_forward.1} parent=11 // pred_fallthru
        _
      // Predicated region
      $region25: #{upsample_block_forward.1} parent=11 // pred_check
        %p198 = pneg %p148
      $region26: #{upsample_block_forward.1} parent=11 // pred_check_branch
        %200 = sbr.rel (%p198) target = $region28
      $region27: #{upsample_block_forward.1} parent=11 // pred_region
        _
      $region28: #{upsample_block_forward.1} parent=11 // pred_fallthru
        _
    $region12: #{upsample_block_forward.1} parent=5 // pred_fallthru
      _
    %p201 = scmp.lt.s32.totalorder %s12, 2
    // Predicated region
    $region29: #{upsample_block_forward.1} parent=5 // pred_check
      %p202 = pneg %p201
    $region30: #{upsample_block_forward.1} parent=5 // pred_check_branch
      %204 = sbr.rel (%p202) target = $region32
    $region31: #{upsample_block_forward.1} parent=5 // pred_region
      // Predicated region
      $region33: #{upsample_block_forward.1} parent=31 // pred_check
        %p205 = pneg %p32
      $region34: #{upsample_block_forward.1} parent=31 // pred_check_branch
        %207 = sbr.rel (%p205) target = $region36
      $region35: #{upsample_block_forward.1} parent=31 // pred_region
        %p208 = scmp.lt.s32.totalorder %s12, 1
        %s209 = scalar_select %p208, %s12, 1
        %s210 = smul.addr %s209, 8
        %s211 = smul.addr %s210, 8
        %s212 = scalar_lea.vmem %s0, %s211
      $region36: #{upsample_block_forward.1} parent=31 // pred_fallthru
        _
      // Predicated region
      $region37: #{upsample_block_forward.1} parent=31 // pred_check
        %p213 = pneg %p58
      $region38: #{upsample_block_forward.1} parent=31 // pred_check_branch
        %215 = sbr.rel (%p213) target = $region40
      $region39: #{upsample_block_forward.1} parent=31 // pred_region
        %p216 = scmp.lt.s32.totalorder %s12, 1
        %s217 = scalar_select %p216, %s12, 1
        %s218 = smul.addr %s217, 8
        %s219 = smul.addr %s218, 8
        %s220 = scalar_lea.vmem %s1, %s219
      $region40: #{upsample_block_forward.1} parent=31 // pred_fallthru
        _
    $region32: #{upsample_block_forward.1} parent=5 // pred_fallthru
      _
    %p221 = scmp.le.s32.totalorder 1, %s12
    %p222 = scmp.lt.s32.totalorder %s12, 3
    %p223 = pnand %p221, %p222
    %p224 = pneg %p223
    // Predicated region
    $region41: #{upsample_block_forward.1} parent=5 // pred_check
      _
    $region42: #{upsample_block_forward.1} parent=5 // pred_check_branch
      %226 = sbr.rel (%p223) target = $region44
    $region43: #{upsample_block_forward.1} parent=5 // pred_region
      %s227 = ssub.s32 %s12, 1
      %p228 = scmp.lt.s32.totalorder %s17, 1
      %s229 = scalar_select %p228, %s17, 1
      %s230 = smul.addr %s229, 8
      %s231 = smul.addr %s230, 8
      %s232 = scalar_lea.vmem %s0, %s231
      %p233 = pneg %p38
      %p234 = pneg %p35
      %p235 = scmp.lt.s32.totalorder %s17, 1
      %s236 = scalar_select %p235, %s17, 1
      %s237 = smul.addr %s236, 8
      %s238 = smul.addr %s237, 8
      %s239 = scalar_lea.vmem %s1, %s238
      %p240 = pneg %p64
      %p241 = pneg %p61
      %p242 = pneg %p85
      %p243 = pneg %p82
      %p244 = pneg %p106
      %p245 = pneg %p103
      %p246 = pneg %p127
      %p247 = pneg %p124
      %p248 = pneg %p148
      %p249 = pneg %p145
      %p250 = pneg %p174
      %p251 = pneg %p171
      %p252 = scmp.lt.s32.totalorder %s17, 1
      %s253 = scalar_select %p252, %s17, 1
      %s254 = smul.addr %s253, 2
      %s255 = smul.addr %s254, 8
      %s256 = scalar_lea.vmem %s6, %s255
      %p257 = scmp.lt.s32.totalorder %s17, 1
      %s258 = scalar_select %p257, %s17, 1
      %s259 = smul.addr %s258, 8
      %s260 = smul.addr %s259, 8
      %s261 = scalar_lea.vmem %s0, %s260
      %p262 = scmp.lt.s32.totalorder %s17, 1
      %s263 = scalar_select %p262, %s17, 1
      %s264 = smul.addr %s263, 8
      %s265 = smul.addr %s264, 8
      %s266 = scalar_lea.vmem %s1, %s265
      %p267 = scmp.lt.s32.totalorder %s17, 1
      %s268 = scalar_select %p267, %s17, 1
      %s269 = smul.addr %s268, 2
      %s270 = smul.addr %s269, 8
      %s271 = scalar_lea.vmem %s6, %s270
      %v272 = vld [vmem:[%s261] sm:$0xff]
      %v273 = vld [vmem:[%s261 + $0x8] sm:$0xff]
      %v274 = vld [vmem:[%s261 + $0x10] sm:$0xff]
      %v275 = vld [vmem:[%s261 + $0x18] sm:$0xff]
      %v276 = vld [vmem:[%s261 + $0x20] sm:$0xff]
      %v277 = vld [vmem:[%s261 + $0x28] sm:$0xff]
      %v278 = vld [vmem:[%s261 + $0x30] sm:$0xff]
      %v279 = vld [vmem:[%s261 + $0x38] sm:$0xff]
      %v280 = vld [vmem:[%s266] sm:$0xff]
      %v281 = vld [vmem:[%s266 + $0x8] sm:$0xff]
      %v282 = vld [vmem:[%s266 + $0x10] sm:$0xff]
      %v283 = vld [vmem:[%s266 + $0x18] sm:$0xff]
      %v284 = vld [vmem:[%s266 + $0x20] sm:$0xff]
      %v285 = vld [vmem:[%s266 + $0x28] sm:$0xff]
      %v286 = vld [vmem:[%s266 + $0x30] sm:$0xff]
      %v287 = vld [vmem:[%s266 + $0x38] sm:$0xff]
      %v288 = vlaneseq
      %v289 = vshrl.u32 %v288, 7
      %v290 = vmul.u32 %v289, 2
      %v291 = vadd.s32 %v290, 32
      %v292 = vadd.s32 %v290, 64
      %v293 = vadd.s32 %v290, 96
      %v294 = vadd.s32 %v290, 128
      %v295 = vadd.s32 %v290, 160
      %v296 = vadd.s32 %v290, 192
      %v297 = vadd.s32 %v290, 224
      %vm298 = vcmp.eq.s32.totalorder %v290, %v280
      %vm299 = vcmp.eq.s32.totalorder %v291, %v281
      %vm300 = vcmp.eq.s32.totalorder %v292, %v282
      %vm301 = vcmp.eq.s32.totalorder %v293, %v283
      %vm302 = vcmp.eq.s32.totalorder %v294, %v284
      %vm303 = vcmp.eq.s32.totalorder %v295, %v285
      %vm304 = vcmp.eq.s32.totalorder %v296, %v286
      %vm305 = vcmp.eq.s32.totalorder %v297, %v287
      %v306 = vsel %vm298, %v272, 0.0
      %v307 = vsel %vm299, %v273, 0.0
      %v308 = vsel %vm300, %v274, 0.0
      %v309 = vsel %vm301, %v275, 0.0
      %v310 = vsel %vm302, %v276, 0.0
      %v311 = vsel %vm303, %v277, 0.0
      %v312 = vsel %vm304, %v278, 0.0
      %v313 = vsel %vm305, %v279, 0.0
      %v314 = vadd.s32 %v290, 1
      %v315 = vadd.s32 %v291, 1
      %v316 = vadd.s32 %v292, 1
      %v317 = vadd.s32 %v293, 1
      %v318 = vadd.s32 %v294, 1
      %v319 = vadd.s32 %v295, 1
      %v320 = vadd.s32 %v296, 1
      %v321 = vadd.s32 %v297, 1
      %vm322 = vcmp.eq.s32.totalorder %v314, %v280
      %vm323 = vcmp.eq.s32.totalorder %v315, %v281
      %vm324 = vcmp.eq.s32.totalorder %v316, %v282
      %vm325 = vcmp.eq.s32.totalorder %v317, %v283
      %vm326 = vcmp.eq.s32.totalorder %v318, %v284
      %vm327 = vcmp.eq.s32.totalorder %v319, %v285
      %vm328 = vcmp.eq.s32.totalorder %v320, %v286
      %vm329 = vcmp.eq.s32.totalorder %v321, %v287
      %v330 = vsel %vm322, %v272, 0.0
      %v331 = vsel %vm323, %v273, 0.0
      %v332 = vsel %vm324, %v274, 0.0
      %v333 = vsel %vm325, %v275, 0.0
      %v334 = vsel %vm326, %v276, 0.0
      %v335 = vsel %vm327, %v277, 0.0
      %v336 = vsel %vm328, %v278, 0.0
      %v337 = vsel %vm329, %v279, 0.0
      %v346 = vcombine.high %v306, %v306
      %v348 = vunpack.c.l.s4 1966171168
      %v349 = vunpack.c.0.s8 %v348
      %v350 = vlaneseq
      %v351 = vshrl.u32 %v350, 7
      %v352 = vsub.s32 %v349, %v351
      %v353 = vrot.slane %v306, %v352
      %v355 = vunpack.c.l.s4 1966171168
      %v356 = vunpack.c.0.s8 %v355
      %v357 = vlaneseq
      %v358 = vshrl.u32 %v357, 7
      %v359 = vsub.s32 %v356, %v358
      %v360 = vrot.slane %v346, %v359
      %v361 = vcombine.high %v353, %v353
      %v362 = vcombine.high %v360, %v360
      %v364 = vunpack.c.l.s4 1966171168
      %v365 = vunpack.c.0.s8 %v364
      %v366 = vlaneseq
      %v367 = vshrl.u32 %v366, 7
      %v368 = vsub.s32 %v365, %v367
      %v369 = vrot.slane %v353, %v368
      %v371 = vunpack.c.l.s4 1966171168
      %v372 = vunpack.c.0.s8 %v371
      %v373 = vlaneseq
      %v374 = vshrl.u32 %v373, 7
      %v375 = vsub.s32 %v372, %v374
      %v376 = vrot.slane %v360, %v375
      %v378 = vunpack.c.l.s4 1966171168
      %v379 = vunpack.c.0.s8 %v378
      %v380 = vlaneseq
      %v381 = vshrl.u32 %v380, 7
      %v382 = vsub.s32 %v379, %v381
      %v383 = vrot.slane %v361, %v382
      %v385 = vunpack.c.l.s4 1966171168
      %v386 = vunpack.c.0.s8 %v385
      %v387 = vlaneseq
      %v388 = vshrl.u32 %v387, 7
      %v389 = vsub.s32 %v386, %v388
      %v390 = vrot.slane %v362, %v389
      %v391 = vcombine.high %v369, %v369
      %v392 = vcombine.high %v376, %v376
      %v393 = vcombine.high %v383, %v383
      %v394 = vcombine.high %v390, %v390
      %v395 = vcombine.high %v307, %v307
      %v397 = vunpack.c.l.s4 1966171168
      %v398 = vunpack.c.0.s8 %v397
      %v399 = vlaneseq
      %v400 = vshrl.u32 %v399, 7
      %v401 = vsub.s32 %v398, %v400
      %v402 = vrot.slane %v307, %v401
      %v404 = vunpack.c.l.s4 1966171168
      %v405 = vunpack.c.0.s8 %v404
      %v406 = vlaneseq
      %v407 = vshrl.u32 %v406, 7
      %v408 = vsub.s32 %v405, %v407
      %v409 = vrot.slane %v395, %v408
      %v410 = vcombine.high %v402, %v402
      %v411 = vcombine.high %v409, %v409
      %v413 = vunpack.c.l.s4 1966171168
      %v414 = vunpack.c.0.s8 %v413
      %v415 = vlaneseq
      %v416 = vshrl.u32 %v415, 7
      %v417 = vsub.s32 %v414, %v416
      %v418 = vrot.slane %v402, %v417
      %v420 = vunpack.c.l.s4 1966171168
      %v421 = vunpack.c.0.s8 %v420
      %v422 = vlaneseq
      %v423 = vshrl.u32 %v422, 7
      %v424 = vsub.s32 %v421, %v423
      %v425 = vrot.slane %v409, %v424
      %v427 = vunpack.c.l.s4 1966171168
      %v428 = vunpack.c.0.s8 %v427
      %v429 = vlaneseq
      %v430 = vshrl.u32 %v429, 7
      %v431 = vsub.s32 %v428, %v430
      %v432 = vrot.slane %v410, %v431
      %v434 = vunpack.c.l.s4 1966171168
      %v435 = vunpack.c.0.s8 %v434
      %v436 = vlaneseq
      %v437 = vshrl.u32 %v436, 7
      %v438 = vsub.s32 %v435, %v437
      %v439 = vrot.slane %v411, %v438
      %v440 = vcombine.high %v418, %v418
      %v441 = vcombine.high %v425, %v425
      %v442 = vcombine.high %v432, %v432
      %v443 = vcombine.high %v439, %v439
      %v444 = vcombine.high %v308, %v308
      %v446 = vunpack.c.l.s4 1966171168
      %v447 = vunpack.c.0.s8 %v446
      %v448 = vlaneseq
      %v449 = vshrl.u32 %v448, 7
      %v450 = vsub.s32 %v447, %v449
      %v451 = vrot.slane %v308, %v450
      %v453 = vunpack.c.l.s4 1966171168
      %v454 = vunpack.c.0.s8 %v453
      %v455 = vlaneseq
      %v456 = vshrl.u32 %v455, 7
      %v457 = vsub.s32 %v454, %v456
      %v458 = vrot.slane %v444, %v457
      %v459 = vcombine.high %v451, %v451
      %v460 = vcombine.high %v458, %v458
      %v462 = vunpack.c.l.s4 1966171168
      %v463 = vunpack.c.0.s8 %v462
      %v464 = vlaneseq
      %v465 = vshrl.u32 %v464, 7
      %v466 = vsub.s32 %v463, %v465
      %v467 = vrot.slane %v451, %v466
      %v469 = vunpack.c.l.s4 1966171168
      %v470 = vunpack.c.0.s8 %v469
      %v471 = vlaneseq
      %v472 = vshrl.u32 %v471, 7
      %v473 = vsub.s32 %v470, %v472
      %v474 = vrot.slane %v458, %v473
      %v476 = vunpack.c.l.s4 1966171168
      %v477 = vunpack.c.0.s8 %v476
      %v478 = vlaneseq
      %v479 = vshrl.u32 %v478, 7
      %v480 = vsub.s32 %v477, %v479
      %v481 = vrot.slane %v459, %v480
      %v483 = vunpack.c.l.s4 1966171168
      %v484 = vunpack.c.0.s8 %v483
      %v485 = vlaneseq
      %v486 = vshrl.u32 %v485, 7
      %v487 = vsub.s32 %v484, %v486
      %v488 = vrot.slane %v460, %v487
      %v489 = vcombine.high %v467, %v467
      %v490 = vcombine.high %v474, %v474
      %v491 = vcombine.high %v481, %v481
      %v492 = vcombine.high %v488, %v488
      %v493 = vcombine.high %v309, %v309
      %v495 = vunpack.c.l.s4 1966171168
      %v496 = vunpack.c.0.s8 %v495
      %v497 = vlaneseq
      %v498 = vshrl.u32 %v497, 7
      %v499 = vsub.s32 %v496, %v498
      %v500 = vrot.slane %v309, %v499
      %v502 = vunpack.c.l.s4 1966171168
      %v503 = vunpack.c.0.s8 %v502
      %v504 = vlaneseq
      %v505 = vshrl.u32 %v504, 7
      %v506 = vsub.s32 %v503, %v505
      %v507 = vrot.slane %v493, %v506
      %v508 = vcombine.high %v500, %v500
      %v509 = vcombine.high %v507, %v507
      %v511 = vunpack.c.l.s4 1966171168
      %v512 = vunpack.c.0.s8 %v511
      %v513 = vlaneseq
      %v514 = vshrl.u32 %v513, 7
      %v515 = vsub.s32 %v512, %v514
      %v516 = vrot.slane %v500, %v515
      %v518 = vunpack.c.l.s4 1966171168
      %v519 = vunpack.c.0.s8 %v518
      %v520 = vlaneseq
      %v521 = vshrl.u32 %v520, 7
      %v522 = vsub.s32 %v519, %v521
      %v523 = vrot.slane %v507, %v522
      %v525 = vunpack.c.l.s4 1966171168
      %v526 = vunpack.c.0.s8 %v525
      %v527 = vlaneseq
      %v528 = vshrl.u32 %v527, 7
      %v529 = vsub.s32 %v526, %v528
      %v530 = vrot.slane %v508, %v529
      %v532 = vunpack.c.l.s4 1966171168
      %v533 = vunpack.c.0.s8 %v532
      %v534 = vlaneseq
      %v535 = vshrl.u32 %v534, 7
      %v536 = vsub.s32 %v533, %v535
      %v537 = vrot.slane %v509, %v536
      %v538 = vcombine.high %v516, %v516
      %v539 = vcombine.high %v523, %v523
      %v540 = vcombine.high %v530, %v530
      %v541 = vcombine.high %v537, %v537
      %v542 = vcombine.high %v310, %v310
      %v544 = vunpack.c.l.s4 1966171168
      %v545 = vunpack.c.0.s8 %v544
      %v546 = vlaneseq
      %v547 = vshrl.u32 %v546, 7
      %v548 = vsub.s32 %v545, %v547
      %v549 = vrot.slane %v310, %v548
      %v551 = vunpack.c.l.s4 1966171168
      %v552 = vunpack.c.0.s8 %v551
      %v553 = vlaneseq
      %v554 = vshrl.u32 %v553, 7
      %v555 = vsub.s32 %v552, %v554
      %v556 = vrot.slane %v542, %v555
      %v557 = vcombine.high %v549, %v549
      %v558 = vcombine.high %v556, %v556
      %v560 = vunpack.c.l.s4 1966171168
      %v561 = vunpack.c.0.s8 %v560
      %v562 = vlaneseq
      %v563 = vshrl.u32 %v562, 7
      %v564 = vsub.s32 %v561, %v563
      %v565 = vrot.slane %v549, %v564
      %v567 = vunpack.c.l.s4 1966171168
      %v568 = vunpack.c.0.s8 %v567
      %v569 = vlaneseq
      %v570 = vshrl.u32 %v569, 7
      %v571 = vsub.s32 %v568, %v570
      %v572 = vrot.slane %v556, %v571
      %v574 = vunpack.c.l.s4 1966171168
      %v575 = vunpack.c.0.s8 %v574
      %v576 = vlaneseq
      %v577 = vshrl.u32 %v576, 7
      %v578 = vsub.s32 %v575, %v577
      %v579 = vrot.slane %v557, %v578
      %v581 = vunpack.c.l.s4 1966171168
      %v582 = vunpack.c.0.s8 %v581
      %v583 = vlaneseq
      %v584 = vshrl.u32 %v583, 7
      %v585 = vsub.s32 %v582, %v584
      %v586 = vrot.slane %v558, %v585
      %v587 = vcombine.high %v565, %v565
      %v588 = vcombine.high %v572, %v572
      %v589 = vcombine.high %v579, %v579
      %v590 = vcombine.high %v586, %v586
      %v591 = vcombine.high %v311, %v311
      %v593 = vunpack.c.l.s4 1966171168
      %v594 = vunpack.c.0.s8 %v593
      %v595 = vlaneseq
      %v596 = vshrl.u32 %v595, 7
      %v597 = vsub.s32 %v594, %v596
      %v598 = vrot.slane %v311, %v597
      %v600 = vunpack.c.l.s4 1966171168
      %v601 = vunpack.c.0.s8 %v600
      %v602 = vlaneseq
      %v603 = vshrl.u32 %v602, 7
      %v604 = vsub.s32 %v601, %v603
      %v605 = vrot.slane %v591, %v604
      %v606 = vcombine.high %v598, %v598
      %v607 = vcombine.high %v605, %v605
      %v609 = vunpack.c.l.s4 1966171168
      %v610 = vunpack.c.0.s8 %v609
      %v611 = vlaneseq
      %v612 = vshrl.u32 %v611, 7
      %v613 = vsub.s32 %v610, %v612
      %v614 = vrot.slane %v598, %v613
      %v616 = vunpack.c.l.s4 1966171168
      %v617 = vunpack.c.0.s8 %v616
      %v618 = vlaneseq
      %v619 = vshrl.u32 %v618, 7
      %v620 = vsub.s32 %v617, %v619
      %v621 = vrot.slane %v605, %v620
      %v623 = vunpack.c.l.s4 1966171168
      %v624 = vunpack.c.0.s8 %v623
      %v625 = vlaneseq
      %v626 = vshrl.u32 %v625, 7
      %v627 = vsub.s32 %v624, %v626
      %v628 = vrot.slane %v606, %v627
      %v630 = vunpack.c.l.s4 1966171168
      %v631 = vunpack.c.0.s8 %v630
      %v632 = vlaneseq
      %v633 = vshrl.u32 %v632, 7
      %v634 = vsub.s32 %v631, %v633
      %v635 = vrot.slane %v607, %v634
      %v636 = vcombine.high %v614, %v614
      %v637 = vcombine.high %v621, %v621
      %v638 = vcombine.high %v628, %v628
      %v639 = vcombine.high %v635, %v635
      %v640 = vcombine.high %v312, %v312
      %v642 = vunpack.c.l.s4 1966171168
      %v643 = vunpack.c.0.s8 %v642
      %v644 = vlaneseq
      %v645 = vshrl.u32 %v644, 7
      %v646 = vsub.s32 %v643, %v645
      %v647 = vrot.slane %v312, %v646
      %v649 = vunpack.c.l.s4 1966171168
      %v650 = vunpack.c.0.s8 %v649
      %v651 = vlaneseq
      %v652 = vshrl.u32 %v651, 7
      %v653 = vsub.s32 %v650, %v652
      %v654 = vrot.slane %v640, %v653
      %v655 = vcombine.high %v647, %v647
      %v656 = vcombine.high %v654, %v654
      %v658 = vunpack.c.l.s4 1966171168
      %v659 = vunpack.c.0.s8 %v658
      %v660 = vlaneseq
      %v661 = vshrl.u32 %v660, 7
      %v662 = vsub.s32 %v659, %v661
      %v663 = vrot.slane %v647, %v662
      %v665 = vunpack.c.l.s4 1966171168
      %v666 = vunpack.c.0.s8 %v665
      %v667 = vlaneseq
      %v668 = vshrl.u32 %v667, 7
      %v669 = vsub.s32 %v666, %v668
      %v670 = vrot.slane %v654, %v669
      %v672 = vunpack.c.l.s4 1966171168
      %v673 = vunpack.c.0.s8 %v672
      %v674 = vlaneseq
      %v675 = vshrl.u32 %v674, 7
      %v676 = vsub.s32 %v673, %v675
      %v677 = vrot.slane %v655, %v676
      %v679 = vunpack.c.l.s4 1966171168
      %v680 = vunpack.c.0.s8 %v679
      %v681 = vlaneseq
      %v682 = vshrl.u32 %v681, 7
      %v683 = vsub.s32 %v680, %v682
      %v684 = vrot.slane %v656, %v683
      %v685 = vcombine.high %v663, %v663
      %v686 = vcombine.high %v670, %v670
      %v687 = vcombine.high %v677, %v677
      %v688 = vcombine.high %v684, %v684
      %v689 = vcombine.high %v313, %v313
      %v691 = vunpack.c.l.s4 1966171168
      %v692 = vunpack.c.0.s8 %v691
      %v693 = vlaneseq
      %v694 = vshrl.u32 %v693, 7
      %v695 = vsub.s32 %v692, %v694
      %v696 = vrot.slane %v313, %v695
      %v698 = vunpack.c.l.s4 1966171168
      %v699 = vunpack.c.0.s8 %v698
      %v700 = vlaneseq
      %v701 = vshrl.u32 %v700, 7
      %v702 = vsub.s32 %v699, %v701
      %v703 = vrot.slane %v689, %v702
      %v704 = vcombine.high %v696, %v696
      %v705 = vcombine.high %v703, %v703
      %v707 = vunpack.c.l.s4 1966171168
      %v708 = vunpack.c.0.s8 %v707
      %v709 = vlaneseq
      %v710 = vshrl.u32 %v709, 7
      %v711 = vsub.s32 %v708, %v710
      %v712 = vrot.slane %v696, %v711
      %v714 = vunpack.c.l.s4 1966171168
      %v715 = vunpack.c.0.s8 %v714
      %v716 = vlaneseq
      %v717 = vshrl.u32 %v716, 7
      %v718 = vsub.s32 %v715, %v717
      %v719 = vrot.slane %v703, %v718
      %v721 = vunpack.c.l.s4 1966171168
      %v722 = vunpack.c.0.s8 %v721
      %v723 = vlaneseq
      %v724 = vshrl.u32 %v723, 7
      %v725 = vsub.s32 %v722, %v724
      %v726 = vrot.slane %v704, %v725
      %v728 = vunpack.c.l.s4 1966171168
      %v729 = vunpack.c.0.s8 %v728
      %v730 = vlaneseq
      %v731 = vshrl.u32 %v730, 7
      %v732 = vsub.s32 %v729, %v731
      %v733 = vrot.slane %v705, %v732
      %v734 = vcombine.high %v712, %v712
      %v735 = vcombine.high %v719, %v719
      %v736 = vcombine.high %v726, %v726
      %v737 = vcombine.high %v733, %v733
      %v810 = vcombine.high %v330, %v330
      %v812 = vunpack.c.l.s4 1966171168
      %v813 = vunpack.c.0.s8 %v812
      %v814 = vlaneseq
      %v815 = vshrl.u32 %v814, 7
      %v816 = vsub.s32 %v813, %v815
      %v817 = vrot.slane %v330, %v816
      %v819 = vunpack.c.l.s4 1966171168
      %v820 = vunpack.c.0.s8 %v819
      %v821 = vlaneseq
      %v822 = vshrl.u32 %v821, 7
      %v823 = vsub.s32 %v820, %v822
      %v824 = vrot.slane %v810, %v823
      %v825 = vcombine.high %v817, %v817
      %v826 = vcombine.high %v824, %v824
      %v828 = vunpack.c.l.s4 1966171168
      %v829 = vunpack.c.0.s8 %v828
      %v830 = vlaneseq
      %v831 = vshrl.u32 %v830, 7
      %v832 = vsub.s32 %v829, %v831
      %v833 = vrot.slane %v817, %v832
      %v835 = vunpack.c.l.s4 1966171168
      %v836 = vunpack.c.0.s8 %v835
      %v837 = vlaneseq
      %v838 = vshrl.u32 %v837, 7
      %v839 = vsub.s32 %v836, %v838
      %v840 = vrot.slane %v824, %v839
      %v842 = vunpack.c.l.s4 1966171168
      %v843 = vunpack.c.0.s8 %v842
      %v844 = vlaneseq
      %v845 = vshrl.u32 %v844, 7
      %v846 = vsub.s32 %v843, %v845
      %v847 = vrot.slane %v825, %v846
      %v849 = vunpack.c.l.s4 1966171168
      %v850 = vunpack.c.0.s8 %v849
      %v851 = vlaneseq
      %v852 = vshrl.u32 %v851, 7
      %v853 = vsub.s32 %v850, %v852
      %v854 = vrot.slane %v826, %v853
      %v855 = vcombine.high %v833, %v833
      %v856 = vcombine.high %v840, %v840
      %v857 = vcombine.high %v847, %v847
      %v858 = vcombine.high %v854, %v854
      %v859 = vcombine.high %v331, %v331
      %v861 = vunpack.c.l.s4 1966171168
      %v862 = vunpack.c.0.s8 %v861
      %v863 = vlaneseq
      %v864 = vshrl.u32 %v863, 7
      %v865 = vsub.s32 %v862, %v864
      %v866 = vrot.slane %v331, %v865
      %v868 = vunpack.c.l.s4 1966171168
      %v869 = vunpack.c.0.s8 %v868
      %v870 = vlaneseq
      %v871 = vshrl.u32 %v870, 7
      %v872 = vsub.s32 %v869, %v871
      %v873 = vrot.slane %v859, %v872
      %v874 = vcombine.high %v866, %v866
      %v875 = vcombine.high %v873, %v873
      %v877 = vunpack.c.l.s4 1966171168
      %v878 = vunpack.c.0.s8 %v877
      %v879 = vlaneseq
      %v880 = vshrl.u32 %v879, 7
      %v881 = vsub.s32 %v878, %v880
      %v882 = vrot.slane %v866, %v881
      %v884 = vunpack.c.l.s4 1966171168
      %v885 = vunpack.c.0.s8 %v884
      %v886 = vlaneseq
      %v887 = vshrl.u32 %v886, 7
      %v888 = vsub.s32 %v885, %v887
      %v889 = vrot.slane %v873, %v888
      %v891 = vunpack.c.l.s4 1966171168
      %v892 = vunpack.c.0.s8 %v891
      %v893 = vlaneseq
      %v894 = vshrl.u32 %v893, 7
      %v895 = vsub.s32 %v892, %v894
      %v896 = vrot.slane %v874, %v895
      %v898 = vunpack.c.l.s4 1966171168
      %v899 = vunpack.c.0.s8 %v898
      %v900 = vlaneseq
      %v901 = vshrl.u32 %v900, 7
      %v902 = vsub.s32 %v899, %v901
      %v903 = vrot.slane %v875, %v902
      %v904 = vcombine.high %v882, %v882
      %v905 = vcombine.high %v889, %v889
      %v906 = vcombine.high %v896, %v896
      %v907 = vcombine.high %v903, %v903
      %v908 = vcombine.high %v332, %v332
      %v910 = vunpack.c.l.s4 1966171168
      %v911 = vunpack.c.0.s8 %v910
      %v912 = vlaneseq
      %v913 = vshrl.u32 %v912, 7
      %v914 = vsub.s32 %v911, %v913
      %v915 = vrot.slane %v332, %v914
      %v917 = vunpack.c.l.s4 1966171168
      %v918 = vunpack.c.0.s8 %v917
      %v919 = vlaneseq
      %v920 = vshrl.u32 %v919, 7
      %v921 = vsub.s32 %v918, %v920
      %v922 = vrot.slane %v908, %v921
      %v923 = vcombine.high %v915, %v915
      %v924 = vcombine.high %v922, %v922
      %v926 = vunpack.c.l.s4 1966171168
      %v927 = vunpack.c.0.s8 %v926
      %v928 = vlaneseq
      %v929 = vshrl.u32 %v928, 7
      %v930 = vsub.s32 %v927, %v929
      %v931 = vrot.slane %v915, %v930
      %v933 = vunpack.c.l.s4 1966171168
      %v934 = vunpack.c.0.s8 %v933
      %v935 = vlaneseq
      %v936 = vshrl.u32 %v935, 7
      %v937 = vsub.s32 %v934, %v936
      %v938 = vrot.slane %v922, %v937
      %v940 = vunpack.c.l.s4 1966171168
      %v941 = vunpack.c.0.s8 %v940
      %v942 = vlaneseq
      %v943 = vshrl.u32 %v942, 7
      %v944 = vsub.s32 %v941, %v943
      %v945 = vrot.slane %v923, %v944
      %v947 = vunpack.c.l.s4 1966171168
      %v948 = vunpack.c.0.s8 %v947
      %v949 = vlaneseq
      %v950 = vshrl.u32 %v949, 7
      %v951 = vsub.s32 %v948, %v950
      %v952 = vrot.slane %v924, %v951
      %v953 = vcombine.high %v931, %v931
      %v954 = vcombine.high %v938, %v938
      %v955 = vcombine.high %v945, %v945
      %v956 = vcombine.high %v952, %v952
      %v957 = vcombine.high %v333, %v333
      %v959 = vunpack.c.l.s4 1966171168
      %v960 = vunpack.c.0.s8 %v959
      %v961 = vlaneseq
      %v962 = vshrl.u32 %v961, 7
      %v963 = vsub.s32 %v960, %v962
      %v964 = vrot.slane %v333, %v963
      %v966 = vunpack.c.l.s4 1966171168
      %v967 = vunpack.c.0.s8 %v966
      %v968 = vlaneseq
      %v969 = vshrl.u32 %v968, 7
      %v970 = vsub.s32 %v967, %v969
      %v971 = vrot.slane %v957, %v970
      %v972 = vcombine.high %v964, %v964
      %v973 = vcombine.high %v971, %v971
      %v975 = vunpack.c.l.s4 1966171168
      %v976 = vunpack.c.0.s8 %v975
      %v977 = vlaneseq
      %v978 = vshrl.u32 %v977, 7
      %v979 = vsub.s32 %v976, %v978
      %v980 = vrot.slane %v964, %v979
      %v982 = vunpack.c.l.s4 1966171168
      %v983 = vunpack.c.0.s8 %v982
      %v984 = vlaneseq
      %v985 = vshrl.u32 %v984, 7
      %v986 = vsub.s32 %v983, %v985
      %v987 = vrot.slane %v971, %v986
      %v989 = vunpack.c.l.s4 1966171168
      %v990 = vunpack.c.0.s8 %v989
      %v991 = vlaneseq
      %v992 = vshrl.u32 %v991, 7
      %v993 = vsub.s32 %v990, %v992
      %v994 = vrot.slane %v972, %v993
      %v996 = vunpack.c.l.s4 1966171168
      %v997 = vunpack.c.0.s8 %v996
      %v998 = vlaneseq
      %v999 = vshrl.u32 %v998, 7
      %v1000 = vsub.s32 %v997, %v999
      %v1001 = vrot.slane %v973, %v1000
      %v1002 = vcombine.high %v980, %v980
      %v1003 = vcombine.high %v987, %v987
      %v1004 = vcombine.high %v994, %v994
      %v1005 = vcombine.high %v1001, %v1001
      %v1006 = vcombine.high %v334, %v334
      %v1008 = vunpack.c.l.s4 1966171168
      %v1009 = vunpack.c.0.s8 %v1008
      %v1010 = vlaneseq
      %v1011 = vshrl.u32 %v1010, 7
      %v1012 = vsub.s32 %v1009, %v1011
      %v1013 = vrot.slane %v334, %v1012
      %v1015 = vunpack.c.l.s4 1966171168
      %v1016 = vunpack.c.0.s8 %v1015
      %v1017 = vlaneseq
      %v1018 = vshrl.u32 %v1017, 7
      %v1019 = vsub.s32 %v1016, %v1018
      %v1020 = vrot.slane %v1006, %v1019
      %v1021 = vcombine.high %v1013, %v1013
      %v1022 = vcombine.high %v1020, %v1020
      %v1024 = vunpack.c.l.s4 1966171168
      %v1025 = vunpack.c.0.s8 %v1024
      %v1026 = vlaneseq
      %v1027 = vshrl.u32 %v1026, 7
      %v1028 = vsub.s32 %v1025, %v1027
      %v1029 = vrot.slane %v1013, %v1028
      %v1031 = vunpack.c.l.s4 1966171168
      %v1032 = vunpack.c.0.s8 %v1031
      %v1033 = vlaneseq
      %v1034 = vshrl.u32 %v1033, 7
      %v1035 = vsub.s32 %v1032, %v1034
      %v1036 = vrot.slane %v1020, %v1035
      %v1038 = vunpack.c.l.s4 1966171168
      %v1039 = vunpack.c.0.s8 %v1038
      %v1040 = vlaneseq
      %v1041 = vshrl.u32 %v1040, 7
      %v1042 = vsub.s32 %v1039, %v1041
      %v1043 = vrot.slane %v1021, %v1042
      %v1045 = vunpack.c.l.s4 1966171168
      %v1046 = vunpack.c.0.s8 %v1045
      %v1047 = vlaneseq
      %v1048 = vshrl.u32 %v1047, 7
      %v1049 = vsub.s32 %v1046, %v1048
      %v1050 = vrot.slane %v1022, %v1049
      %v1051 = vcombine.high %v1029, %v1029
      %v1052 = vcombine.high %v1036, %v1036
      %v1053 = vcombine.high %v1043, %v1043
      %v1054 = vcombine.high %v1050, %v1050
      %v1055 = vcombine.high %v335, %v335
      %v1057 = vunpack.c.l.s4 1966171168
      %v1058 = vunpack.c.0.s8 %v1057
      %v1059 = vlaneseq
      %v1060 = vshrl.u32 %v1059, 7
      %v1061 = vsub.s32 %v1058, %v1060
      %v1062 = vrot.slane %v335, %v1061
      %v1064 = vunpack.c.l.s4 1966171168
      %v1065 = vunpack.c.0.s8 %v1064
      %v1066 = vlaneseq
      %v1067 = vshrl.u32 %v1066, 7
      %v1068 = vsub.s32 %v1065, %v1067
      %v1069 = vrot.slane %v1055, %v1068
      %v1070 = vcombine.high %v1062, %v1062
      %v1071 = vcombine.high %v1069, %v1069
      %v1073 = vunpack.c.l.s4 1966171168
      %v1074 = vunpack.c.0.s8 %v1073
      %v1075 = vlaneseq
      %v1076 = vshrl.u32 %v1075, 7
      %v1077 = vsub.s32 %v1074, %v1076
      %v1078 = vrot.slane %v1062, %v1077
      %v1080 = vunpack.c.l.s4 1966171168
      %v1081 = vunpack.c.0.s8 %v1080
      %v1082 = vlaneseq
      %v1083 = vshrl.u32 %v1082, 7
      %v1084 = vsub.s32 %v1081, %v1083
      %v1085 = vrot.slane %v1069, %v1084
      %v1087 = vunpack.c.l.s4 1966171168
      %v1088 = vunpack.c.0.s8 %v1087
      %v1089 = vlaneseq
      %v1090 = vshrl.u32 %v1089, 7
      %v1091 = vsub.s32 %v1088, %v1090
      %v1092 = vrot.slane %v1070, %v1091
      %v1094 = vunpack.c.l.s4 1966171168
      %v1095 = vunpack.c.0.s8 %v1094
      %v1096 = vlaneseq
      %v1097 = vshrl.u32 %v1096, 7
      %v1098 = vsub.s32 %v1095, %v1097
      %v1099 = vrot.slane %v1071, %v1098
      %v1100 = vcombine.high %v1078, %v1078
      %v1101 = vcombine.high %v1085, %v1085
      %v1102 = vcombine.high %v1092, %v1092
      %v1103 = vcombine.high %v1099, %v1099
      %v1104 = vcombine.high %v336, %v336
      %v1106 = vunpack.c.l.s4 1966171168
      %v1107 = vunpack.c.0.s8 %v1106
      %v1108 = vlaneseq
      %v1109 = vshrl.u32 %v1108, 7
      %v1110 = vsub.s32 %v1107, %v1109
      %v1111 = vrot.slane %v336, %v1110
      %v1113 = vunpack.c.l.s4 1966171168
      %v1114 = vunpack.c.0.s8 %v1113
      %v1115 = vlaneseq
      %v1116 = vshrl.u32 %v1115, 7
      %v1117 = vsub.s32 %v1114, %v1116
      %v1118 = vrot.slane %v1104, %v1117
      %v1119 = vcombine.high %v1111, %v1111
      %v1120 = vcombine.high %v1118, %v1118
      %v1122 = vunpack.c.l.s4 1966171168
      %v1123 = vunpack.c.0.s8 %v1122
      %v1124 = vlaneseq
      %v1125 = vshrl.u32 %v1124, 7
      %v1126 = vsub.s32 %v1123, %v1125
      %v1127 = vrot.slane %v1111, %v1126
      %v1129 = vunpack.c.l.s4 1966171168
      %v1130 = vunpack.c.0.s8 %v1129
      %v1131 = vlaneseq
      %v1132 = vshrl.u32 %v1131, 7
      %v1133 = vsub.s32 %v1130, %v1132
      %v1134 = vrot.slane %v1118, %v1133
      %v1136 = vunpack.c.l.s4 1966171168
      %v1137 = vunpack.c.0.s8 %v1136
      %v1138 = vlaneseq
      %v1139 = vshrl.u32 %v1138, 7
      %v1140 = vsub.s32 %v1137, %v1139
      %v1141 = vrot.slane %v1119, %v1140
      %v1143 = vunpack.c.l.s4 1966171168
      %v1144 = vunpack.c.0.s8 %v1143
      %v1145 = vlaneseq
      %v1146 = vshrl.u32 %v1145, 7
      %v1147 = vsub.s32 %v1144, %v1146
      %v1148 = vrot.slane %v1120, %v1147
      %v1149 = vcombine.high %v1127, %v1127
      %v1150 = vcombine.high %v1134, %v1134
      %v1151 = vcombine.high %v1141, %v1141
      %v1152 = vcombine.high %v1148, %v1148
      %v1153 = vcombine.high %v337, %v337
      %v1155 = vunpack.c.l.s4 1966171168
      %v1156 = vunpack.c.0.s8 %v1155
      %v1157 = vlaneseq
      %v1158 = vshrl.u32 %v1157, 7
      %v1159 = vsub.s32 %v1156, %v1158
      %v1160 = vrot.slane %v337, %v1159
      %v1162 = vunpack.c.l.s4 1966171168
      %v1163 = vunpack.c.0.s8 %v1162
      %v1164 = vlaneseq
      %v1165 = vshrl.u32 %v1164, 7
      %v1166 = vsub.s32 %v1163, %v1165
      %v1167 = vrot.slane %v1153, %v1166
      %v1168 = vcombine.high %v1160, %v1160
      %v1169 = vcombine.high %v1167, %v1167
      %v1171 = vunpack.c.l.s4 1966171168
      %v1172 = vunpack.c.0.s8 %v1171
      %v1173 = vlaneseq
      %v1174 = vshrl.u32 %v1173, 7
      %v1175 = vsub.s32 %v1172, %v1174
      %v1176 = vrot.slane %v1160, %v1175
      %v1178 = vunpack.c.l.s4 1966171168
      %v1179 = vunpack.c.0.s8 %v1178
      %v1180 = vlaneseq
      %v1181 = vshrl.u32 %v1180, 7
      %v1182 = vsub.s32 %v1179, %v1181
      %v1183 = vrot.slane %v1167, %v1182
      %v1185 = vunpack.c.l.s4 1966171168
      %v1186 = vunpack.c.0.s8 %v1185
      %v1187 = vlaneseq
      %v1188 = vshrl.u32 %v1187, 7
      %v1189 = vsub.s32 %v1186, %v1188
      %v1190 = vrot.slane %v1168, %v1189
      %v1192 = vunpack.c.l.s4 1966171168
      %v1193 = vunpack.c.0.s8 %v1192
      %v1194 = vlaneseq
      %v1195 = vshrl.u32 %v1194, 7
      %v1196 = vsub.s32 %v1193, %v1195
      %v1197 = vrot.slane %v1169, %v1196
      %v1198 = vcombine.high %v1176, %v1176
      %v1199 = vcombine.high %v1183, %v1183
      %v1200 = vcombine.high %v1190, %v1190
      %v1201 = vcombine.high %v1197, %v1197
      %v1202 = vlaneseq
      %v1203 = vshrl.u32 %v1202, 7
      %v1204 = vsub.s32 0, %v1203
      %v1205 = vrot.slane %v833, %v1204
      %v1206 = vlaneseq
      %v1207 = vshrl.u32 %v1206, 7
      %v1208 = vsub.s32 0, %v1207
      %v1209 = vrot.slane %v847, %v1208
      %v1210 = vlaneseq
      %v1211 = vshrl.u32 %v1210, 7
      %v1212 = vsub.s32 0, %v1211
      %v1213 = vrot.slane %v855, %v1212
      %v1214 = vlaneseq
      %v1215 = vshrl.u32 %v1214, 7
      %v1216 = vsub.s32 0, %v1215
      %v1217 = vrot.slane %v857, %v1216
      %v1218 = vlaneseq
      %v1219 = vshrl.u32 %v1218, 7
      %v1220 = vsub.s32 0, %v1219
      %v1221 = vrot.slane %v840, %v1220
      %v1222 = vlaneseq
      %v1223 = vshrl.u32 %v1222, 7
      %v1224 = vsub.s32 0, %v1223
      %v1225 = vrot.slane %v854, %v1224
      %v1226 = vlaneseq
      %v1227 = vshrl.u32 %v1226, 7
      %v1228 = vsub.s32 0, %v1227
      %v1229 = vrot.slane %v856, %v1228
      %v1230 = vlaneseq
      %v1231 = vshrl.u32 %v1230, 7
      %v1232 = vsub.s32 0, %v1231
      %v1233 = vrot.slane %v858, %v1232
      %v1234 = vlaneseq
      %v1235 = vshrl.u32 %v1234, 7
      %v1236 = vsub.s32 0, %v1235
      %v1237 = vrot.slane %v882, %v1236
      %v1238 = vlaneseq
      %v1239 = vshrl.u32 %v1238, 7
      %v1240 = vsub.s32 0, %v1239
      %v1241 = vrot.slane %v896, %v1240
      %v1242 = vlaneseq
      %v1243 = vshrl.u32 %v1242, 7
      %v1244 = vsub.s32 0, %v1243
      %v1245 = vrot.slane %v904, %v1244
      %v1246 = vlaneseq
      %v1247 = vshrl.u32 %v1246, 7
      %v1248 = vsub.s32 0, %v1247
      %v1249 = vrot.slane %v906, %v1248
      %v1250 = vlaneseq
      %v1251 = vshrl.u32 %v1250, 7
      %v1252 = vsub.s32 0, %v1251
      %v1253 = vrot.slane %v889, %v1252
      %v1254 = vlaneseq
      %v1255 = vshrl.u32 %v1254, 7
      %v1256 = vsub.s32 0, %v1255
      %v1257 = vrot.slane %v903, %v1256
      %v1258 = vlaneseq
      %v1259 = vshrl.u32 %v1258, 7
      %v1260 = vsub.s32 0, %v1259
      %v1261 = vrot.slane %v905, %v1260
      %v1262 = vlaneseq
      %v1263 = vshrl.u32 %v1262, 7
      %v1264 = vsub.s32 0, %v1263
      %v1265 = vrot.slane %v907, %v1264
      %v1266 = vlaneseq
      %v1267 = vshrl.u32 %v1266, 7
      %v1268 = vsub.s32 0, %v1267
      %v1269 = vrot.slane %v931, %v1268
      %v1270 = vlaneseq
      %v1271 = vshrl.u32 %v1270, 7
      %v1272 = vsub.s32 0, %v1271
      %v1273 = vrot.slane %v945, %v1272
      %v1274 = vlaneseq
      %v1275 = vshrl.u32 %v1274, 7
      %v1276 = vsub.s32 0, %v1275
      %v1277 = vrot.slane %v953, %v1276
      %v1278 = vlaneseq
      %v1279 = vshrl.u32 %v1278, 7
      %v1280 = vsub.s32 0, %v1279
      %v1281 = vrot.slane %v955, %v1280
      %v1282 = vlaneseq
      %v1283 = vshrl.u32 %v1282, 7
      %v1284 = vsub.s32 0, %v1283
      %v1285 = vrot.slane %v938, %v1284
      %v1286 = vlaneseq
      %v1287 = vshrl.u32 %v1286, 7
      %v1288 = vsub.s32 0, %v1287
      %v1289 = vrot.slane %v952, %v1288
      %v1290 = vlaneseq
      %v1291 = vshrl.u32 %v1290, 7
      %v1292 = vsub.s32 0, %v1291
      %v1293 = vrot.slane %v954, %v1292
      %v1294 = vlaneseq
      %v1295 = vshrl.u32 %v1294, 7
      %v1296 = vsub.s32 0, %v1295
      %v1297 = vrot.slane %v956, %v1296
      %v1298 = vlaneseq
      %v1299 = vshrl.u32 %v1298, 7
      %v1300 = vsub.s32 0, %v1299
      %v1301 = vrot.slane %v980, %v1300
      %v1302 = vlaneseq
      %v1303 = vshrl.u32 %v1302, 7
      %v1304 = vsub.s32 0, %v1303
      %v1305 = vrot.slane %v994, %v1304
      %v1306 = vlaneseq
      %v1307 = vshrl.u32 %v1306, 7
      %v1308 = vsub.s32 0, %v1307
      %v1309 = vrot.slane %v1002, %v1308
      %v1310 = vlaneseq
      %v1311 = vshrl.u32 %v1310, 7
      %v1312 = vsub.s32 0, %v1311
      %v1313 = vrot.slane %v1004, %v1312
      %v1314 = vlaneseq
      %v1315 = vshrl.u32 %v1314, 7
      %v1316 = vsub.s32 0, %v1315
      %v1317 = vrot.slane %v987, %v1316
      %v1318 = vlaneseq
      %v1319 = vshrl.u32 %v1318, 7
      %v1320 = vsub.s32 0, %v1319
      %v1321 = vrot.slane %v1001, %v1320
      %v1322 = vlaneseq
      %v1323 = vshrl.u32 %v1322, 7
      %v1324 = vsub.s32 0, %v1323
      %v1325 = vrot.slane %v1003, %v1324
      %v1326 = vlaneseq
      %v1327 = vshrl.u32 %v1326, 7
      %v1328 = vsub.s32 0, %v1327
      %v1329 = vrot.slane %v1005, %v1328
      %v1330 = vlaneseq
      %v1331 = vshrl.u32 %v1330, 7
      %v1332 = vsub.s32 0, %v1331
      %v1333 = vrot.slane %v1029, %v1332
      %v1334 = vlaneseq
      %v1335 = vshrl.u32 %v1334, 7
      %v1336 = vsub.s32 0, %v1335
      %v1337 = vrot.slane %v1043, %v1336
      %v1338 = vlaneseq
      %v1339 = vshrl.u32 %v1338, 7
      %v1340 = vsub.s32 0, %v1339
      %v1341 = vrot.slane %v1051, %v1340
      %v1342 = vlaneseq
      %v1343 = vshrl.u32 %v1342, 7
      %v1344 = vsub.s32 0, %v1343
      %v1345 = vrot.slane %v1053, %v1344
      %v1346 = vlaneseq
      %v1347 = vshrl.u32 %v1346, 7
      %v1348 = vsub.s32 0, %v1347
      %v1349 = vrot.slane %v1036, %v1348
      %v1350 = vlaneseq
      %v1351 = vshrl.u32 %v1350, 7
      %v1352 = vsub.s32 0, %v1351
      %v1353 = vrot.slane %v1050, %v1352
      %v1354 = vlaneseq
      %v1355 = vshrl.u32 %v1354, 7
      %v1356 = vsub.s32 0, %v1355
      %v1357 = vrot.slane %v1052, %v1356
      %v1358 = vlaneseq
      %v1359 = vshrl.u32 %v1358, 7
      %v1360 = vsub.s32 0, %v1359
      %v1361 = vrot.slane %v1054, %v1360
      %v1362 = vlaneseq
      %v1363 = vshrl.u32 %v1362, 7
      %v1364 = vsub.s32 0, %v1363
      %v1365 = vrot.slane %v1078, %v1364
      %v1366 = vlaneseq
      %v1367 = vshrl.u32 %v1366, 7
      %v1368 = vsub.s32 0, %v1367
      %v1369 = vrot.slane %v1092, %v1368
      %v1370 = vlaneseq
      %v1371 = vshrl.u32 %v1370, 7
      %v1372 = vsub.s32 0, %v1371
      %v1373 = vrot.slane %v1100, %v1372
      %v1374 = vlaneseq
      %v1375 = vshrl.u32 %v1374, 7
      %v1376 = vsub.s32 0, %v1375
      %v1377 = vrot.slane %v1102, %v1376
      %v1378 = vlaneseq
      %v1379 = vshrl.u32 %v1378, 7
      %v1380 = vsub.s32 0, %v1379
      %v1381 = vrot.slane %v1085, %v1380
      %v1382 = vlaneseq
      %v1383 = vshrl.u32 %v1382, 7
      %v1384 = vsub.s32 0, %v1383
      %v1385 = vrot.slane %v1099, %v1384
      %v1386 = vlaneseq
      %v1387 = vshrl.u32 %v1386, 7
      %v1388 = vsub.s32 0, %v1387
      %v1389 = vrot.slane %v1101, %v1388
      %v1390 = vlaneseq
      %v1391 = vshrl.u32 %v1390, 7
      %v1392 = vsub.s32 0, %v1391
      %v1393 = vrot.slane %v1103, %v1392
      %v1394 = vlaneseq
      %v1395 = vshrl.u32 %v1394, 7
      %v1396 = vsub.s32 0, %v1395
      %v1397 = vrot.slane %v1127, %v1396
      %v1398 = vlaneseq
      %v1399 = vshrl.u32 %v1398, 7
      %v1400 = vsub.s32 0, %v1399
      %v1401 = vrot.slane %v1141, %v1400
      %v1402 = vlaneseq
      %v1403 = vshrl.u32 %v1402, 7
      %v1404 = vsub.s32 0, %v1403
      %v1405 = vrot.slane %v1149, %v1404
      %v1406 = vlaneseq
      %v1407 = vshrl.u32 %v1406, 7
      %v1408 = vsub.s32 0, %v1407
      %v1409 = vrot.slane %v1151, %v1408
      %v1410 = vlaneseq
      %v1411 = vshrl.u32 %v1410, 7
      %v1412 = vsub.s32 0, %v1411
      %v1413 = vrot.slane %v1134, %v1412
      %v1414 = vlaneseq
      %v1415 = vshrl.u32 %v1414, 7
      %v1416 = vsub.s32 0, %v1415
      %v1417 = vrot.slane %v1148, %v1416
      %v1418 = vlaneseq
      %v1419 = vshrl.u32 %v1418, 7
      %v1420 = vsub.s32 0, %v1419
      %v1421 = vrot.slane %v1150, %v1420
      %v1422 = vlaneseq
      %v1423 = vshrl.u32 %v1422, 7
      %v1424 = vsub.s32 0, %v1423
      %v1425 = vrot.slane %v1152, %v1424
      %v1426 = vlaneseq
      %v1427 = vshrl.u32 %v1426, 7
      %v1428 = vsub.s32 0, %v1427
      %v1429 = vrot.slane %v1176, %v1428
      %v1430 = vlaneseq
      %v1431 = vshrl.u32 %v1430, 7
      %v1432 = vsub.s32 0, %v1431
      %v1433 = vrot.slane %v1190, %v1432
      %v1434 = vlaneseq
      %v1435 = vshrl.u32 %v1434, 7
      %v1436 = vsub.s32 0, %v1435
      %v1437 = vrot.slane %v1198, %v1436
      %v1438 = vlaneseq
      %v1439 = vshrl.u32 %v1438, 7
      %v1440 = vsub.s32 0, %v1439
      %v1441 = vrot.slane %v1200, %v1440
      %v1442 = vlaneseq
      %v1443 = vshrl.u32 %v1442, 7
      %v1444 = vsub.s32 0, %v1443
      %v1445 = vrot.slane %v1183, %v1444
      %v1446 = vlaneseq
      %v1447 = vshrl.u32 %v1446, 7
      %v1448 = vsub.s32 0, %v1447
      %v1449 = vrot.slane %v1197, %v1448
      %v1450 = vlaneseq
      %v1451 = vshrl.u32 %v1450, 7
      %v1452 = vsub.s32 0, %v1451
      %v1453 = vrot.slane %v1199, %v1452
      %v1454 = vlaneseq
      %v1455 = vshrl.u32 %v1454, 7
      %v1456 = vsub.s32 0, %v1455
      %v1457 = vrot.slane %v1201, %v1456
      %vm1522 = vcmask 1040384
      %v1523 = vsel %vm1522, %v369, %v1205
      %v1524 = vsel %vm1522, %v383, %v1209
      %v1525 = vsel %vm1522, %v391, %v1213
      %v1526 = vsel %vm1522, %v393, %v1217
      %v1527 = vsel %vm1522, %v376, %v1221
      %v1528 = vsel %vm1522, %v390, %v1225
      %v1529 = vsel %vm1522, %v392, %v1229
      %v1530 = vsel %vm1522, %v394, %v1233
      %v1531 = vsel %vm1522, %v418, %v1237
      %v1532 = vsel %vm1522, %v432, %v1241
      %v1533 = vsel %vm1522, %v440, %v1245
      %v1534 = vsel %vm1522, %v442, %v1249
      %v1535 = vsel %vm1522, %v425, %v1253
      %v1536 = vsel %vm1522, %v439, %v1257
      %v1537 = vsel %vm1522, %v441, %v1261
      %v1538 = vsel %vm1522, %v443, %v1265
      %v1539 = vsel %vm1522, %v467, %v1269
      %v1540 = vsel %vm1522, %v481, %v1273
      %v1541 = vsel %vm1522, %v489, %v1277
      %v1542 = vsel %vm1522, %v491, %v1281
      %v1543 = vsel %vm1522, %v474, %v1285
      %v1544 = vsel %vm1522, %v488, %v1289
      %v1545 = vsel %vm1522, %v490, %v1293
      %v1546 = vsel %vm1522, %v492, %v1297
      %v1547 = vsel %vm1522, %v516, %v1301
      %v1548 = vsel %vm1522, %v530, %v1305
      %v1549 = vsel %vm1522, %v538, %v1309
      %v1550 = vsel %vm1522, %v540, %v1313
      %v1551 = vsel %vm1522, %v523, %v1317
      %v1552 = vsel %vm1522, %v537, %v1321
      %v1553 = vsel %vm1522, %v539, %v1325
      %v1554 = vsel %vm1522, %v541, %v1329
      %v1555 = vsel %vm1522, %v565, %v1333
      %v1556 = vsel %vm1522, %v579, %v1337
      %v1557 = vsel %vm1522, %v587, %v1341
      %v1558 = vsel %vm1522, %v589, %v1345
      %v1559 = vsel %vm1522, %v572, %v1349
      %v1560 = vsel %vm1522, %v586, %v1353
      %v1561 = vsel %vm1522, %v588, %v1357
      %v1562 = vsel %vm1522, %v590, %v1361
      %v1563 = vsel %vm1522, %v614, %v1365
      %v1564 = vsel %vm1522, %v628, %v1369
      %v1565 = vsel %vm1522, %v636, %v1373
      %v1566 = vsel %vm1522, %v638, %v1377
      %v1567 = vsel %vm1522, %v621, %v1381
      %v1568 = vsel %vm1522, %v635, %v1385
      %v1569 = vsel %vm1522, %v637, %v1389
      %v1570 = vsel %vm1522, %v639, %v1393
      %v1571 = vsel %vm1522, %v663, %v1397
      %v1572 = vsel %vm1522, %v677, %v1401
      %v1573 = vsel %vm1522, %v685, %v1405
      %v1574 = vsel %vm1522, %v687, %v1409
      %v1575 = vsel %vm1522, %v670, %v1413
      %v1576 = vsel %vm1522, %v684, %v1417
      %v1577 = vsel %vm1522, %v686, %v1421
      %v1578 = vsel %vm1522, %v688, %v1425
      %v1579 = vsel %vm1522, %v712, %v1429
      %v1580 = vsel %vm1522, %v726, %v1433
      %v1581 = vsel %vm1522, %v734, %v1437
      %v1582 = vsel %vm1522, %v736, %v1441
      %v1583 = vsel %vm1522, %v719, %v1445
      %v1584 = vsel %vm1522, %v733, %v1449
      %v1585 = vsel %vm1522, %v735, %v1453
      %v1586 = vsel %vm1522, %v737, %v1457
      %v1587 = vadd.s32 %v290, 16
      %v1588 = vadd.s32 %v291, 16
      %v1589 = vadd.s32 %v292, 16
      %v1590 = vadd.s32 %v293, 16
      %v1591 = vadd.s32 %v294, 16
      %v1592 = vadd.s32 %v295, 16
      %v1593 = vadd.s32 %v296, 16
      %v1594 = vadd.s32 %v297, 16
      %vm1595 = vcmp.eq.s32.totalorder %v1587, %v280
      %vm1596 = vcmp.eq.s32.totalorder %v1588, %v281
      %vm1597 = vcmp.eq.s32.totalorder %v1589, %v282
      %vm1598 = vcmp.eq.s32.totalorder %v1590, %v283
      %vm1599 = vcmp.eq.s32.totalorder %v1591, %v284
      %vm1600 = vcmp.eq.s32.totalorder %v1592, %v285
      %vm1601 = vcmp.eq.s32.totalorder %v1593, %v286
      %vm1602 = vcmp.eq.s32.totalorder %v1594, %v287
      %v1603 = vsel %vm1595, %v272, 0.0
      %v1604 = vsel %vm1596, %v273, 0.0
      %v1605 = vsel %vm1597, %v274, 0.0
      %v1606 = vsel %vm1598, %v275, 0.0
      %v1607 = vsel %vm1599, %v276, 0.0
      %v1608 = vsel %vm1600, %v277, 0.0
      %v1609 = vsel %vm1601, %v278, 0.0
      %v1610 = vsel %vm1602, %v279, 0.0
      %v1611 = vadd.s32 %v290, 17
      %v1612 = vadd.s32 %v291, 17
      %v1613 = vadd.s32 %v292, 17
      %v1614 = vadd.s32 %v293, 17
      %v1615 = vadd.s32 %v294, 17
      %v1616 = vadd.s32 %v295, 17
      %v1617 = vadd.s32 %v296, 17
      %v1618 = vadd.s32 %v297, 17
      %vm1619 = vcmp.eq.s32.totalorder %v1611, %v280
      %vm1620 = vcmp.eq.s32.totalorder %v1612, %v281
      %vm1621 = vcmp.eq.s32.totalorder %v1613, %v282
      %vm1622 = vcmp.eq.s32.totalorder %v1614, %v283
      %vm1623 = vcmp.eq.s32.totalorder %v1615, %v284
      %vm1624 = vcmp.eq.s32.totalorder %v1616, %v285
      %vm1625 = vcmp.eq.s32.totalorder %v1617, %v286
      %vm1626 = vcmp.eq.s32.totalorder %v1618, %v287
      %v1627 = vsel %vm1619, %v272, 0.0
      %v1628 = vsel %vm1620, %v273, 0.0
      %v1629 = vsel %vm1621, %v274, 0.0
      %v1630 = vsel %vm1622, %v275, 0.0
      %v1631 = vsel %vm1623, %v276, 0.0
      %v1632 = vsel %vm1624, %v277, 0.0
      %v1633 = vsel %vm1625, %v278, 0.0
      %v1634 = vsel %vm1626, %v279, 0.0
      %v1643 = vcombine.high %v1603, %v1603
      %v1645 = vunpack.c.l.s4 1966171168
      %v1646 = vunpack.c.0.s8 %v1645
      %v1647 = vlaneseq
      %v1648 = vshrl.u32 %v1647, 7
      %v1649 = vsub.s32 %v1646, %v1648
      %v1650 = vrot.slane %v1603, %v1649
      %v1652 = vunpack.c.l.s4 1966171168
      %v1653 = vunpack.c.0.s8 %v1652
      %v1654 = vlaneseq
      %v1655 = vshrl.u32 %v1654, 7
      %v1656 = vsub.s32 %v1653, %v1655
      %v1657 = vrot.slane %v1643, %v1656
      %v1658 = vcombine.high %v1650, %v1650
      %v1659 = vcombine.high %v1657, %v1657
      %v1661 = vunpack.c.l.s4 1966171168
      %v1662 = vunpack.c.0.s8 %v1661
      %v1663 = vlaneseq
      %v1664 = vshrl.u32 %v1663, 7
      %v1665 = vsub.s32 %v1662, %v1664
      %v1666 = vrot.slane %v1650, %v1665
      %v1668 = vunpack.c.l.s4 1966171168
      %v1669 = vunpack.c.0.s8 %v1668
      %v1670 = vlaneseq
      %v1671 = vshrl.u32 %v1670, 7
      %v1672 = vsub.s32 %v1669, %v1671
      %v1673 = vrot.slane %v1657, %v1672
      %v1675 = vunpack.c.l.s4 1966171168
      %v1676 = vunpack.c.0.s8 %v1675
      %v1677 = vlaneseq
      %v1678 = vshrl.u32 %v1677, 7
      %v1679 = vsub.s32 %v1676, %v1678
      %v1680 = vrot.slane %v1658, %v1679
      %v1682 = vunpack.c.l.s4 1966171168
      %v1683 = vunpack.c.0.s8 %v1682
      %v1684 = vlaneseq
      %v1685 = vshrl.u32 %v1684, 7
      %v1686 = vsub.s32 %v1683, %v1685
      %v1687 = vrot.slane %v1659, %v1686
      %v1688 = vcombine.high %v1666, %v1666
      %v1689 = vcombine.high %v1673, %v1673
      %v1690 = vcombine.high %v1680, %v1680
      %v1691 = vcombine.high %v1687, %v1687
      %v1692 = vcombine.high %v1604, %v1604
      %v1694 = vunpack.c.l.s4 1966171168
      %v1695 = vunpack.c.0.s8 %v1694
      %v1696 = vlaneseq
      %v1697 = vshrl.u32 %v1696, 7
      %v1698 = vsub.s32 %v1695, %v1697
      %v1699 = vrot.slane %v1604, %v1698
      %v1701 = vunpack.c.l.s4 1966171168
      %v1702 = vunpack.c.0.s8 %v1701
      %v1703 = vlaneseq
      %v1704 = vshrl.u32 %v1703, 7
      %v1705 = vsub.s32 %v1702, %v1704
      %v1706 = vrot.slane %v1692, %v1705
      %v1707 = vcombine.high %v1699, %v1699
      %v1708 = vcombine.high %v1706, %v1706
      %v1710 = vunpack.c.l.s4 1966171168
      %v1711 = vunpack.c.0.s8 %v1710
      %v1712 = vlaneseq
      %v1713 = vshrl.u32 %v1712, 7
      %v1714 = vsub.s32 %v1711, %v1713
      %v1715 = vrot.slane %v1699, %v1714
      %v1717 = vunpack.c.l.s4 1966171168
      %v1718 = vunpack.c.0.s8 %v1717
      %v1719 = vlaneseq
      %v1720 = vshrl.u32 %v1719, 7
      %v1721 = vsub.s32 %v1718, %v1720
      %v1722 = vrot.slane %v1706, %v1721
      %v1724 = vunpack.c.l.s4 1966171168
      %v1725 = vunpack.c.0.s8 %v1724
      %v1726 = vlaneseq
      %v1727 = vshrl.u32 %v1726, 7
      %v1728 = vsub.s32 %v1725, %v1727
      %v1729 = vrot.slane %v1707, %v1728
      %v1731 = vunpack.c.l.s4 1966171168
      %v1732 = vunpack.c.0.s8 %v1731
      %v1733 = vlaneseq
      %v1734 = vshrl.u32 %v1733, 7
      %v1735 = vsub.s32 %v1732, %v1734
      %v1736 = vrot.slane %v1708, %v1735
      %v1737 = vcombine.high %v1715, %v1715
      %v1738 = vcombine.high %v1722, %v1722
      %v1739 = vcombine.high %v1729, %v1729
      %v1740 = vcombine.high %v1736, %v1736
      %v1741 = vcombine.high %v1605, %v1605
      %v1743 = vunpack.c.l.s4 1966171168
      %v1744 = vunpack.c.0.s8 %v1743
      %v1745 = vlaneseq
      %v1746 = vshrl.u32 %v1745, 7
      %v1747 = vsub.s32 %v1744, %v1746
      %v1748 = vrot.slane %v1605, %v1747
      %v1750 = vunpack.c.l.s4 1966171168
      %v1751 = vunpack.c.0.s8 %v1750
      %v1752 = vlaneseq
      %v1753 = vshrl.u32 %v1752, 7
      %v1754 = vsub.s32 %v1751, %v1753
      %v1755 = vrot.slane %v1741, %v1754
      %v1756 = vcombine.high %v1748, %v1748
      %v1757 = vcombine.high %v1755, %v1755
      %v1759 = vunpack.c.l.s4 1966171168
      %v1760 = vunpack.c.0.s8 %v1759
      %v1761 = vlaneseq
      %v1762 = vshrl.u32 %v1761, 7
      %v1763 = vsub.s32 %v1760, %v1762
      %v1764 = vrot.slane %v1748, %v1763
      %v1766 = vunpack.c.l.s4 1966171168
      %v1767 = vunpack.c.0.s8 %v1766
      %v1768 = vlaneseq
      %v1769 = vshrl.u32 %v1768, 7
      %v1770 = vsub.s32 %v1767, %v1769
      %v1771 = vrot.slane %v1755, %v1770
      %v1773 = vunpack.c.l.s4 1966171168
      %v1774 = vunpack.c.0.s8 %v1773
      %v1775 = vlaneseq
      %v1776 = vshrl.u32 %v1775, 7
      %v1777 = vsub.s32 %v1774, %v1776
      %v1778 = vrot.slane %v1756, %v1777
      %v1780 = vunpack.c.l.s4 1966171168
      %v1781 = vunpack.c.0.s8 %v1780
      %v1782 = vlaneseq
      %v1783 = vshrl.u32 %v1782, 7
      %v1784 = vsub.s32 %v1781, %v1783
      %v1785 = vrot.slane %v1757, %v1784
      %v1786 = vcombine.high %v1764, %v1764
      %v1787 = vcombine.high %v1771, %v1771
      %v1788 = vcombine.high %v1778, %v1778
      %v1789 = vcombine.high %v1785, %v1785
      %v1790 = vcombine.high %v1606, %v1606
      %v1792 = vunpack.c.l.s4 1966171168
      %v1793 = vunpack.c.0.s8 %v1792
      %v1794 = vlaneseq
      %v1795 = vshrl.u32 %v1794, 7
      %v1796 = vsub.s32 %v1793, %v1795
      %v1797 = vrot.slane %v1606, %v1796
      %v1799 = vunpack.c.l.s4 1966171168
      %v1800 = vunpack.c.0.s8 %v1799
      %v1801 = vlaneseq
      %v1802 = vshrl.u32 %v1801, 7
      %v1803 = vsub.s32 %v1800, %v1802
      %v1804 = vrot.slane %v1790, %v1803
      %v1805 = vcombine.high %v1797, %v1797
      %v1806 = vcombine.high %v1804, %v1804
      %v1808 = vunpack.c.l.s4 1966171168
      %v1809 = vunpack.c.0.s8 %v1808
      %v1810 = vlaneseq
      %v1811 = vshrl.u32 %v1810, 7
      %v1812 = vsub.s32 %v1809, %v1811
      %v1813 = vrot.slane %v1797, %v1812
      %v1815 = vunpack.c.l.s4 1966171168
      %v1816 = vunpack.c.0.s8 %v1815
      %v1817 = vlaneseq
      %v1818 = vshrl.u32 %v1817, 7
      %v1819 = vsub.s32 %v1816, %v1818
      %v1820 = vrot.slane %v1804, %v1819
      %v1822 = vunpack.c.l.s4 1966171168
      %v1823 = vunpack.c.0.s8 %v1822
      %v1824 = vlaneseq
      %v1825 = vshrl.u32 %v1824, 7
      %v1826 = vsub.s32 %v1823, %v1825
      %v1827 = vrot.slane %v1805, %v1826
      %v1829 = vunpack.c.l.s4 1966171168
      %v1830 = vunpack.c.0.s8 %v1829
      %v1831 = vlaneseq
      %v1832 = vshrl.u32 %v1831, 7
      %v1833 = vsub.s32 %v1830, %v1832
      %v1834 = vrot.slane %v1806, %v1833
      %v1835 = vcombine.high %v1813, %v1813
      %v1836 = vcombine.high %v1820, %v1820
      %v1837 = vcombine.high %v1827, %v1827
      %v1838 = vcombine.high %v1834, %v1834
      %v1839 = vcombine.high %v1607, %v1607
      %v1841 = vunpack.c.l.s4 1966171168
      %v1842 = vunpack.c.0.s8 %v1841
      %v1843 = vlaneseq
      %v1844 = vshrl.u32 %v1843, 7
      %v1845 = vsub.s32 %v1842, %v1844
      %v1846 = vrot.slane %v1607, %v1845
      %v1848 = vunpack.c.l.s4 1966171168
      %v1849 = vunpack.c.0.s8 %v1848
      %v1850 = vlaneseq
      %v1851 = vshrl.u32 %v1850, 7
      %v1852 = vsub.s32 %v1849, %v1851
      %v1853 = vrot.slane %v1839, %v1852
      %v1854 = vcombine.high %v1846, %v1846
      %v1855 = vcombine.high %v1853, %v1853
      %v1857 = vunpack.c.l.s4 1966171168
      %v1858 = vunpack.c.0.s8 %v1857
      %v1859 = vlaneseq
      %v1860 = vshrl.u32 %v1859, 7
      %v1861 = vsub.s32 %v1858, %v1860
      %v1862 = vrot.slane %v1846, %v1861
      %v1864 = vunpack.c.l.s4 1966171168
      %v1865 = vunpack.c.0.s8 %v1864
      %v1866 = vlaneseq
      %v1867 = vshrl.u32 %v1866, 7
      %v1868 = vsub.s32 %v1865, %v1867
      %v1869 = vrot.slane %v1853, %v1868
      %v1871 = vunpack.c.l.s4 1966171168
      %v1872 = vunpack.c.0.s8 %v1871
      %v1873 = vlaneseq
      %v1874 = vshrl.u32 %v1873, 7
      %v1875 = vsub.s32 %v1872, %v1874
      %v1876 = vrot.slane %v1854, %v1875
      %v1878 = vunpack.c.l.s4 1966171168
      %v1879 = vunpack.c.0.s8 %v1878
      %v1880 = vlaneseq
      %v1881 = vshrl.u32 %v1880, 7
      %v1882 = vsub.s32 %v1879, %v1881
      %v1883 = vrot.slane %v1855, %v1882
      %v1884 = vcombine.high %v1862, %v1862
      %v1885 = vcombine.high %v1869, %v1869
      %v1886 = vcombine.high %v1876, %v1876
      %v1887 = vcombine.high %v1883, %v1883
      %v1888 = vcombine.high %v1608, %v1608
      %v1890 = vunpack.c.l.s4 1966171168
      %v1891 = vunpack.c.0.s8 %v1890
      %v1892 = vlaneseq
      %v1893 = vshrl.u32 %v1892, 7
      %v1894 = vsub.s32 %v1891, %v1893
      %v1895 = vrot.slane %v1608, %v1894
      %v1897 = vunpack.c.l.s4 1966171168
      %v1898 = vunpack.c.0.s8 %v1897
      %v1899 = vlaneseq
      %v1900 = vshrl.u32 %v1899, 7
      %v1901 = vsub.s32 %v1898, %v1900
      %v1902 = vrot.slane %v1888, %v1901
      %v1903 = vcombine.high %v1895, %v1895
      %v1904 = vcombine.high %v1902, %v1902
      %v1906 = vunpack.c.l.s4 1966171168
      %v1907 = vunpack.c.0.s8 %v1906
      %v1908 = vlaneseq
      %v1909 = vshrl.u32 %v1908, 7
      %v1910 = vsub.s32 %v1907, %v1909
      %v1911 = vrot.slane %v1895, %v1910
      %v1913 = vunpack.c.l.s4 1966171168
      %v1914 = vunpack.c.0.s8 %v1913
      %v1915 = vlaneseq
      %v1916 = vshrl.u32 %v1915, 7
      %v1917 = vsub.s32 %v1914, %v1916
      %v1918 = vrot.slane %v1902, %v1917
      %v1920 = vunpack.c.l.s4 1966171168
      %v1921 = vunpack.c.0.s8 %v1920
      %v1922 = vlaneseq
      %v1923 = vshrl.u32 %v1922, 7
      %v1924 = vsub.s32 %v1921, %v1923
      %v1925 = vrot.slane %v1903, %v1924
      %v1927 = vunpack.c.l.s4 1966171168
      %v1928 = vunpack.c.0.s8 %v1927
      %v1929 = vlaneseq
      %v1930 = vshrl.u32 %v1929, 7
      %v1931 = vsub.s32 %v1928, %v1930
      %v1932 = vrot.slane %v1904, %v1931
      %v1933 = vcombine.high %v1911, %v1911
      %v1934 = vcombine.high %v1918, %v1918
      %v1935 = vcombine.high %v1925, %v1925
      %v1936 = vcombine.high %v1932, %v1932
      %v1937 = vcombine.high %v1609, %v1609
      %v1939 = vunpack.c.l.s4 1966171168
      %v1940 = vunpack.c.0.s8 %v1939
      %v1941 = vlaneseq
      %v1942 = vshrl.u32 %v1941, 7
      %v1943 = vsub.s32 %v1940, %v1942
      %v1944 = vrot.slane %v1609, %v1943
      %v1946 = vunpack.c.l.s4 1966171168
      %v1947 = vunpack.c.0.s8 %v1946
      %v1948 = vlaneseq
      %v1949 = vshrl.u32 %v1948, 7
      %v1950 = vsub.s32 %v1947, %v1949
      %v1951 = vrot.slane %v1937, %v1950
      %v1952 = vcombine.high %v1944, %v1944
      %v1953 = vcombine.high %v1951, %v1951
      %v1955 = vunpack.c.l.s4 1966171168
      %v1956 = vunpack.c.0.s8 %v1955
      %v1957 = vlaneseq
      %v1958 = vshrl.u32 %v1957, 7
      %v1959 = vsub.s32 %v1956, %v1958
      %v1960 = vrot.slane %v1944, %v1959
      %v1962 = vunpack.c.l.s4 1966171168
      %v1963 = vunpack.c.0.s8 %v1962
      %v1964 = vlaneseq
      %v1965 = vshrl.u32 %v1964, 7
      %v1966 = vsub.s32 %v1963, %v1965
      %v1967 = vrot.slane %v1951, %v1966
      %v1969 = vunpack.c.l.s4 1966171168
      %v1970 = vunpack.c.0.s8 %v1969
      %v1971 = vlaneseq
      %v1972 = vshrl.u32 %v1971, 7
      %v1973 = vsub.s32 %v1970, %v1972
      %v1974 = vrot.slane %v1952, %v1973
      %v1976 = vunpack.c.l.s4 1966171168
      %v1977 = vunpack.c.0.s8 %v1976
      %v1978 = vlaneseq
      %v1979 = vshrl.u32 %v1978, 7
      %v1980 = vsub.s32 %v1977, %v1979
      %v1981 = vrot.slane %v1953, %v1980
      %v1982 = vcombine.high %v1960, %v1960
      %v1983 = vcombine.high %v1967, %v1967
      %v1984 = vcombine.high %v1974, %v1974
      %v1985 = vcombine.high %v1981, %v1981
      %v1986 = vcombine.high %v1610, %v1610
      %v1988 = vunpack.c.l.s4 1966171168
      %v1989 = vunpack.c.0.s8 %v1988
      %v1990 = vlaneseq
      %v1991 = vshrl.u32 %v1990, 7
      %v1992 = vsub.s32 %v1989, %v1991
      %v1993 = vrot.slane %v1610, %v1992
      %v1995 = vunpack.c.l.s4 1966171168
      %v1996 = vunpack.c.0.s8 %v1995
      %v1997 = vlaneseq
      %v1998 = vshrl.u32 %v1997, 7
      %v1999 = vsub.s32 %v1996, %v1998
      %v2000 = vrot.slane %v1986, %v1999
      %v2001 = vcombine.high %v1993, %v1993
      %v2002 = vcombine.high %v2000, %v2000
      %v2004 = vunpack.c.l.s4 1966171168
      %v2005 = vunpack.c.0.s8 %v2004
      %v2006 = vlaneseq
      %v2007 = vshrl.u32 %v2006, 7
      %v2008 = vsub.s32 %v2005, %v2007
      %v2009 = vrot.slane %v1993, %v2008
      %v2011 = vunpack.c.l.s4 1966171168
      %v2012 = vunpack.c.0.s8 %v2011
      %v2013 = vlaneseq
      %v2014 = vshrl.u32 %v2013, 7
      %v2015 = vsub.s32 %v2012, %v2014
      %v2016 = vrot.slane %v2000, %v2015
      %v2018 = vunpack.c.l.s4 1966171168
      %v2019 = vunpack.c.0.s8 %v2018
      %v2020 = vlaneseq
      %v2021 = vshrl.u32 %v2020, 7
      %v2022 = vsub.s32 %v2019, %v2021
      %v2023 = vrot.slane %v2001, %v2022
      %v2025 = vunpack.c.l.s4 1966171168
      %v2026 = vunpack.c.0.s8 %v2025
      %v2027 = vlaneseq
      %v2028 = vshrl.u32 %v2027, 7
      %v2029 = vsub.s32 %v2026, %v2028
      %v2030 = vrot.slane %v2002, %v2029
      %v2031 = vcombine.high %v2009, %v2009
      %v2032 = vcombine.high %v2016, %v2016
      %v2033 = vcombine.high %v2023, %v2023
      %v2034 = vcombine.high %v2030, %v2030
      %v2107 = vcombine.high %v1627, %v1627
      %v2109 = vunpack.c.l.s4 1966171168
      %v2110 = vunpack.c.0.s8 %v2109
      %v2111 = vlaneseq
      %v2112 = vshrl.u32 %v2111, 7
      %v2113 = vsub.s32 %v2110, %v2112
      %v2114 = vrot.slane %v1627, %v2113
      %v2116 = vunpack.c.l.s4 1966171168
      %v2117 = vunpack.c.0.s8 %v2116
      %v2118 = vlaneseq
      %v2119 = vshrl.u32 %v2118, 7
      %v2120 = vsub.s32 %v2117, %v2119
      %v2121 = vrot.slane %v2107, %v2120
      %v2122 = vcombine.high %v2114, %v2114
      %v2123 = vcombine.high %v2121, %v2121
      %v2125 = vunpack.c.l.s4 1966171168
      %v2126 = vunpack.c.0.s8 %v2125
      %v2127 = vlaneseq
      %v2128 = vshrl.u32 %v2127, 7
      %v2129 = vsub.s32 %v2126, %v2128
      %v2130 = vrot.slane %v2114, %v2129
      %v2132 = vunpack.c.l.s4 1966171168
      %v2133 = vunpack.c.0.s8 %v2132
      %v2134 = vlaneseq
      %v2135 = vshrl.u32 %v2134, 7
      %v2136 = vsub.s32 %v2133, %v2135
      %v2137 = vrot.slane %v2121, %v2136
      %v2139 = vunpack.c.l.s4 1966171168
      %v2140 = vunpack.c.0.s8 %v2139
      %v2141 = vlaneseq
      %v2142 = vshrl.u32 %v2141, 7
      %v2143 = vsub.s32 %v2140, %v2142
      %v2144 = vrot.slane %v2122, %v2143
      %v2146 = vunpack.c.l.s4 1966171168
      %v2147 = vunpack.c.0.s8 %v2146
      %v2148 = vlaneseq
      %v2149 = vshrl.u32 %v2148, 7
      %v2150 = vsub.s32 %v2147, %v2149
      %v2151 = vrot.slane %v2123, %v2150
      %v2152 = vcombine.high %v2130, %v2130
      %v2153 = vcombine.high %v2137, %v2137
      %v2154 = vcombine.high %v2144, %v2144
      %v2155 = vcombine.high %v2151, %v2151
      %v2156 = vcombine.high %v1628, %v1628
      %v2158 = vunpack.c.l.s4 1966171168
      %v2159 = vunpack.c.0.s8 %v2158
      %v2160 = vlaneseq
      %v2161 = vshrl.u32 %v2160, 7
      %v2162 = vsub.s32 %v2159, %v2161
      %v2163 = vrot.slane %v1628, %v2162
      %v2165 = vunpack.c.l.s4 1966171168
      %v2166 = vunpack.c.0.s8 %v2165
      %v2167 = vlaneseq
      %v2168 = vshrl.u32 %v2167, 7
      %v2169 = vsub.s32 %v2166, %v2168
      %v2170 = vrot.slane %v2156, %v2169
      %v2171 = vcombine.high %v2163, %v2163
      %v2172 = vcombine.high %v2170, %v2170
      %v2174 = vunpack.c.l.s4 1966171168
      %v2175 = vunpack.c.0.s8 %v2174
      %v2176 = vlaneseq
      %v2177 = vshrl.u32 %v2176, 7
      %v2178 = vsub.s32 %v2175, %v2177
      %v2179 = vrot.slane %v2163, %v2178
      %v2181 = vunpack.c.l.s4 1966171168
      %v2182 = vunpack.c.0.s8 %v2181
      %v2183 = vlaneseq
      %v2184 = vshrl.u32 %v2183, 7
      %v2185 = vsub.s32 %v2182, %v2184
      %v2186 = vrot.slane %v2170, %v2185
      %v2188 = vunpack.c.l.s4 1966171168
      %v2189 = vunpack.c.0.s8 %v2188
      %v2190 = vlaneseq
      %v2191 = vshrl.u32 %v2190, 7
      %v2192 = vsub.s32 %v2189, %v2191
      %v2193 = vrot.slane %v2171, %v2192
      %v2195 = vunpack.c.l.s4 1966171168
      %v2196 = vunpack.c.0.s8 %v2195
      %v2197 = vlaneseq
      %v2198 = vshrl.u32 %v2197, 7
      %v2199 = vsub.s32 %v2196, %v2198
      %v2200 = vrot.slane %v2172, %v2199
      %v2201 = vcombine.high %v2179, %v2179
      %v2202 = vcombine.high %v2186, %v2186
      %v2203 = vcombine.high %v2193, %v2193
      %v2204 = vcombine.high %v2200, %v2200
      %v2205 = vcombine.high %v1629, %v1629
      %v2207 = vunpack.c.l.s4 1966171168
      %v2208 = vunpack.c.0.s8 %v2207
      %v2209 = vlaneseq
      %v2210 = vshrl.u32 %v2209, 7
      %v2211 = vsub.s32 %v2208, %v2210
      %v2212 = vrot.slane %v1629, %v2211
      %v2214 = vunpack.c.l.s4 1966171168
      %v2215 = vunpack.c.0.s8 %v2214
      %v2216 = vlaneseq
      %v2217 = vshrl.u32 %v2216, 7
      %v2218 = vsub.s32 %v2215, %v2217
      %v2219 = vrot.slane %v2205, %v2218
      %v2220 = vcombine.high %v2212, %v2212
      %v2221 = vcombine.high %v2219, %v2219
      %v2223 = vunpack.c.l.s4 1966171168
      %v2224 = vunpack.c.0.s8 %v2223
      %v2225 = vlaneseq
      %v2226 = vshrl.u32 %v2225, 7
      %v2227 = vsub.s32 %v2224, %v2226
      %v2228 = vrot.slane %v2212, %v2227
      %v2230 = vunpack.c.l.s4 1966171168
      %v2231 = vunpack.c.0.s8 %v2230
      %v2232 = vlaneseq
      %v2233 = vshrl.u32 %v2232, 7
      %v2234 = vsub.s32 %v2231, %v2233
      %v2235 = vrot.slane %v2219, %v2234
      %v2237 = vunpack.c.l.s4 1966171168
      %v2238 = vunpack.c.0.s8 %v2237
      %v2239 = vlaneseq
      %v2240 = vshrl.u32 %v2239, 7
      %v2241 = vsub.s32 %v2238, %v2240
      %v2242 = vrot.slane %v2220, %v2241
      %v2244 = vunpack.c.l.s4 1966171168
      %v2245 = vunpack.c.0.s8 %v2244
      %v2246 = vlaneseq
      %v2247 = vshrl.u32 %v2246, 7
      %v2248 = vsub.s32 %v2245, %v2247
      %v2249 = vrot.slane %v2221, %v2248
      %v2250 = vcombine.high %v2228, %v2228
      %v2251 = vcombine.high %v2235, %v2235
      %v2252 = vcombine.high %v2242, %v2242
      %v2253 = vcombine.high %v2249, %v2249
      %v2254 = vcombine.high %v1630, %v1630
      %v2256 = vunpack.c.l.s4 1966171168
      %v2257 = vunpack.c.0.s8 %v2256
      %v2258 = vlaneseq
      %v2259 = vshrl.u32 %v2258, 7
      %v2260 = vsub.s32 %v2257, %v2259
      %v2261 = vrot.slane %v1630, %v2260
      %v2263 = vunpack.c.l.s4 1966171168
      %v2264 = vunpack.c.0.s8 %v2263
      %v2265 = vlaneseq
      %v2266 = vshrl.u32 %v2265, 7
      %v2267 = vsub.s32 %v2264, %v2266
      %v2268 = vrot.slane %v2254, %v2267
      %v2269 = vcombine.high %v2261, %v2261
      %v2270 = vcombine.high %v2268, %v2268
      %v2272 = vunpack.c.l.s4 1966171168
      %v2273 = vunpack.c.0.s8 %v2272
      %v2274 = vlaneseq
      %v2275 = vshrl.u32 %v2274, 7
      %v2276 = vsub.s32 %v2273, %v2275
      %v2277 = vrot.slane %v2261, %v2276
      %v2279 = vunpack.c.l.s4 1966171168
      %v2280 = vunpack.c.0.s8 %v2279
      %v2281 = vlaneseq
      %v2282 = vshrl.u32 %v2281, 7
      %v2283 = vsub.s32 %v2280, %v2282
      %v2284 = vrot.slane %v2268, %v2283
      %v2286 = vunpack.c.l.s4 1966171168
      %v2287 = vunpack.c.0.s8 %v2286
      %v2288 = vlaneseq
      %v2289 = vshrl.u32 %v2288, 7
      %v2290 = vsub.s32 %v2287, %v2289
      %v2291 = vrot.slane %v2269, %v2290
      %v2293 = vunpack.c.l.s4 1966171168
      %v2294 = vunpack.c.0.s8 %v2293
      %v2295 = vlaneseq
      %v2296 = vshrl.u32 %v2295, 7
      %v2297 = vsub.s32 %v2294, %v2296
      %v2298 = vrot.slane %v2270, %v2297
      %v2299 = vcombine.high %v2277, %v2277
      %v2300 = vcombine.high %v2284, %v2284
      %v2301 = vcombine.high %v2291, %v2291
      %v2302 = vcombine.high %v2298, %v2298
      %v2303 = vcombine.high %v1631, %v1631
      %v2305 = vunpack.c.l.s4 1966171168
      %v2306 = vunpack.c.0.s8 %v2305
      %v2307 = vlaneseq
      %v2308 = vshrl.u32 %v2307, 7
      %v2309 = vsub.s32 %v2306, %v2308
      %v2310 = vrot.slane %v1631, %v2309
      %v2312 = vunpack.c.l.s4 1966171168
      %v2313 = vunpack.c.0.s8 %v2312
      %v2314 = vlaneseq
      %v2315 = vshrl.u32 %v2314, 7
      %v2316 = vsub.s32 %v2313, %v2315
      %v2317 = vrot.slane %v2303, %v2316
      %v2318 = vcombine.high %v2310, %v2310
      %v2319 = vcombine.high %v2317, %v2317
      %v2321 = vunpack.c.l.s4 1966171168
      %v2322 = vunpack.c.0.s8 %v2321
      %v2323 = vlaneseq
      %v2324 = vshrl.u32 %v2323, 7
      %v2325 = vsub.s32 %v2322, %v2324
      %v2326 = vrot.slane %v2310, %v2325
      %v2328 = vunpack.c.l.s4 1966171168
      %v2329 = vunpack.c.0.s8 %v2328
      %v2330 = vlaneseq
      %v2331 = vshrl.u32 %v2330, 7
      %v2332 = vsub.s32 %v2329, %v2331
      %v2333 = vrot.slane %v2317, %v2332
      %v2335 = vunpack.c.l.s4 1966171168
      %v2336 = vunpack.c.0.s8 %v2335
      %v2337 = vlaneseq
      %v2338 = vshrl.u32 %v2337, 7
      %v2339 = vsub.s32 %v2336, %v2338
      %v2340 = vrot.slane %v2318, %v2339
      %v2342 = vunpack.c.l.s4 1966171168
      %v2343 = vunpack.c.0.s8 %v2342
      %v2344 = vlaneseq
      %v2345 = vshrl.u32 %v2344, 7
      %v2346 = vsub.s32 %v2343, %v2345
      %v2347 = vrot.slane %v2319, %v2346
      %v2348 = vcombine.high %v2326, %v2326
      %v2349 = vcombine.high %v2333, %v2333
      %v2350 = vcombine.high %v2340, %v2340
      %v2351 = vcombine.high %v2347, %v2347
      %v2352 = vcombine.high %v1632, %v1632
      %v2354 = vunpack.c.l.s4 1966171168
      %v2355 = vunpack.c.0.s8 %v2354
      %v2356 = vlaneseq
      %v2357 = vshrl.u32 %v2356, 7
      %v2358 = vsub.s32 %v2355, %v2357
      %v2359 = vrot.slane %v1632, %v2358
      %v2361 = vunpack.c.l.s4 1966171168
      %v2362 = vunpack.c.0.s8 %v2361
      %v2363 = vlaneseq
      %v2364 = vshrl.u32 %v2363, 7
      %v2365 = vsub.s32 %v2362, %v2364
      %v2366 = vrot.slane %v2352, %v2365
      %v2367 = vcombine.high %v2359, %v2359
      %v2368 = vcombine.high %v2366, %v2366
      %v2370 = vunpack.c.l.s4 1966171168
      %v2371 = vunpack.c.0.s8 %v2370
      %v2372 = vlaneseq
      %v2373 = vshrl.u32 %v2372, 7
      %v2374 = vsub.s32 %v2371, %v2373
      %v2375 = vrot.slane %v2359, %v2374
      %v2377 = vunpack.c.l.s4 1966171168
      %v2378 = vunpack.c.0.s8 %v2377
      %v2379 = vlaneseq
      %v2380 = vshrl.u32 %v2379, 7
      %v2381 = vsub.s32 %v2378, %v2380
      %v2382 = vrot.slane %v2366, %v2381
      %v2384 = vunpack.c.l.s4 1966171168
      %v2385 = vunpack.c.0.s8 %v2384
      %v2386 = vlaneseq
      %v2387 = vshrl.u32 %v2386, 7
      %v2388 = vsub.s32 %v2385, %v2387
      %v2389 = vrot.slane %v2367, %v2388
      %v2391 = vunpack.c.l.s4 1966171168
      %v2392 = vunpack.c.0.s8 %v2391
      %v2393 = vlaneseq
      %v2394 = vshrl.u32 %v2393, 7
      %v2395 = vsub.s32 %v2392, %v2394
      %v2396 = vrot.slane %v2368, %v2395
      %v2397 = vcombine.high %v2375, %v2375
      %v2398 = vcombine.high %v2382, %v2382
      %v2399 = vcombine.high %v2389, %v2389
      %v2400 = vcombine.high %v2396, %v2396
      %v2401 = vcombine.high %v1633, %v1633
      %v2403 = vunpack.c.l.s4 1966171168
      %v2404 = vunpack.c.0.s8 %v2403
      %v2405 = vlaneseq
      %v2406 = vshrl.u32 %v2405, 7
      %v2407 = vsub.s32 %v2404, %v2406
      %v2408 = vrot.slane %v1633, %v2407
      %v2410 = vunpack.c.l.s4 1966171168
      %v2411 = vunpack.c.0.s8 %v2410
      %v2412 = vlaneseq
      %v2413 = vshrl.u32 %v2412, 7
      %v2414 = vsub.s32 %v2411, %v2413
      %v2415 = vrot.slane %v2401, %v2414
      %v2416 = vcombine.high %v2408, %v2408
      %v2417 = vcombine.high %v2415, %v2415
      %v2419 = vunpack.c.l.s4 1966171168
      %v2420 = vunpack.c.0.s8 %v2419
      %v2421 = vlaneseq
      %v2422 = vshrl.u32 %v2421, 7
      %v2423 = vsub.s32 %v2420, %v2422
      %v2424 = vrot.slane %v2408, %v2423
      %v2426 = vunpack.c.l.s4 1966171168
      %v2427 = vunpack.c.0.s8 %v2426
      %v2428 = vlaneseq
      %v2429 = vshrl.u32 %v2428, 7
      %v2430 = vsub.s32 %v2427, %v2429
      %v2431 = vrot.slane %v2415, %v2430
      %v2433 = vunpack.c.l.s4 1966171168
      %v2434 = vunpack.c.0.s8 %v2433
      %v2435 = vlaneseq
      %v2436 = vshrl.u32 %v2435, 7
      %v2437 = vsub.s32 %v2434, %v2436
      %v2438 = vrot.slane %v2416, %v2437
      %v2440 = vunpack.c.l.s4 1966171168
      %v2441 = vunpack.c.0.s8 %v2440
      %v2442 = vlaneseq
      %v2443 = vshrl.u32 %v2442, 7
      %v2444 = vsub.s32 %v2441, %v2443
      %v2445 = vrot.slane %v2417, %v2444
      %v2446 = vcombine.high %v2424, %v2424
      %v2447 = vcombine.high %v2431, %v2431
      %v2448 = vcombine.high %v2438, %v2438
      %v2449 = vcombine.high %v2445, %v2445
      %v2450 = vcombine.high %v1634, %v1634
      %v2452 = vunpack.c.l.s4 1966171168
      %v2453 = vunpack.c.0.s8 %v2452
      %v2454 = vlaneseq
      %v2455 = vshrl.u32 %v2454, 7
      %v2456 = vsub.s32 %v2453, %v2455
      %v2457 = vrot.slane %v1634, %v2456
      %v2459 = vunpack.c.l.s4 1966171168
      %v2460 = vunpack.c.0.s8 %v2459
      %v2461 = vlaneseq
      %v2462 = vshrl.u32 %v2461, 7
      %v2463 = vsub.s32 %v2460, %v2462
      %v2464 = vrot.slane %v2450, %v2463
      %v2465 = vcombine.high %v2457, %v2457
      %v2466 = vcombine.high %v2464, %v2464
      %v2468 = vunpack.c.l.s4 1966171168
      %v2469 = vunpack.c.0.s8 %v2468
      %v2470 = vlaneseq
      %v2471 = vshrl.u32 %v2470, 7
      %v2472 = vsub.s32 %v2469, %v2471
      %v2473 = vrot.slane %v2457, %v2472
      %v2475 = vunpack.c.l.s4 1966171168
      %v2476 = vunpack.c.0.s8 %v2475
      %v2477 = vlaneseq
      %v2478 = vshrl.u32 %v2477, 7
      %v2479 = vsub.s32 %v2476, %v2478
      %v2480 = vrot.slane %v2464, %v2479
      %v2482 = vunpack.c.l.s4 1966171168
      %v2483 = vunpack.c.0.s8 %v2482
      %v2484 = vlaneseq
      %v2485 = vshrl.u32 %v2484, 7
      %v2486 = vsub.s32 %v2483, %v2485
      %v2487 = vrot.slane %v2465, %v2486
      %v2489 = vunpack.c.l.s4 1966171168
      %v2490 = vunpack.c.0.s8 %v2489
      %v2491 = vlaneseq
      %v2492 = vshrl.u32 %v2491, 7
      %v2493 = vsub.s32 %v2490, %v2492
      %v2494 = vrot.slane %v2466, %v2493
      %v2495 = vcombine.high %v2473, %v2473
      %v2496 = vcombine.high %v2480, %v2480
      %v2497 = vcombine.high %v2487, %v2487
      %v2498 = vcombine.high %v2494, %v2494
      %v2499 = vlaneseq
      %v2500 = vshrl.u32 %v2499, 7
      %v2501 = vsub.s32 0, %v2500
      %v2502 = vrot.slane %v2130, %v2501
      %v2503 = vlaneseq
      %v2504 = vshrl.u32 %v2503, 7
      %v2505 = vsub.s32 0, %v2504
      %v2506 = vrot.slane %v2144, %v2505
      %v2507 = vlaneseq
      %v2508 = vshrl.u32 %v2507, 7
      %v2509 = vsub.s32 0, %v2508
      %v2510 = vrot.slane %v2152, %v2509
      %v2511 = vlaneseq
      %v2512 = vshrl.u32 %v2511, 7
      %v2513 = vsub.s32 0, %v2512
      %v2514 = vrot.slane %v2154, %v2513
      %v2515 = vlaneseq
      %v2516 = vshrl.u32 %v2515, 7
      %v2517 = vsub.s32 0, %v2516
      %v2518 = vrot.slane %v2137, %v2517
      %v2519 = vlaneseq
      %v2520 = vshrl.u32 %v2519, 7
      %v2521 = vsub.s32 0, %v2520
      %v2522 = vrot.slane %v2151, %v2521
      %v2523 = vlaneseq
      %v2524 = vshrl.u32 %v2523, 7
      %v2525 = vsub.s32 0, %v2524
      %v2526 = vrot.slane %v2153, %v2525
      %v2527 = vlaneseq
      %v2528 = vshrl.u32 %v2527, 7
      %v2529 = vsub.s32 0, %v2528
      %v2530 = vrot.slane %v2155, %v2529
      %v2531 = vlaneseq
      %v2532 = vshrl.u32 %v2531, 7
      %v2533 = vsub.s32 0, %v2532
      %v2534 = vrot.slane %v2179, %v2533
      %v2535 = vlaneseq
      %v2536 = vshrl.u32 %v2535, 7
      %v2537 = vsub.s32 0, %v2536
      %v2538 = vrot.slane %v2193, %v2537
      %v2539 = vlaneseq
      %v2540 = vshrl.u32 %v2539, 7
      %v2541 = vsub.s32 0, %v2540
      %v2542 = vrot.slane %v2201, %v2541
      %v2543 = vlaneseq
      %v2544 = vshrl.u32 %v2543, 7
      %v2545 = vsub.s32 0, %v2544
      %v2546 = vrot.slane %v2203, %v2545
      %v2547 = vlaneseq
      %v2548 = vshrl.u32 %v2547, 7
      %v2549 = vsub.s32 0, %v2548
      %v2550 = vrot.slane %v2186, %v2549
      %v2551 = vlaneseq
      %v2552 = vshrl.u32 %v2551, 7
      %v2553 = vsub.s32 0, %v2552
      %v2554 = vrot.slane %v2200, %v2553
      %v2555 = vlaneseq
      %v2556 = vshrl.u32 %v2555, 7
      %v2557 = vsub.s32 0, %v2556
      %v2558 = vrot.slane %v2202, %v2557
      %v2559 = vlaneseq
      %v2560 = vshrl.u32 %v2559, 7
      %v2561 = vsub.s32 0, %v2560
      %v2562 = vrot.slane %v2204, %v2561
      %v2563 = vlaneseq
      %v2564 = vshrl.u32 %v2563, 7
      %v2565 = vsub.s32 0, %v2564
      %v2566 = vrot.slane %v2228, %v2565
      %v2567 = vlaneseq
      %v2568 = vshrl.u32 %v2567, 7
      %v2569 = vsub.s32 0, %v2568
      %v2570 = vrot.slane %v2242, %v2569
      %v2571 = vlaneseq
      %v2572 = vshrl.u32 %v2571, 7
      %v2573 = vsub.s32 0, %v2572
      %v2574 = vrot.slane %v2250, %v2573
      %v2575 = vlaneseq
      %v2576 = vshrl.u32 %v2575, 7
      %v2577 = vsub.s32 0, %v2576
      %v2578 = vrot.slane %v2252, %v2577
      %v2579 = vlaneseq
      %v2580 = vshrl.u32 %v2579, 7
      %v2581 = vsub.s32 0, %v2580
      %v2582 = vrot.slane %v2235, %v2581
      %v2583 = vlaneseq
      %v2584 = vshrl.u32 %v2583, 7
      %v2585 = vsub.s32 0, %v2584
      %v2586 = vrot.slane %v2249, %v2585
      %v2587 = vlaneseq
      %v2588 = vshrl.u32 %v2587, 7
      %v2589 = vsub.s32 0, %v2588
      %v2590 = vrot.slane %v2251, %v2589
      %v2591 = vlaneseq
      %v2592 = vshrl.u32 %v2591, 7
      %v2593 = vsub.s32 0, %v2592
      %v2594 = vrot.slane %v2253, %v2593
      %v2595 = vlaneseq
      %v2596 = vshrl.u32 %v2595, 7
      %v2597 = vsub.s32 0, %v2596
      %v2598 = vrot.slane %v2277, %v2597
      %v2599 = vlaneseq
      %v2600 = vshrl.u32 %v2599, 7
      %v2601 = vsub.s32 0, %v2600
      %v2602 = vrot.slane %v2291, %v2601
      %v2603 = vlaneseq
      %v2604 = vshrl.u32 %v2603, 7
      %v2605 = vsub.s32 0, %v2604
      %v2606 = vrot.slane %v2299, %v2605
      %v2607 = vlaneseq
      %v2608 = vshrl.u32 %v2607, 7
      %v2609 = vsub.s32 0, %v2608
      %v2610 = vrot.slane %v2301, %v2609
      %v2611 = vlaneseq
      %v2612 = vshrl.u32 %v2611, 7
      %v2613 = vsub.s32 0, %v2612
      %v2614 = vrot.slane %v2284, %v2613
      %v2615 = vlaneseq
      %v2616 = vshrl.u32 %v2615, 7
      %v2617 = vsub.s32 0, %v2616
      %v2618 = vrot.slane %v2298, %v2617
      %v2619 = vlaneseq
      %v2620 = vshrl.u32 %v2619, 7
      %v2621 = vsub.s32 0, %v2620
      %v2622 = vrot.slane %v2300, %v2621
      %v2623 = vlaneseq
      %v2624 = vshrl.u32 %v2623, 7
      %v2625 = vsub.s32 0, %v2624
      %v2626 = vrot.slane %v2302, %v2625
      %v2627 = vlaneseq
      %v2628 = vshrl.u32 %v2627, 7
      %v2629 = vsub.s32 0, %v2628
      %v2630 = vrot.slane %v2326, %v2629
      %v2631 = vlaneseq
      %v2632 = vshrl.u32 %v2631, 7
      %v2633 = vsub.s32 0, %v2632
      %v2634 = vrot.slane %v2340, %v2633
      %v2635 = vlaneseq
      %v2636 = vshrl.u32 %v2635, 7
      %v2637 = vsub.s32 0, %v2636
      %v2638 = vrot.slane %v2348, %v2637
      %v2639 = vlaneseq
      %v2640 = vshrl.u32 %v2639, 7
      %v2641 = vsub.s32 0, %v2640
      %v2642 = vrot.slane %v2350, %v2641
      %v2643 = vlaneseq
      %v2644 = vshrl.u32 %v2643, 7
      %v2645 = vsub.s32 0, %v2644
      %v2646 = vrot.slane %v2333, %v2645
      %v2647 = vlaneseq
      %v2648 = vshrl.u32 %v2647, 7
      %v2649 = vsub.s32 0, %v2648
      %v2650 = vrot.slane %v2347, %v2649
      %v2651 = vlaneseq
      %v2652 = vshrl.u32 %v2651, 7
      %v2653 = vsub.s32 0, %v2652
      %v2654 = vrot.slane %v2349, %v2653
      %v2655 = vlaneseq
      %v2656 = vshrl.u32 %v2655, 7
      %v2657 = vsub.s32 0, %v2656
      %v2658 = vrot.slane %v2351, %v2657
      %v2659 = vlaneseq
      %v2660 = vshrl.u32 %v2659, 7
      %v2661 = vsub.s32 0, %v2660
      %v2662 = vrot.slane %v2375, %v2661
      %v2663 = vlaneseq
      %v2664 = vshrl.u32 %v2663, 7
      %v2665 = vsub.s32 0, %v2664
      %v2666 = vrot.slane %v2389, %v2665
      %v2667 = vlaneseq
      %v2668 = vshrl.u32 %v2667, 7
      %v2669 = vsub.s32 0, %v2668
      %v2670 = vrot.slane %v2397, %v2669
      %v2671 = vlaneseq
      %v2672 = vshrl.u32 %v2671, 7
      %v2673 = vsub.s32 0, %v2672
      %v2674 = vrot.slane %v2399, %v2673
      %v2675 = vlaneseq
      %v2676 = vshrl.u32 %v2675, 7
      %v2677 = vsub.s32 0, %v2676
      %v2678 = vrot.slane %v2382, %v2677
      %v2679 = vlaneseq
      %v2680 = vshrl.u32 %v2679, 7
      %v2681 = vsub.s32 0, %v2680
      %v2682 = vrot.slane %v2396, %v2681
      %v2683 = vlaneseq
      %v2684 = vshrl.u32 %v2683, 7
      %v2685 = vsub.s32 0, %v2684
      %v2686 = vrot.slane %v2398, %v2685
      %v2687 = vlaneseq
      %v2688 = vshrl.u32 %v2687, 7
      %v2689 = vsub.s32 0, %v2688
      %v2690 = vrot.slane %v2400, %v2689
      %v2691 = vlaneseq
      %v2692 = vshrl.u32 %v2691, 7
      %v2693 = vsub.s32 0, %v2692
      %v2694 = vrot.slane %v2424, %v2693
      %v2695 = vlaneseq
      %v2696 = vshrl.u32 %v2695, 7
      %v2697 = vsub.s32 0, %v2696
      %v2698 = vrot.slane %v2438, %v2697
      %v2699 = vlaneseq
      %v2700 = vshrl.u32 %v2699, 7
      %v2701 = vsub.s32 0, %v2700
      %v2702 = vrot.slane %v2446, %v2701
      %v2703 = vlaneseq
      %v2704 = vshrl.u32 %v2703, 7
      %v2705 = vsub.s32 0, %v2704
      %v2706 = vrot.slane %v2448, %v2705
      %v2707 = vlaneseq
      %v2708 = vshrl.u32 %v2707, 7
      %v2709 = vsub.s32 0, %v2708
      %v2710 = vrot.slane %v2431, %v2709
      %v2711 = vlaneseq
      %v2712 = vshrl.u32 %v2711, 7
      %v2713 = vsub.s32 0, %v2712
      %v2714 = vrot.slane %v2445, %v2713
      %v2715 = vlaneseq
      %v2716 = vshrl.u32 %v2715, 7
      %v2717 = vsub.s32 0, %v2716
      %v2718 = vrot.slane %v2447, %v2717
      %v2719 = vlaneseq
      %v2720 = vshrl.u32 %v2719, 7
      %v2721 = vsub.s32 0, %v2720
      %v2722 = vrot.slane %v2449, %v2721
      %v2723 = vlaneseq
      %v2724 = vshrl.u32 %v2723, 7
      %v2725 = vsub.s32 0, %v2724
      %v2726 = vrot.slane %v2473, %v2725
      %v2727 = vlaneseq
      %v2728 = vshrl.u32 %v2727, 7
      %v2729 = vsub.s32 0, %v2728
      %v2730 = vrot.slane %v2487, %v2729
      %v2731 = vlaneseq
      %v2732 = vshrl.u32 %v2731, 7
      %v2733 = vsub.s32 0, %v2732
      %v2734 = vrot.slane %v2495, %v2733
      %v2735 = vlaneseq
      %v2736 = vshrl.u32 %v2735, 7
      %v2737 = vsub.s32 0, %v2736
      %v2738 = vrot.slane %v2497, %v2737
      %v2739 = vlaneseq
      %v2740 = vshrl.u32 %v2739, 7
      %v2741 = vsub.s32 0, %v2740
      %v2742 = vrot.slane %v2480, %v2741
      %v2743 = vlaneseq
      %v2744 = vshrl.u32 %v2743, 7
      %v2745 = vsub.s32 0, %v2744
      %v2746 = vrot.slane %v2494, %v2745
      %v2747 = vlaneseq
      %v2748 = vshrl.u32 %v2747, 7
      %v2749 = vsub.s32 0, %v2748
      %v2750 = vrot.slane %v2496, %v2749
      %v2751 = vlaneseq
      %v2752 = vshrl.u32 %v2751, 7
      %v2753 = vsub.s32 0, %v2752
      %v2754 = vrot.slane %v2498, %v2753
      %v2819 = vsel %vm1522, %v1666, %v2502
      %v2820 = vsel %vm1522, %v1680, %v2506
      %v2821 = vsel %vm1522, %v1688, %v2510
      %v2822 = vsel %vm1522, %v1690, %v2514
      %v2823 = vsel %vm1522, %v1673, %v2518
      %v2824 = vsel %vm1522, %v1687, %v2522
      %v2825 = vsel %vm1522, %v1689, %v2526
      %v2826 = vsel %vm1522, %v1691, %v2530
      %v2827 = vsel %vm1522, %v1715, %v2534
      %v2828 = vsel %vm1522, %v1729, %v2538
      %v2829 = vsel %vm1522, %v1737, %v2542
      %v2830 = vsel %vm1522, %v1739, %v2546
      %v2831 = vsel %vm1522, %v1722, %v2550
      %v2832 = vsel %vm1522, %v1736, %v2554
      %v2833 = vsel %vm1522, %v1738, %v2558
      %v2834 = vsel %vm1522, %v1740, %v2562
      %v2835 = vsel %vm1522, %v1764, %v2566
      %v2836 = vsel %vm1522, %v1778, %v2570
      %v2837 = vsel %vm1522, %v1786, %v2574
      %v2838 = vsel %vm1522, %v1788, %v2578
      %v2839 = vsel %vm1522, %v1771, %v2582
      %v2840 = vsel %vm1522, %v1785, %v2586
      %v2841 = vsel %vm1522, %v1787, %v2590
      %v2842 = vsel %vm1522, %v1789, %v2594
      %v2843 = vsel %vm1522, %v1813, %v2598
      %v2844 = vsel %vm1522, %v1827, %v2602
      %v2845 = vsel %vm1522, %v1835, %v2606
      %v2846 = vsel %vm1522, %v1837, %v2610
      %v2847 = vsel %vm1522, %v1820, %v2614
      %v2848 = vsel %vm1522, %v1834, %v2618
      %v2849 = vsel %vm1522, %v1836, %v2622
      %v2850 = vsel %vm1522, %v1838, %v2626
      %v2851 = vsel %vm1522, %v1862, %v2630
      %v2852 = vsel %vm1522, %v1876, %v2634
      %v2853 = vsel %vm1522, %v1884, %v2638
      %v2854 = vsel %vm1522, %v1886, %v2642
      %v2855 = vsel %vm1522, %v1869, %v2646
      %v2856 = vsel %vm1522, %v1883, %v2650
      %v2857 = vsel %vm1522, %v1885, %v2654
      %v2858 = vsel %vm1522, %v1887, %v2658
      %v2859 = vsel %vm1522, %v1911, %v2662
      %v2860 = vsel %vm1522, %v1925, %v2666
      %v2861 = vsel %vm1522, %v1933, %v2670
      %v2862 = vsel %vm1522, %v1935, %v2674
      %v2863 = vsel %vm1522, %v1918, %v2678
      %v2864 = vsel %vm1522, %v1932, %v2682
      %v2865 = vsel %vm1522, %v1934, %v2686
      %v2866 = vsel %vm1522, %v1936, %v2690
      %v2867 = vsel %vm1522, %v1960, %v2694
      %v2868 = vsel %vm1522, %v1974, %v2698
      %v2869 = vsel %vm1522, %v1982, %v2702
      %v2870 = vsel %vm1522, %v1984, %v2706
      %v2871 = vsel %vm1522, %v1967, %v2710
      %v2872 = vsel %vm1522, %v1981, %v2714
      %v2873 = vsel %vm1522, %v1983, %v2718
      %v2874 = vsel %vm1522, %v1985, %v2722
      %v2875 = vsel %vm1522, %v2009, %v2726
      %v2876 = vsel %vm1522, %v2023, %v2730
      %v2877 = vsel %vm1522, %v2031, %v2734
      %v2878 = vsel %vm1522, %v2033, %v2738
      %v2879 = vsel %vm1522, %v2016, %v2742
      %v2880 = vsel %vm1522, %v2030, %v2746
      %v2881 = vsel %vm1522, %v2032, %v2750
      %v2882 = vsel %vm1522, %v2034, %v2754
      %v3011 = vcombine.low %v1523, %v1524
      %v3012 = vcombine.low %v1525, %v1526
      %v3014 = vunpack.c.l.s4 1983009808
      %v3015 = vunpack.c.0.s8 %v3014
      %v3016 = vlaneseq
      %v3017 = vshrl.u32 %v3016, 7
      %v3018 = vsub.s32 %v3015, %v3017
      %v3019 = vrot.slane %v3011, %v3018
      %v3021 = vunpack.c.l.s4 1983009808
      %v3022 = vunpack.c.0.s8 %v3021
      %v3023 = vlaneseq
      %v3024 = vshrl.u32 %v3023, 7
      %v3025 = vsub.s32 %v3022, %v3024
      %v3026 = vrot.slane %v3012, %v3025
      %v3027 = vcombine.low %v3019, %v3026
      %v3028 = vcombine.low %v1527, %v1528
      %v3029 = vcombine.low %v1529, %v1530
      %v3031 = vunpack.c.l.s4 1983009808
      %v3032 = vunpack.c.0.s8 %v3031
      %v3033 = vlaneseq
      %v3034 = vshrl.u32 %v3033, 7
      %v3035 = vsub.s32 %v3032, %v3034
      %v3036 = vrot.slane %v3028, %v3035
      %v3038 = vunpack.c.l.s4 1983009808
      %v3039 = vunpack.c.0.s8 %v3038
      %v3040 = vlaneseq
      %v3041 = vshrl.u32 %v3040, 7
      %v3042 = vsub.s32 %v3039, %v3041
      %v3043 = vrot.slane %v3029, %v3042
      %v3044 = vcombine.low %v3036, %v3043
      %v3045 = vcombine.low %v2819, %v2820
      %v3046 = vcombine.low %v2821, %v2822
      %v3048 = vunpack.c.l.s4 1983009808
      %v3049 = vunpack.c.0.s8 %v3048
      %v3050 = vlaneseq
      %v3051 = vshrl.u32 %v3050, 7
      %v3052 = vsub.s32 %v3049, %v3051
      %v3053 = vrot.slane %v3045, %v3052
      %v3055 = vunpack.c.l.s4 1983009808
      %v3056 = vunpack.c.0.s8 %v3055
      %v3057 = vlaneseq
      %v3058 = vshrl.u32 %v3057, 7
      %v3059 = vsub.s32 %v3056, %v3058
      %v3060 = vrot.slane %v3046, %v3059
      %v3061 = vcombine.low %v3053, %v3060
      %v3062 = vcombine.low %v2823, %v2824
      %v3063 = vcombine.low %v2825, %v2826
      %v3065 = vunpack.c.l.s4 1983009808
      %v3066 = vunpack.c.0.s8 %v3065
      %v3067 = vlaneseq
      %v3068 = vshrl.u32 %v3067, 7
      %v3069 = vsub.s32 %v3066, %v3068
      %v3070 = vrot.slane %v3062, %v3069
      %v3072 = vunpack.c.l.s4 1983009808
      %v3073 = vunpack.c.0.s8 %v3072
      %v3074 = vlaneseq
      %v3075 = vshrl.u32 %v3074, 7
      %v3076 = vsub.s32 %v3073, %v3075
      %v3077 = vrot.slane %v3063, %v3076
      %v3078 = vcombine.low %v3070, %v3077
      %v3079 = vcombine.low %v1531, %v1532
      %v3080 = vcombine.low %v1533, %v1534
      %v3082 = vunpack.c.l.s4 1983009808
      %v3083 = vunpack.c.0.s8 %v3082
      %v3084 = vlaneseq
      %v3085 = vshrl.u32 %v3084, 7
      %v3086 = vsub.s32 %v3083, %v3085
      %v3087 = vrot.slane %v3079, %v3086
      %v3089 = vunpack.c.l.s4 1983009808
      %v3090 = vunpack.c.0.s8 %v3089
      %v3091 = vlaneseq
      %v3092 = vshrl.u32 %v3091, 7
      %v3093 = vsub.s32 %v3090, %v3092
      %v3094 = vrot.slane %v3080, %v3093
      %v3095 = vcombine.low %v3087, %v3094
      %v3096 = vcombine.low %v1535, %v1536
      %v3097 = vcombine.low %v1537, %v1538
      %v3099 = vunpack.c.l.s4 1983009808
      %v3100 = vunpack.c.0.s8 %v3099
      %v3101 = vlaneseq
      %v3102 = vshrl.u32 %v3101, 7
      %v3103 = vsub.s32 %v3100, %v3102
      %v3104 = vrot.slane %v3096, %v3103
      %v3106 = vunpack.c.l.s4 1983009808
      %v3107 = vunpack.c.0.s8 %v3106
      %v3108 = vlaneseq
      %v3109 = vshrl.u32 %v3108, 7
      %v3110 = vsub.s32 %v3107, %v3109
      %v3111 = vrot.slane %v3097, %v3110
      %v3112 = vcombine.low %v3104, %v3111
      %v3113 = vcombine.low %v2827, %v2828
      %v3114 = vcombine.low %v2829, %v2830
      %v3116 = vunpack.c.l.s4 1983009808
      %v3117 = vunpack.c.0.s8 %v3116
      %v3118 = vlaneseq
      %v3119 = vshrl.u32 %v3118, 7
      %v3120 = vsub.s32 %v3117, %v3119
      %v3121 = vrot.slane %v3113, %v3120
      %v3123 = vunpack.c.l.s4 1983009808
      %v3124 = vunpack.c.0.s8 %v3123
      %v3125 = vlaneseq
      %v3126 = vshrl.u32 %v3125, 7
      %v3127 = vsub.s32 %v3124, %v3126
      %v3128 = vrot.slane %v3114, %v3127
      %v3129 = vcombine.low %v3121, %v3128
      %v3130 = vcombine.low %v2831, %v2832
      %v3131 = vcombine.low %v2833, %v2834
      %v3133 = vunpack.c.l.s4 1983009808
      %v3134 = vunpack.c.0.s8 %v3133
      %v3135 = vlaneseq
      %v3136 = vshrl.u32 %v3135, 7
      %v3137 = vsub.s32 %v3134, %v3136
      %v3138 = vrot.slane %v3130, %v3137
      %v3140 = vunpack.c.l.s4 1983009808
      %v3141 = vunpack.c.0.s8 %v3140
      %v3142 = vlaneseq
      %v3143 = vshrl.u32 %v3142, 7
      %v3144 = vsub.s32 %v3141, %v3143
      %v3145 = vrot.slane %v3131, %v3144
      %v3146 = vcombine.low %v3138, %v3145
      %v3147 = vcombine.low %v1539, %v1540
      %v3148 = vcombine.low %v1541, %v1542
      %v3150 = vunpack.c.l.s4 1983009808
      %v3151 = vunpack.c.0.s8 %v3150
      %v3152 = vlaneseq
      %v3153 = vshrl.u32 %v3152, 7
      %v3154 = vsub.s32 %v3151, %v3153
      %v3155 = vrot.slane %v3147, %v3154
      %v3157 = vunpack.c.l.s4 1983009808
      %v3158 = vunpack.c.0.s8 %v3157
      %v3159 = vlaneseq
      %v3160 = vshrl.u32 %v3159, 7
      %v3161 = vsub.s32 %v3158, %v3160
      %v3162 = vrot.slane %v3148, %v3161
      %v3163 = vcombine.low %v3155, %v3162
      %v3164 = vcombine.low %v1543, %v1544
      %v3165 = vcombine.low %v1545, %v1546
      %v3167 = vunpack.c.l.s4 1983009808
      %v3168 = vunpack.c.0.s8 %v3167
      %v3169 = vlaneseq
      %v3170 = vshrl.u32 %v3169, 7
      %v3171 = vsub.s32 %v3168, %v3170
      %v3172 = vrot.slane %v3164, %v3171
      %v3174 = vunpack.c.l.s4 1983009808
      %v3175 = vunpack.c.0.s8 %v3174
      %v3176 = vlaneseq
      %v3177 = vshrl.u32 %v3176, 7
      %v3178 = vsub.s32 %v3175, %v3177
      %v3179 = vrot.slane %v3165, %v3178
      %v3180 = vcombine.low %v3172, %v3179
      %v3181 = vcombine.low %v2835, %v2836
      %v3182 = vcombine.low %v2837, %v2838
      %v3184 = vunpack.c.l.s4 1983009808
      %v3185 = vunpack.c.0.s8 %v3184
      %v3186 = vlaneseq
      %v3187 = vshrl.u32 %v3186, 7
      %v3188 = vsub.s32 %v3185, %v3187
      %v3189 = vrot.slane %v3181, %v3188
      %v3191 = vunpack.c.l.s4 1983009808
      %v3192 = vunpack.c.0.s8 %v3191
      %v3193 = vlaneseq
      %v3194 = vshrl.u32 %v3193, 7
      %v3195 = vsub.s32 %v3192, %v3194
      %v3196 = vrot.slane %v3182, %v3195
      %v3197 = vcombine.low %v3189, %v3196
      %v3198 = vcombine.low %v2839, %v2840
      %v3199 = vcombine.low %v2841, %v2842
      %v3201 = vunpack.c.l.s4 1983009808
      %v3202 = vunpack.c.0.s8 %v3201
      %v3203 = vlaneseq
      %v3204 = vshrl.u32 %v3203, 7
      %v3205 = vsub.s32 %v3202, %v3204
      %v3206 = vrot.slane %v3198, %v3205
      %v3208 = vunpack.c.l.s4 1983009808
      %v3209 = vunpack.c.0.s8 %v3208
      %v3210 = vlaneseq
      %v3211 = vshrl.u32 %v3210, 7
      %v3212 = vsub.s32 %v3209, %v3211
      %v3213 = vrot.slane %v3199, %v3212
      %v3214 = vcombine.low %v3206, %v3213
      %v3215 = vcombine.low %v1547, %v1548
      %v3216 = vcombine.low %v1549, %v1550
      %v3218 = vunpack.c.l.s4 1983009808
      %v3219 = vunpack.c.0.s8 %v3218
      %v3220 = vlaneseq
      %v3221 = vshrl.u32 %v3220, 7
      %v3222 = vsub.s32 %v3219, %v3221
      %v3223 = vrot.slane %v3215, %v3222
      %v3225 = vunpack.c.l.s4 1983009808
      %v3226 = vunpack.c.0.s8 %v3225
      %v3227 = vlaneseq
      %v3228 = vshrl.u32 %v3227, 7
      %v3229 = vsub.s32 %v3226, %v3228
      %v3230 = vrot.slane %v3216, %v3229
      %v3231 = vcombine.low %v3223, %v3230
      %v3232 = vcombine.low %v1551, %v1552
      %v3233 = vcombine.low %v1553, %v1554
      %v3235 = vunpack.c.l.s4 1983009808
      %v3236 = vunpack.c.0.s8 %v3235
      %v3237 = vlaneseq
      %v3238 = vshrl.u32 %v3237, 7
      %v3239 = vsub.s32 %v3236, %v3238
      %v3240 = vrot.slane %v3232, %v3239
      %v3242 = vunpack.c.l.s4 1983009808
      %v3243 = vunpack.c.0.s8 %v3242
      %v3244 = vlaneseq
      %v3245 = vshrl.u32 %v3244, 7
      %v3246 = vsub.s32 %v3243, %v3245
      %v3247 = vrot.slane %v3233, %v3246
      %v3248 = vcombine.low %v3240, %v3247
      %v3249 = vcombine.low %v2843, %v2844
      %v3250 = vcombine.low %v2845, %v2846
      %v3252 = vunpack.c.l.s4 1983009808
      %v3253 = vunpack.c.0.s8 %v3252
      %v3254 = vlaneseq
      %v3255 = vshrl.u32 %v3254, 7
      %v3256 = vsub.s32 %v3253, %v3255
      %v3257 = vrot.slane %v3249, %v3256
      %v3259 = vunpack.c.l.s4 1983009808
      %v3260 = vunpack.c.0.s8 %v3259
      %v3261 = vlaneseq
      %v3262 = vshrl.u32 %v3261, 7
      %v3263 = vsub.s32 %v3260, %v3262
      %v3264 = vrot.slane %v3250, %v3263
      %v3265 = vcombine.low %v3257, %v3264
      %v3266 = vcombine.low %v2847, %v2848
      %v3267 = vcombine.low %v2849, %v2850
      %v3269 = vunpack.c.l.s4 1983009808
      %v3270 = vunpack.c.0.s8 %v3269
      %v3271 = vlaneseq
      %v3272 = vshrl.u32 %v3271, 7
      %v3273 = vsub.s32 %v3270, %v3272
      %v3274 = vrot.slane %v3266, %v3273
      %v3276 = vunpack.c.l.s4 1983009808
      %v3277 = vunpack.c.0.s8 %v3276
      %v3278 = vlaneseq
      %v3279 = vshrl.u32 %v3278, 7
      %v3280 = vsub.s32 %v3277, %v3279
      %v3281 = vrot.slane %v3267, %v3280
      %v3282 = vcombine.low %v3274, %v3281
      %v3283 = vcombine.low %v1555, %v1556
      %v3284 = vcombine.low %v1557, %v1558
      %v3286 = vunpack.c.l.s4 1983009808
      %v3287 = vunpack.c.0.s8 %v3286
      %v3288 = vlaneseq
      %v3289 = vshrl.u32 %v3288, 7
      %v3290 = vsub.s32 %v3287, %v3289
      %v3291 = vrot.slane %v3283, %v3290
      %v3293 = vunpack.c.l.s4 1983009808
      %v3294 = vunpack.c.0.s8 %v3293
      %v3295 = vlaneseq
      %v3296 = vshrl.u32 %v3295, 7
      %v3297 = vsub.s32 %v3294, %v3296
      %v3298 = vrot.slane %v3284, %v3297
      %v3299 = vcombine.low %v3291, %v3298
      %v3300 = vcombine.low %v1559, %v1560
      %v3301 = vcombine.low %v1561, %v1562
      %v3303 = vunpack.c.l.s4 1983009808
      %v3304 = vunpack.c.0.s8 %v3303
      %v3305 = vlaneseq
      %v3306 = vshrl.u32 %v3305, 7
      %v3307 = vsub.s32 %v3304, %v3306
      %v3308 = vrot.slane %v3300, %v3307
      %v3310 = vunpack.c.l.s4 1983009808
      %v3311 = vunpack.c.0.s8 %v3310
      %v3312 = vlaneseq
      %v3313 = vshrl.u32 %v3312, 7
      %v3314 = vsub.s32 %v3311, %v3313
      %v3315 = vrot.slane %v3301, %v3314
      %v3316 = vcombine.low %v3308, %v3315
      %v3317 = vcombine.low %v2851, %v2852
      %v3318 = vcombine.low %v2853, %v2854
      %v3320 = vunpack.c.l.s4 1983009808
      %v3321 = vunpack.c.0.s8 %v3320
      %v3322 = vlaneseq
      %v3323 = vshrl.u32 %v3322, 7
      %v3324 = vsub.s32 %v3321, %v3323
      %v3325 = vrot.slane %v3317, %v3324
      %v3327 = vunpack.c.l.s4 1983009808
      %v3328 = vunpack.c.0.s8 %v3327
      %v3329 = vlaneseq
      %v3330 = vshrl.u32 %v3329, 7
      %v3331 = vsub.s32 %v3328, %v3330
      %v3332 = vrot.slane %v3318, %v3331
      %v3333 = vcombine.low %v3325, %v3332
      %v3334 = vcombine.low %v2855, %v2856
      %v3335 = vcombine.low %v2857, %v2858
      %v3337 = vunpack.c.l.s4 1983009808
      %v3338 = vunpack.c.0.s8 %v3337
      %v3339 = vlaneseq
      %v3340 = vshrl.u32 %v3339, 7
      %v3341 = vsub.s32 %v3338, %v3340
      %v3342 = vrot.slane %v3334, %v3341
      %v3344 = vunpack.c.l.s4 1983009808
      %v3345 = vunpack.c.0.s8 %v3344
      %v3346 = vlaneseq
      %v3347 = vshrl.u32 %v3346, 7
      %v3348 = vsub.s32 %v3345, %v3347
      %v3349 = vrot.slane %v3335, %v3348
      %v3350 = vcombine.low %v3342, %v3349
      %v3351 = vcombine.low %v1563, %v1564
      %v3352 = vcombine.low %v1565, %v1566
      %v3354 = vunpack.c.l.s4 1983009808
      %v3355 = vunpack.c.0.s8 %v3354
      %v3356 = vlaneseq
      %v3357 = vshrl.u32 %v3356, 7
      %v3358 = vsub.s32 %v3355, %v3357
      %v3359 = vrot.slane %v3351, %v3358
      %v3361 = vunpack.c.l.s4 1983009808
      %v3362 = vunpack.c.0.s8 %v3361
      %v3363 = vlaneseq
      %v3364 = vshrl.u32 %v3363, 7
      %v3365 = vsub.s32 %v3362, %v3364
      %v3366 = vrot.slane %v3352, %v3365
      %v3367 = vcombine.low %v3359, %v3366
      %v3368 = vcombine.low %v1567, %v1568
      %v3369 = vcombine.low %v1569, %v1570
      %v3371 = vunpack.c.l.s4 1983009808
      %v3372 = vunpack.c.0.s8 %v3371
      %v3373 = vlaneseq
      %v3374 = vshrl.u32 %v3373, 7
      %v3375 = vsub.s32 %v3372, %v3374
      %v3376 = vrot.slane %v3368, %v3375
      %v3378 = vunpack.c.l.s4 1983009808
      %v3379 = vunpack.c.0.s8 %v3378
      %v3380 = vlaneseq
      %v3381 = vshrl.u32 %v3380, 7
      %v3382 = vsub.s32 %v3379, %v3381
      %v3383 = vrot.slane %v3369, %v3382
      %v3384 = vcombine.low %v3376, %v3383
      %v3385 = vcombine.low %v2859, %v2860
      %v3386 = vcombine.low %v2861, %v2862
      %v3388 = vunpack.c.l.s4 1983009808
      %v3389 = vunpack.c.0.s8 %v3388
      %v3390 = vlaneseq
      %v3391 = vshrl.u32 %v3390, 7
      %v3392 = vsub.s32 %v3389, %v3391
      %v3393 = vrot.slane %v3385, %v3392
      %v3395 = vunpack.c.l.s4 1983009808
      %v3396 = vunpack.c.0.s8 %v3395
      %v3397 = vlaneseq
      %v3398 = vshrl.u32 %v3397, 7
      %v3399 = vsub.s32 %v3396, %v3398
      %v3400 = vrot.slane %v3386, %v3399
      %v3401 = vcombine.low %v3393, %v3400
      %v3402 = vcombine.low %v2863, %v2864
      %v3403 = vcombine.low %v2865, %v2866
      %v3405 = vunpack.c.l.s4 1983009808
      %v3406 = vunpack.c.0.s8 %v3405
      %v3407 = vlaneseq
      %v3408 = vshrl.u32 %v3407, 7
      %v3409 = vsub.s32 %v3406, %v3408
      %v3410 = vrot.slane %v3402, %v3409
      %v3412 = vunpack.c.l.s4 1983009808
      %v3413 = vunpack.c.0.s8 %v3412
      %v3414 = vlaneseq
      %v3415 = vshrl.u32 %v3414, 7
      %v3416 = vsub.s32 %v3413, %v3415
      %v3417 = vrot.slane %v3403, %v3416
      %v3418 = vcombine.low %v3410, %v3417
      %v3419 = vcombine.low %v1571, %v1572
      %v3420 = vcombine.low %v1573, %v1574
      %v3422 = vunpack.c.l.s4 1983009808
      %v3423 = vunpack.c.0.s8 %v3422
      %v3424 = vlaneseq
      %v3425 = vshrl.u32 %v3424, 7
      %v3426 = vsub.s32 %v3423, %v3425
      %v3427 = vrot.slane %v3419, %v3426
      %v3429 = vunpack.c.l.s4 1983009808
      %v3430 = vunpack.c.0.s8 %v3429
      %v3431 = vlaneseq
      %v3432 = vshrl.u32 %v3431, 7
      %v3433 = vsub.s32 %v3430, %v3432
      %v3434 = vrot.slane %v3420, %v3433
      %v3435 = vcombine.low %v3427, %v3434
      %v3436 = vcombine.low %v1575, %v1576
      %v3437 = vcombine.low %v1577, %v1578
      %v3439 = vunpack.c.l.s4 1983009808
      %v3440 = vunpack.c.0.s8 %v3439
      %v3441 = vlaneseq
      %v3442 = vshrl.u32 %v3441, 7
      %v3443 = vsub.s32 %v3440, %v3442
      %v3444 = vrot.slane %v3436, %v3443
      %v3446 = vunpack.c.l.s4 1983009808
      %v3447 = vunpack.c.0.s8 %v3446
      %v3448 = vlaneseq
      %v3449 = vshrl.u32 %v3448, 7
      %v3450 = vsub.s32 %v3447, %v3449
      %v3451 = vrot.slane %v3437, %v3450
      %v3452 = vcombine.low %v3444, %v3451
      %v3453 = vcombine.low %v2867, %v2868
      %v3454 = vcombine.low %v2869, %v2870
      %v3456 = vunpack.c.l.s4 1983009808
      %v3457 = vunpack.c.0.s8 %v3456
      %v3458 = vlaneseq
      %v3459 = vshrl.u32 %v3458, 7
      %v3460 = vsub.s32 %v3457, %v3459
      %v3461 = vrot.slane %v3453, %v3460
      %v3463 = vunpack.c.l.s4 1983009808
      %v3464 = vunpack.c.0.s8 %v3463
      %v3465 = vlaneseq
      %v3466 = vshrl.u32 %v3465, 7
      %v3467 = vsub.s32 %v3464, %v3466
      %v3468 = vrot.slane %v3454, %v3467
      %v3469 = vcombine.low %v3461, %v3468
      %v3470 = vcombine.low %v2871, %v2872
      %v3471 = vcombine.low %v2873, %v2874
      %v3473 = vunpack.c.l.s4 1983009808
      %v3474 = vunpack.c.0.s8 %v3473
      %v3475 = vlaneseq
      %v3476 = vshrl.u32 %v3475, 7
      %v3477 = vsub.s32 %v3474, %v3476
      %v3478 = vrot.slane %v3470, %v3477
      %v3480 = vunpack.c.l.s4 1983009808
      %v3481 = vunpack.c.0.s8 %v3480
      %v3482 = vlaneseq
      %v3483 = vshrl.u32 %v3482, 7
      %v3484 = vsub.s32 %v3481, %v3483
      %v3485 = vrot.slane %v3471, %v3484
      %v3486 = vcombine.low %v3478, %v3485
      %v3487 = vcombine.low %v1579, %v1580
      %v3488 = vcombine.low %v1581, %v1582
      %v3490 = vunpack.c.l.s4 1983009808
      %v3491 = vunpack.c.0.s8 %v3490
      %v3492 = vlaneseq
      %v3493 = vshrl.u32 %v3492, 7
      %v3494 = vsub.s32 %v3491, %v3493
      %v3495 = vrot.slane %v3487, %v3494
      %v3497 = vunpack.c.l.s4 1983009808
      %v3498 = vunpack.c.0.s8 %v3497
      %v3499 = vlaneseq
      %v3500 = vshrl.u32 %v3499, 7
      %v3501 = vsub.s32 %v3498, %v3500
      %v3502 = vrot.slane %v3488, %v3501
      %v3503 = vcombine.low %v3495, %v3502
      %v3504 = vcombine.low %v1583, %v1584
      %v3505 = vcombine.low %v1585, %v1586
      %v3507 = vunpack.c.l.s4 1983009808
      %v3508 = vunpack.c.0.s8 %v3507
      %v3509 = vlaneseq
      %v3510 = vshrl.u32 %v3509, 7
      %v3511 = vsub.s32 %v3508, %v3510
      %v3512 = vrot.slane %v3504, %v3511
      %v3514 = vunpack.c.l.s4 1983009808
      %v3515 = vunpack.c.0.s8 %v3514
      %v3516 = vlaneseq
      %v3517 = vshrl.u32 %v3516, 7
      %v3518 = vsub.s32 %v3515, %v3517
      %v3519 = vrot.slane %v3505, %v3518
      %v3520 = vcombine.low %v3512, %v3519
      %v3521 = vcombine.low %v2875, %v2876
      %v3522 = vcombine.low %v2877, %v2878
      %v3524 = vunpack.c.l.s4 1983009808
      %v3525 = vunpack.c.0.s8 %v3524
      %v3526 = vlaneseq
      %v3527 = vshrl.u32 %v3526, 7
      %v3528 = vsub.s32 %v3525, %v3527
      %v3529 = vrot.slane %v3521, %v3528
      %v3531 = vunpack.c.l.s4 1983009808
      %v3532 = vunpack.c.0.s8 %v3531
      %v3533 = vlaneseq
      %v3534 = vshrl.u32 %v3533, 7
      %v3535 = vsub.s32 %v3532, %v3534
      %v3536 = vrot.slane %v3522, %v3535
      %v3537 = vcombine.low %v3529, %v3536
      %v3538 = vcombine.low %v2879, %v2880
      %v3539 = vcombine.low %v2881, %v2882
      %v3541 = vunpack.c.l.s4 1983009808
      %v3542 = vunpack.c.0.s8 %v3541
      %v3543 = vlaneseq
      %v3544 = vshrl.u32 %v3543, 7
      %v3545 = vsub.s32 %v3542, %v3544
      %v3546 = vrot.slane %v3538, %v3545
      %v3548 = vunpack.c.l.s4 1983009808
      %v3549 = vunpack.c.0.s8 %v3548
      %v3550 = vlaneseq
      %v3551 = vshrl.u32 %v3550, 7
      %v3552 = vsub.s32 %v3549, %v3551
      %v3553 = vrot.slane %v3539, %v3552
      %v3554 = vcombine.low %v3546, %v3553
      %v3555 = vrot.slane %v3027, 7
      %v3556 = vrot.slane %v3044, 7
      %v3557 = vsel %vm1522, %v3555, %v3556
      %v3558 = vrot.slane %v3061, 7
      %v3559 = vrot.slane %v3078, 7
      %v3560 = vsel %vm1522, %v3558, %v3559
      %v3561 = vrot.slane %v3095, 7
      %v3562 = vrot.slane %v3112, 7
      %v3563 = vsel %vm1522, %v3561, %v3562
      %v3564 = vrot.slane %v3129, 7
      %v3565 = vrot.slane %v3146, 7
      %v3566 = vsel %vm1522, %v3564, %v3565
      %v3567 = vrot.slane %v3163, 7
      %v3568 = vrot.slane %v3180, 7
      %v3569 = vsel %vm1522, %v3567, %v3568
      %v3570 = vrot.slane %v3197, 7
      %v3571 = vrot.slane %v3214, 7
      %v3572 = vsel %vm1522, %v3570, %v3571
      %v3573 = vrot.slane %v3231, 7
      %v3574 = vrot.slane %v3248, 7
      %v3575 = vsel %vm1522, %v3573, %v3574
      %v3576 = vrot.slane %v3265, 7
      %v3577 = vrot.slane %v3282, 7
      %v3578 = vsel %vm1522, %v3576, %v3577
      %v3579 = vrot.slane %v3299, 7
      %v3580 = vrot.slane %v3316, 7
      %v3581 = vsel %vm1522, %v3579, %v3580
      %v3582 = vrot.slane %v3333, 7
      %v3583 = vrot.slane %v3350, 7
      %v3584 = vsel %vm1522, %v3582, %v3583
      %v3585 = vrot.slane %v3367, 7
      %v3586 = vrot.slane %v3384, 7
      %v3587 = vsel %vm1522, %v3585, %v3586
      %v3588 = vrot.slane %v3401, 7
      %v3589 = vrot.slane %v3418, 7
      %v3590 = vsel %vm1522, %v3588, %v3589
      %v3591 = vrot.slane %v3435, 7
      %v3592 = vrot.slane %v3452, 7
      %v3593 = vsel %vm1522, %v3591, %v3592
      %v3594 = vrot.slane %v3469, 7
      %v3595 = vrot.slane %v3486, 7
      %v3596 = vsel %vm1522, %v3594, %v3595
      %v3597 = vrot.slane %v3503, 7
      %v3598 = vrot.slane %v3520, 7
      %v3599 = vsel %vm1522, %v3597, %v3598
      %v3600 = vrot.slane %v3537, 7
      %v3601 = vrot.slane %v3554, 7
      %v3602 = vsel %vm1522, %v3600, %v3601
      %v3650 = vsel %vm1522, 0.0, %v3555
      %v3651 = vsel %vm1522, 0.0, %v3558
      %v3652 = vsel %vm1522, 0.0, %v3561
      %v3653 = vsel %vm1522, 0.0, %v3564
      %v3654 = vsel %vm1522, 0.0, %v3567
      %v3655 = vsel %vm1522, 0.0, %v3570
      %v3656 = vsel %vm1522, 0.0, %v3573
      %v3657 = vsel %vm1522, 0.0, %v3576
      %v3658 = vsel %vm1522, 0.0, %v3579
      %v3659 = vsel %vm1522, 0.0, %v3582
      %v3660 = vsel %vm1522, 0.0, %v3585
      %v3661 = vsel %vm1522, 0.0, %v3588
      %v3662 = vsel %vm1522, 0.0, %v3591
      %v3663 = vsel %vm1522, 0.0, %v3594
      %v3664 = vsel %vm1522, 0.0, %v3597
      %v3665 = vsel %vm1522, 0.0, %v3600
      %v3666 = vsel %vm1522, %v3556, 0.0
      %v3667 = vsel %vm1522, %v3559, 0.0
      %v3668 = vsel %vm1522, %v3562, 0.0
      %v3669 = vsel %vm1522, %v3565, 0.0
      %v3670 = vsel %vm1522, %v3568, 0.0
      %v3671 = vsel %vm1522, %v3571, 0.0
      %v3672 = vsel %vm1522, %v3574, 0.0
      %v3673 = vsel %vm1522, %v3577, 0.0
      %v3674 = vsel %vm1522, %v3580, 0.0
      %v3675 = vsel %vm1522, %v3583, 0.0
      %v3676 = vsel %vm1522, %v3586, 0.0
      %v3677 = vsel %vm1522, %v3589, 0.0
      %v3678 = vsel %vm1522, %v3592, 0.0
      %v3679 = vsel %vm1522, %v3595, 0.0
      %v3680 = vsel %vm1522, %v3598, 0.0
      %v3681 = vsel %vm1522, %v3601, 0.0
      %vm3713 = vcmask 1046528
      %v3714 = vrot.slane 0.0, 1
      %v3715 = vsel %vm3713, %v3714, %v3714
      %v3716 = vrot.slane %v3650, 1
      %v3717 = vrot.slane %v3557, 1
      %v3718 = vsel %vm3713, %v3716, %v3717
      %v3719 = vrot.slane %v3666, 1
      %v3720 = vsel %vm3713, %v3717, %v3719
      %v3721 = vrot.slane %v3651, 1
      %v3722 = vrot.slane %v3560, 1
      %v3723 = vsel %vm3713, %v3721, %v3722
      %v3724 = vrot.slane %v3667, 1
      %v3725 = vsel %vm3713, %v3722, %v3724
      %v3726 = vrot.slane %v3652, 1
      %v3727 = vrot.slane %v3563, 1
      %v3728 = vsel %vm3713, %v3726, %v3727
      %v3729 = vrot.slane %v3668, 1
      %v3730 = vsel %vm3713, %v3727, %v3729
      %v3731 = vrot.slane %v3653, 1
      %v3732 = vrot.slane %v3566, 1
      %v3733 = vsel %vm3713, %v3731, %v3732
      %v3734 = vrot.slane %v3669, 1
      %v3735 = vsel %vm3713, %v3732, %v3734
      %v3736 = vrot.slane %v3654, 1
      %v3737 = vrot.slane %v3569, 1
      %v3738 = vsel %vm3713, %v3736, %v3737
      %v3739 = vrot.slane %v3670, 1
      %v3740 = vsel %vm3713, %v3737, %v3739
      %v3741 = vrot.slane %v3655, 1
      %v3742 = vrot.slane %v3572, 1
      %v3743 = vsel %vm3713, %v3741, %v3742
      %v3744 = vrot.slane %v3671, 1
      %v3745 = vsel %vm3713, %v3742, %v3744
      %v3746 = vrot.slane %v3656, 1
      %v3747 = vrot.slane %v3575, 1
      %v3748 = vsel %vm3713, %v3746, %v3747
      %v3749 = vrot.slane %v3672, 1
      %v3750 = vsel %vm3713, %v3747, %v3749
      %v3751 = vrot.slane %v3657, 1
      %v3752 = vrot.slane %v3578, 1
      %v3753 = vsel %vm3713, %v3751, %v3752
      %v3754 = vrot.slane %v3673, 1
      %v3755 = vsel %vm3713, %v3752, %v3754
      %v3756 = vrot.slane %v3658, 1
      %v3757 = vrot.slane %v3581, 1
      %v3758 = vsel %vm3713, %v3756, %v3757
      %v3759 = vrot.slane %v3674, 1
      %v3760 = vsel %vm3713, %v3757, %v3759
      %v3761 = vrot.slane %v3659, 1
      %v3762 = vrot.slane %v3584, 1
      %v3763 = vsel %vm3713, %v3761, %v3762
      %v3764 = vrot.slane %v3675, 1
      %v3765 = vsel %vm3713, %v3762, %v3764
      %v3766 = vrot.slane %v3660, 1
      %v3767 = vrot.slane %v3587, 1
      %v3768 = vsel %vm3713, %v3766, %v3767
      %v3769 = vrot.slane %v3676, 1
      %v3770 = vsel %vm3713, %v3767, %v3769
      %v3771 = vrot.slane %v3661, 1
      %v3772 = vrot.slane %v3590, 1
      %v3773 = vsel %vm3713, %v3771, %v3772
      %v3774 = vrot.slane %v3677, 1
      %v3775 = vsel %vm3713, %v3772, %v3774
      %v3776 = vrot.slane %v3662, 1
      %v3777 = vrot.slane %v3593, 1
      %v3778 = vsel %vm3713, %v3776, %v3777
      %v3779 = vrot.slane %v3678, 1
      %v3780 = vsel %vm3713, %v3777, %v3779
      %v3781 = vrot.slane %v3663, 1
      %v3782 = vrot.slane %v3596, 1
      %v3783 = vsel %vm3713, %v3781, %v3782
      %v3784 = vrot.slane %v3679, 1
      %v3785 = vsel %vm3713, %v3782, %v3784
      %v3786 = vrot.slane %v3664, 1
      %v3787 = vrot.slane %v3599, 1
      %v3788 = vsel %vm3713, %v3786, %v3787
      %v3789 = vrot.slane %v3680, 1
      %v3790 = vsel %vm3713, %v3787, %v3789
      %vm3791 = vcmask 1045504
      %v3792 = vrot.slane 0.0, 2
      %v3793 = vsel %vm3791, %v3792, %v3792
      %v3794 = vrot.slane %v3650, 2
      %v3795 = vrot.slane %v3557, 2
      %v3796 = vsel %vm3791, %v3794, %v3795
      %v3797 = vrot.slane %v3666, 2
      %v3798 = vsel %vm3791, %v3795, %v3797
      %v3799 = vrot.slane %v3651, 2
      %v3800 = vrot.slane %v3560, 2
      %v3801 = vsel %vm3791, %v3799, %v3800
      %v3802 = vrot.slane %v3667, 2
      %v3803 = vsel %vm3791, %v3800, %v3802
      %v3804 = vrot.slane %v3652, 2
      %v3805 = vrot.slane %v3563, 2
      %v3806 = vsel %vm3791, %v3804, %v3805
      %v3807 = vrot.slane %v3668, 2
      %v3808 = vsel %vm3791, %v3805, %v3807
      %v3809 = vrot.slane %v3653, 2
      %v3810 = vrot.slane %v3566, 2
      %v3811 = vsel %vm3791, %v3809, %v3810
      %v3812 = vrot.slane %v3669, 2
      %v3813 = vsel %vm3791, %v3810, %v3812
      %v3814 = vrot.slane %v3654, 2
      %v3815 = vrot.slane %v3569, 2
      %v3816 = vsel %vm3791, %v3814, %v3815
      %v3817 = vrot.slane %v3670, 2
      %v3818 = vsel %vm3791, %v3815, %v3817
      %v3819 = vrot.slane %v3655, 2
      %v3820 = vrot.slane %v3572, 2
      %v3821 = vsel %vm3791, %v3819, %v3820
      %v3822 = vrot.slane %v3671, 2
      %v3823 = vsel %vm3791, %v3820, %v3822
      %v3824 = vrot.slane %v3656, 2
      %v3825 = vrot.slane %v3575, 2
      %v3826 = vsel %vm3791, %v3824, %v3825
      %v3827 = vrot.slane %v3672, 2
      %v3828 = vsel %vm3791, %v3825, %v3827
      %v3829 = vrot.slane %v3657, 2
      %v3830 = vrot.slane %v3578, 2
      %v3831 = vsel %vm3791, %v3829, %v3830
      %v3832 = vrot.slane %v3673, 2
      %v3833 = vsel %vm3791, %v3830, %v3832
      %v3834 = vrot.slane %v3658, 2
      %v3835 = vrot.slane %v3581, 2
      %v3836 = vsel %vm3791, %v3834, %v3835
      %v3837 = vrot.slane %v3674, 2
      %v3838 = vsel %vm3791, %v3835, %v3837
      %v3839 = vrot.slane %v3659, 2
      %v3840 = vrot.slane %v3584, 2
      %v3841 = vsel %vm3791, %v3839, %v3840
      %v3842 = vrot.slane %v3675, 2
      %v3843 = vsel %vm3791, %v3840, %v3842
      %v3844 = vrot.slane %v3660, 2
      %v3845 = vrot.slane %v3587, 2
      %v3846 = vsel %vm3791, %v3844, %v3845
      %v3847 = vrot.slane %v3676, 2
      %v3848 = vsel %vm3791, %v3845, %v3847
      %v3849 = vrot.slane %v3661, 2
      %v3850 = vrot.slane %v3590, 2
      %v3851 = vsel %vm3791, %v3849, %v3850
      %v3852 = vrot.slane %v3677, 2
      %v3853 = vsel %vm3791, %v3850, %v3852
      %v3854 = vrot.slane %v3662, 2
      %v3855 = vrot.slane %v3593, 2
      %v3856 = vsel %vm3791, %v3854, %v3855
      %v3857 = vrot.slane %v3678, 2
      %v3858 = vsel %vm3791, %v3855, %v3857
      %v3859 = vrot.slane %v3663, 2
      %v3860 = vrot.slane %v3596, 2
      %v3861 = vsel %vm3791, %v3859, %v3860
      %v3862 = vrot.slane %v3679, 2
      %v3863 = vsel %vm3791, %v3860, %v3862
      %v3864 = vrot.slane %v3664, 2
      %v3865 = vrot.slane %v3599, 2
      %v3866 = vsel %vm3791, %v3864, %v3865
      %v3867 = vrot.slane %v3680, 2
      %v3868 = vsel %vm3791, %v3865, %v3867
      %v3871 = vrot.slane %v3665, 1
      %v3872 = vrot.slane %v3602, 1
      %v3873 = vsel %vm3713, %v3871, %v3872
      %v3874 = vrot.slane %v3681, 1
      %v3875 = vsel %vm3713, %v3872, %v3874
      %v3876 = vrot.slane %v3665, 2
      %v3877 = vrot.slane %v3602, 2
      %v3878 = vsel %vm3791, %v3876, %v3877
      %v3879 = vrot.slane %v3681, 2
      %v3880 = vsel %vm3791, %v3877, %v3879
      %3881 = vrot.lane.b32.xlu0 %v3715, 4
      %v3882 = vpop.permute.xlu0 %3881
      %3883 = vrot.lane.b32.xlu0 %v3718, 4
      %v3884 = vpop.permute.xlu0 %3883
      %3885 = vrot.lane.b32.xlu0 %v3720, 4
      %v3886 = vpop.permute.xlu0 %3885
      %3887 = vrot.lane.b32.xlu0 %v3723, 4
      %v3888 = vpop.permute.xlu0 %3887
      %3889 = vrot.lane.b32.xlu0 %v3725, 4
      %v3890 = vpop.permute.xlu0 %3889
      %3891 = vrot.lane.b32.xlu0 %v3728, 4
      %v3892 = vpop.permute.xlu0 %3891
      %3893 = vrot.lane.b32.xlu0 %v3730, 4
      %v3894 = vpop.permute.xlu0 %3893
      %3895 = vrot.lane.b32.xlu0 %v3733, 4
      %v3896 = vpop.permute.xlu0 %3895
      %3897 = vrot.lane.b32.xlu0 %v3735, 4
      %v3898 = vpop.permute.xlu0 %3897
      %3899 = vrot.lane.b32.xlu0 %v3738, 4
      %v3900 = vpop.permute.xlu0 %3899
      %3901 = vrot.lane.b32.xlu0 %v3740, 4
      %v3902 = vpop.permute.xlu0 %3901
      %3903 = vrot.lane.b32.xlu0 %v3743, 4
      %v3904 = vpop.permute.xlu0 %3903
      %3905 = vrot.lane.b32.xlu0 %v3745, 4
      %v3906 = vpop.permute.xlu0 %3905
      %3907 = vrot.lane.b32.xlu0 %v3748, 4
      %v3908 = vpop.permute.xlu0 %3907
      %3909 = vrot.lane.b32.xlu0 %v3750, 4
      %v3910 = vpop.permute.xlu0 %3909
      %3911 = vrot.lane.b32.xlu0 %v3753, 4
      %v3912 = vpop.permute.xlu0 %3911
      %3913 = vrot.lane.b32.xlu0 %v3755, 4
      %v3914 = vpop.permute.xlu0 %3913
      %3915 = vrot.lane.b32.xlu0 %v3758, 4
      %v3916 = vpop.permute.xlu0 %3915
      %3917 = vrot.lane.b32.xlu0 %v3760, 4
      %v3918 = vpop.permute.xlu0 %3917
      %3919 = vrot.lane.b32.xlu0 %v3763, 4
      %v3920 = vpop.permute.xlu0 %3919
      %3921 = vrot.lane.b32.xlu0 %v3765, 4
      %v3922 = vpop.permute.xlu0 %3921
      %3923 = vrot.lane.b32.xlu0 %v3768, 4
      %v3924 = vpop.permute.xlu0 %3923
      %3925 = vrot.lane.b32.xlu0 %v3770, 4
      %v3926 = vpop.permute.xlu0 %3925
      %3927 = vrot.lane.b32.xlu0 %v3773, 4
      %v3928 = vpop.permute.xlu0 %3927
      %3929 = vrot.lane.b32.xlu0 %v3775, 4
      %v3930 = vpop.permute.xlu0 %3929
      %3931 = vrot.lane.b32.xlu0 %v3778, 4
      %v3932 = vpop.permute.xlu0 %3931
      %3933 = vrot.lane.b32.xlu0 %v3780, 4
      %v3934 = vpop.permute.xlu0 %3933
      %3935 = vrot.lane.b32.xlu0 %v3783, 4
      %v3936 = vpop.permute.xlu0 %3935
      %3937 = vrot.lane.b32.xlu0 %v3785, 4
      %v3938 = vpop.permute.xlu0 %3937
      %3939 = vrot.lane.b32.xlu0 %v3788, 4
      %v3940 = vpop.permute.xlu0 %3939
      %3941 = vrot.lane.b32.xlu0 %v3790, 4
      %v3942 = vpop.permute.xlu0 %3941
      %3974 = vrot.lane.b32.xlu0 %v3793, 8
      %v3975 = vpop.permute.xlu0 %3974
      %3976 = vrot.lane.b32.xlu0 %v3796, 8
      %v3977 = vpop.permute.xlu0 %3976
      %3978 = vrot.lane.b32.xlu0 %v3798, 8
      %v3979 = vpop.permute.xlu0 %3978
      %3980 = vrot.lane.b32.xlu0 %v3801, 8
      %v3981 = vpop.permute.xlu0 %3980
      %3982 = vrot.lane.b32.xlu0 %v3803, 8
      %v3983 = vpop.permute.xlu0 %3982
      %3984 = vrot.lane.b32.xlu0 %v3806, 8
      %v3985 = vpop.permute.xlu0 %3984
      %3986 = vrot.lane.b32.xlu0 %v3808, 8
      %v3987 = vpop.permute.xlu0 %3986
      %3988 = vrot.lane.b32.xlu0 %v3811, 8
      %v3989 = vpop.permute.xlu0 %3988
      %3990 = vrot.lane.b32.xlu0 %v3813, 8
      %v3991 = vpop.permute.xlu0 %3990
      %3992 = vrot.lane.b32.xlu0 %v3816, 8
      %v3993 = vpop.permute.xlu0 %3992
      %3994 = vrot.lane.b32.xlu0 %v3818, 8
      %v3995 = vpop.permute.xlu0 %3994
      %3996 = vrot.lane.b32.xlu0 %v3821, 8
      %v3997 = vpop.permute.xlu0 %3996
      %3998 = vrot.lane.b32.xlu0 %v3823, 8
      %v3999 = vpop.permute.xlu0 %3998
      %4000 = vrot.lane.b32.xlu0 %v3826, 8
      %v4001 = vpop.permute.xlu0 %4000
      %4002 = vrot.lane.b32.xlu0 %v3828, 8
      %v4003 = vpop.permute.xlu0 %4002
      %4004 = vrot.lane.b32.xlu0 %v3831, 8
      %v4005 = vpop.permute.xlu0 %4004
      %4006 = vrot.lane.b32.xlu0 %v3833, 8
      %v4007 = vpop.permute.xlu0 %4006
      %4008 = vrot.lane.b32.xlu0 %v3836, 8
      %v4009 = vpop.permute.xlu0 %4008
      %4010 = vrot.lane.b32.xlu0 %v3838, 8
      %v4011 = vpop.permute.xlu0 %4010
      %4012 = vrot.lane.b32.xlu0 %v3841, 8
      %v4013 = vpop.permute.xlu0 %4012
      %4014 = vrot.lane.b32.xlu0 %v3843, 8
      %v4015 = vpop.permute.xlu0 %4014
      %4016 = vrot.lane.b32.xlu0 %v3846, 8
      %v4017 = vpop.permute.xlu0 %4016
      %4018 = vrot.lane.b32.xlu0 %v3848, 8
      %v4019 = vpop.permute.xlu0 %4018
      %4020 = vrot.lane.b32.xlu0 %v3851, 8
      %v4021 = vpop.permute.xlu0 %4020
      %4022 = vrot.lane.b32.xlu0 %v3853, 8
      %v4023 = vpop.permute.xlu0 %4022
      %4024 = vrot.lane.b32.xlu0 %v3856, 8
      %v4025 = vpop.permute.xlu0 %4024
      %4026 = vrot.lane.b32.xlu0 %v3858, 8
      %v4027 = vpop.permute.xlu0 %4026
      %4028 = vrot.lane.b32.xlu0 %v3861, 8
      %v4029 = vpop.permute.xlu0 %4028
      %4030 = vrot.lane.b32.xlu0 %v3863, 8
      %v4031 = vpop.permute.xlu0 %4030
      %4032 = vrot.lane.b32.xlu0 %v3866, 8
      %v4033 = vpop.permute.xlu0 %4032
      %4034 = vrot.lane.b32.xlu0 %v3868, 8
      %v4035 = vpop.permute.xlu0 %4034
      %4067 = vrot.lane.b32.xlu0 %v3650, 12
      %v4068 = vpop.permute.xlu0 %4067
      %4069 = vrot.lane.b32.xlu0 %v3557, 12
      %v4070 = vpop.permute.xlu0 %4069
      %4071 = vrot.lane.b32.xlu0 %v3651, 12
      %v4072 = vpop.permute.xlu0 %4071
      %4073 = vrot.lane.b32.xlu0 %v3560, 12
      %v4074 = vpop.permute.xlu0 %4073
      %4075 = vrot.lane.b32.xlu0 %v3652, 12
      %v4076 = vpop.permute.xlu0 %4075
      %4077 = vrot.lane.b32.xlu0 %v3563, 12
      %v4078 = vpop.permute.xlu0 %4077
      %4079 = vrot.lane.b32.xlu0 %v3653, 12
      %v4080 = vpop.permute.xlu0 %4079
      %4081 = vrot.lane.b32.xlu0 %v3566, 12
      %v4082 = vpop.permute.xlu0 %4081
      %4083 = vrot.lane.b32.xlu0 %v3654, 12
      %v4084 = vpop.permute.xlu0 %4083
      %4085 = vrot.lane.b32.xlu0 %v3569, 12
      %v4086 = vpop.permute.xlu0 %4085
      %4087 = vrot.lane.b32.xlu0 %v3655, 12
      %v4088 = vpop.permute.xlu0 %4087
      %4089 = vrot.lane.b32.xlu0 %v3572, 12
      %v4090 = vpop.permute.xlu0 %4089
      %4091 = vrot.lane.b32.xlu0 %v3656, 12
      %v4092 = vpop.permute.xlu0 %4091
      %4093 = vrot.lane.b32.xlu0 %v3575, 12
      %v4094 = vpop.permute.xlu0 %4093
      %4095 = vrot.lane.b32.xlu0 %v3657, 12
      %v4096 = vpop.permute.xlu0 %4095
      %4097 = vrot.lane.b32.xlu0 %v3578, 12
      %v4098 = vpop.permute.xlu0 %4097
      %4099 = vrot.lane.b32.xlu0 %v3658, 12
      %v4100 = vpop.permute.xlu0 %4099
      %4101 = vrot.lane.b32.xlu0 %v3581, 12
      %v4102 = vpop.permute.xlu0 %4101
      %4103 = vrot.lane.b32.xlu0 %v3659, 12
      %v4104 = vpop.permute.xlu0 %4103
      %4105 = vrot.lane.b32.xlu0 %v3584, 12
      %v4106 = vpop.permute.xlu0 %4105
      %4107 = vrot.lane.b32.xlu0 %v3660, 12
      %v4108 = vpop.permute.xlu0 %4107
      %4109 = vrot.lane.b32.xlu0 %v3587, 12
      %v4110 = vpop.permute.xlu0 %4109
      %4111 = vrot.lane.b32.xlu0 %v3661, 12
      %v4112 = vpop.permute.xlu0 %4111
      %4113 = vrot.lane.b32.xlu0 %v3590, 12
      %v4114 = vpop.permute.xlu0 %4113
      %4115 = vrot.lane.b32.xlu0 %v3662, 12
      %v4116 = vpop.permute.xlu0 %4115
      %4117 = vrot.lane.b32.xlu0 %v3593, 12
      %v4118 = vpop.permute.xlu0 %4117
      %4119 = vrot.lane.b32.xlu0 %v3663, 12
      %v4120 = vpop.permute.xlu0 %4119
      %4121 = vrot.lane.b32.xlu0 %v3596, 12
      %v4122 = vpop.permute.xlu0 %4121
      %4123 = vrot.lane.b32.xlu0 %v3664, 12
      %v4124 = vpop.permute.xlu0 %4123
      %4125 = vrot.lane.b32.xlu0 %v3599, 12
      %v4126 = vpop.permute.xlu0 %4125
      %4127 = vrot.lane.b32.xlu0 %v3665, 12
      %v4128 = vpop.permute.xlu0 %4127
      %4129 = vrot.lane.b32.xlu0 %v3602, 12
      %v4130 = vpop.permute.xlu0 %4129
      %4163 = vrot.lane.b32.xlu0 %v3718, 16
      %v4164 = vpop.permute.xlu0 %4163
      %4165 = vrot.lane.b32.xlu0 %v3720, 16
      %v4166 = vpop.permute.xlu0 %4165
      %4167 = vrot.lane.b32.xlu0 %v3723, 16
      %v4168 = vpop.permute.xlu0 %4167
      %4169 = vrot.lane.b32.xlu0 %v3725, 16
      %v4170 = vpop.permute.xlu0 %4169
      %4171 = vrot.lane.b32.xlu0 %v3728, 16
      %v4172 = vpop.permute.xlu0 %4171
      %4173 = vrot.lane.b32.xlu0 %v3730, 16
      %v4174 = vpop.permute.xlu0 %4173
      %4175 = vrot.lane.b32.xlu0 %v3733, 16
      %v4176 = vpop.permute.xlu0 %4175
      %4177 = vrot.lane.b32.xlu0 %v3735, 16
      %v4178 = vpop.permute.xlu0 %4177
      %4179 = vrot.lane.b32.xlu0 %v3738, 16
      %v4180 = vpop.permute.xlu0 %4179
      %4181 = vrot.lane.b32.xlu0 %v3740, 16
      %v4182 = vpop.permute.xlu0 %4181
      %4183 = vrot.lane.b32.xlu0 %v3743, 16
      %v4184 = vpop.permute.xlu0 %4183
      %4185 = vrot.lane.b32.xlu0 %v3745, 16
      %v4186 = vpop.permute.xlu0 %4185
      %4187 = vrot.lane.b32.xlu0 %v3748, 16
      %v4188 = vpop.permute.xlu0 %4187
      %4189 = vrot.lane.b32.xlu0 %v3750, 16
      %v4190 = vpop.permute.xlu0 %4189
      %4191 = vrot.lane.b32.xlu0 %v3753, 16
      %v4192 = vpop.permute.xlu0 %4191
      %4193 = vrot.lane.b32.xlu0 %v3755, 16
      %v4194 = vpop.permute.xlu0 %4193
      %4195 = vrot.lane.b32.xlu0 %v3758, 16
      %v4196 = vpop.permute.xlu0 %4195
      %4197 = vrot.lane.b32.xlu0 %v3760, 16
      %v4198 = vpop.permute.xlu0 %4197
      %4199 = vrot.lane.b32.xlu0 %v3763, 16
      %v4200 = vpop.permute.xlu0 %4199
      %4201 = vrot.lane.b32.xlu0 %v3765, 16
      %v4202 = vpop.permute.xlu0 %4201
      %4203 = vrot.lane.b32.xlu0 %v3768, 16
      %v4204 = vpop.permute.xlu0 %4203
      %4205 = vrot.lane.b32.xlu0 %v3770, 16
      %v4206 = vpop.permute.xlu0 %4205
      %4207 = vrot.lane.b32.xlu0 %v3773, 16
      %v4208 = vpop.permute.xlu0 %4207
      %4209 = vrot.lane.b32.xlu0 %v3775, 16
      %v4210 = vpop.permute.xlu0 %4209
      %4211 = vrot.lane.b32.xlu0 %v3778, 16
      %v4212 = vpop.permute.xlu0 %4211
      %4213 = vrot.lane.b32.xlu0 %v3780, 16
      %v4214 = vpop.permute.xlu0 %4213
      %4215 = vrot.lane.b32.xlu0 %v3783, 16
      %v4216 = vpop.permute.xlu0 %4215
      %4217 = vrot.lane.b32.xlu0 %v3785, 16
      %v4218 = vpop.permute.xlu0 %4217
      %4219 = vrot.lane.b32.xlu0 %v3788, 16
      %v4220 = vpop.permute.xlu0 %4219
      %4221 = vrot.lane.b32.xlu0 %v3790, 16
      %v4222 = vpop.permute.xlu0 %4221
      %4223 = vrot.lane.b32.xlu0 %v3873, 16
      %v4224 = vpop.permute.xlu0 %4223
      %4225 = vrot.lane.b32.xlu0 %v3875, 16
      %v4226 = vpop.permute.xlu0 %4225
      %4259 = vrot.lane.b32.xlu0 %v3796, 20
      %v4260 = vpop.permute.xlu0 %4259
      %4261 = vrot.lane.b32.xlu0 %v3798, 20
      %v4262 = vpop.permute.xlu0 %4261
      %4263 = vrot.lane.b32.xlu0 %v3801, 20
      %v4264 = vpop.permute.xlu0 %4263
      %4265 = vrot.lane.b32.xlu0 %v3803, 20
      %v4266 = vpop.permute.xlu0 %4265
      %4267 = vrot.lane.b32.xlu0 %v3806, 20
      %v4268 = vpop.permute.xlu0 %4267
      %4269 = vrot.lane.b32.xlu0 %v3808, 20
      %v4270 = vpop.permute.xlu0 %4269
      %4271 = vrot.lane.b32.xlu0 %v3811, 20
      %v4272 = vpop.permute.xlu0 %4271
      %4273 = vrot.lane.b32.xlu0 %v3813, 20
      %v4274 = vpop.permute.xlu0 %4273
      %4275 = vrot.lane.b32.xlu0 %v3816, 20
      %v4276 = vpop.permute.xlu0 %4275
      %4277 = vrot.lane.b32.xlu0 %v3818, 20
      %v4278 = vpop.permute.xlu0 %4277
      %4279 = vrot.lane.b32.xlu0 %v3821, 20
      %v4280 = vpop.permute.xlu0 %4279
      %4281 = vrot.lane.b32.xlu0 %v3823, 20
      %v4282 = vpop.permute.xlu0 %4281
      %4283 = vrot.lane.b32.xlu0 %v3826, 20
      %v4284 = vpop.permute.xlu0 %4283
      %4285 = vrot.lane.b32.xlu0 %v3828, 20
      %v4286 = vpop.permute.xlu0 %4285
      %4287 = vrot.lane.b32.xlu0 %v3831, 20
      %v4288 = vpop.permute.xlu0 %4287
      %4289 = vrot.lane.b32.xlu0 %v3833, 20
      %v4290 = vpop.permute.xlu0 %4289
      %4291 = vrot.lane.b32.xlu0 %v3836, 20
      %v4292 = vpop.permute.xlu0 %4291
      %4293 = vrot.lane.b32.xlu0 %v3838, 20
      %v4294 = vpop.permute.xlu0 %4293
      %4295 = vrot.lane.b32.xlu0 %v3841, 20
      %v4296 = vpop.permute.xlu0 %4295
      %4297 = vrot.lane.b32.xlu0 %v3843, 20
      %v4298 = vpop.permute.xlu0 %4297
      %4299 = vrot.lane.b32.xlu0 %v3846, 20
      %v4300 = vpop.permute.xlu0 %4299
      %4301 = vrot.lane.b32.xlu0 %v3848, 20
      %v4302 = vpop.permute.xlu0 %4301
      %4303 = vrot.lane.b32.xlu0 %v3851, 20
      %v4304 = vpop.permute.xlu0 %4303
      %4305 = vrot.lane.b32.xlu0 %v3853, 20
      %v4306 = vpop.permute.xlu0 %4305
      %4307 = vrot.lane.b32.xlu0 %v3856, 20
      %v4308 = vpop.permute.xlu0 %4307
      %4309 = vrot.lane.b32.xlu0 %v3858, 20
      %v4310 = vpop.permute.xlu0 %4309
      %4311 = vrot.lane.b32.xlu0 %v3861, 20
      %v4312 = vpop.permute.xlu0 %4311
      %4313 = vrot.lane.b32.xlu0 %v3863, 20
      %v4314 = vpop.permute.xlu0 %4313
      %4315 = vrot.lane.b32.xlu0 %v3866, 20
      %v4316 = vpop.permute.xlu0 %4315
      %4317 = vrot.lane.b32.xlu0 %v3868, 20
      %v4318 = vpop.permute.xlu0 %4317
      %4319 = vrot.lane.b32.xlu0 %v3878, 20
      %v4320 = vpop.permute.xlu0 %4319
      %4321 = vrot.lane.b32.xlu0 %v3880, 20
      %v4322 = vpop.permute.xlu0 %4321
      %4355 = vrot.lane.b32.xlu0 %v3651, 24
      %v4356 = vpop.permute.xlu0 %4355
      %4357 = vrot.lane.b32.xlu0 %v3560, 24
      %v4358 = vpop.permute.xlu0 %4357
      %4359 = vrot.lane.b32.xlu0 %v3652, 24
      %v4360 = vpop.permute.xlu0 %4359
      %4361 = vrot.lane.b32.xlu0 %v3563, 24
      %v4362 = vpop.permute.xlu0 %4361
      %4363 = vrot.lane.b32.xlu0 %v3653, 24
      %v4364 = vpop.permute.xlu0 %4363
      %4365 = vrot.lane.b32.xlu0 %v3566, 24
      %v4366 = vpop.permute.xlu0 %4365
      %4367 = vrot.lane.b32.xlu0 %v3654, 24
      %v4368 = vpop.permute.xlu0 %4367
      %4369 = vrot.lane.b32.xlu0 %v3569, 24
      %v4370 = vpop.permute.xlu0 %4369
      %4371 = vrot.lane.b32.xlu0 %v3655, 24
      %v4372 = vpop.permute.xlu0 %4371
      %4373 = vrot.lane.b32.xlu0 %v3572, 24
      %v4374 = vpop.permute.xlu0 %4373
      %4375 = vrot.lane.b32.xlu0 %v3656, 24
      %v4376 = vpop.permute.xlu0 %4375
      %4377 = vrot.lane.b32.xlu0 %v3575, 24
      %v4378 = vpop.permute.xlu0 %4377
      %4379 = vrot.lane.b32.xlu0 %v3657, 24
      %v4380 = vpop.permute.xlu0 %4379
      %4381 = vrot.lane.b32.xlu0 %v3578, 24
      %v4382 = vpop.permute.xlu0 %4381
      %4383 = vrot.lane.b32.xlu0 %v3658, 24
      %v4384 = vpop.permute.xlu0 %4383
      %4385 = vrot.lane.b32.xlu0 %v3581, 24
      %v4386 = vpop.permute.xlu0 %4385
      %4387 = vrot.lane.b32.xlu0 %v3659, 24
      %v4388 = vpop.permute.xlu0 %4387
      %4389 = vrot.lane.b32.xlu0 %v3584, 24
      %v4390 = vpop.permute.xlu0 %4389
      %4391 = vrot.lane.b32.xlu0 %v3660, 24
      %v4392 = vpop.permute.xlu0 %4391
      %4393 = vrot.lane.b32.xlu0 %v3587, 24
      %v4394 = vpop.permute.xlu0 %4393
      %4395 = vrot.lane.b32.xlu0 %v3661, 24
      %v4396 = vpop.permute.xlu0 %4395
      %4397 = vrot.lane.b32.xlu0 %v3590, 24
      %v4398 = vpop.permute.xlu0 %4397
      %4399 = vrot.lane.b32.xlu0 %v3662, 24
      %v4400 = vpop.permute.xlu0 %4399
      %4401 = vrot.lane.b32.xlu0 %v3593, 24
      %v4402 = vpop.permute.xlu0 %4401
      %4403 = vrot.lane.b32.xlu0 %v3663, 24
      %v4404 = vpop.permute.xlu0 %4403
      %4405 = vrot.lane.b32.xlu0 %v3596, 24
      %v4406 = vpop.permute.xlu0 %4405
      %4407 = vrot.lane.b32.xlu0 %v3664, 24
      %v4408 = vpop.permute.xlu0 %4407
      %4409 = vrot.lane.b32.xlu0 %v3599, 24
      %v4410 = vpop.permute.xlu0 %4409
      %4411 = vrot.lane.b32.xlu0 %v3665, 24
      %v4412 = vpop.permute.xlu0 %4411
      %4413 = vrot.lane.b32.xlu0 %v3602, 24
      %v4414 = vpop.permute.xlu0 %4413
      %4415 = vrot.lane.b32.xlu0 0.0, 24
      %v4416 = vpop.permute.xlu0 %4415
      %4448 = vrot.lane.b32.xlu0 %v3723, 28
      %v4449 = vpop.permute.xlu0 %4448
      %4450 = vrot.lane.b32.xlu0 %v3725, 28
      %v4451 = vpop.permute.xlu0 %4450
      %4452 = vrot.lane.b32.xlu0 %v3728, 28
      %v4453 = vpop.permute.xlu0 %4452
      %4454 = vrot.lane.b32.xlu0 %v3730, 28
      %v4455 = vpop.permute.xlu0 %4454
      %4456 = vrot.lane.b32.xlu0 %v3733, 28
      %v4457 = vpop.permute.xlu0 %4456
      %4458 = vrot.lane.b32.xlu0 %v3735, 28
      %v4459 = vpop.permute.xlu0 %4458
      %4460 = vrot.lane.b32.xlu0 %v3738, 28
      %v4461 = vpop.permute.xlu0 %4460
      %4462 = vrot.lane.b32.xlu0 %v3740, 28
      %v4463 = vpop.permute.xlu0 %4462
      %4464 = vrot.lane.b32.xlu0 %v3743, 28
      %v4465 = vpop.permute.xlu0 %4464
      %4466 = vrot.lane.b32.xlu0 %v3745, 28
      %v4467 = vpop.permute.xlu0 %4466
      %4468 = vrot.lane.b32.xlu0 %v3748, 28
      %v4469 = vpop.permute.xlu0 %4468
      %4470 = vrot.lane.b32.xlu0 %v3750, 28
      %v4471 = vpop.permute.xlu0 %4470
      %4472 = vrot.lane.b32.xlu0 %v3753, 28
      %v4473 = vpop.permute.xlu0 %4472
      %4474 = vrot.lane.b32.xlu0 %v3755, 28
      %v4475 = vpop.permute.xlu0 %4474
      %4476 = vrot.lane.b32.xlu0 %v3758, 28
      %v4477 = vpop.permute.xlu0 %4476
      %4478 = vrot.lane.b32.xlu0 %v3760, 28
      %v4479 = vpop.permute.xlu0 %4478
      %4480 = vrot.lane.b32.xlu0 %v3763, 28
      %v4481 = vpop.permute.xlu0 %4480
      %4482 = vrot.lane.b32.xlu0 %v3765, 28
      %v4483 = vpop.permute.xlu0 %4482
      %4484 = vrot.lane.b32.xlu0 %v3768, 28
      %v4485 = vpop.permute.xlu0 %4484
      %4486 = vrot.lane.b32.xlu0 %v3770, 28
      %v4487 = vpop.permute.xlu0 %4486
      %4488 = vrot.lane.b32.xlu0 %v3773, 28
      %v4489 = vpop.permute.xlu0 %4488
      %4490 = vrot.lane.b32.xlu0 %v3775, 28
      %v4491 = vpop.permute.xlu0 %4490
      %4492 = vrot.lane.b32.xlu0 %v3778, 28
      %v4493 = vpop.permute.xlu0 %4492
      %4494 = vrot.lane.b32.xlu0 %v3780, 28
      %v4495 = vpop.permute.xlu0 %4494
      %4496 = vrot.lane.b32.xlu0 %v3783, 28
      %v4497 = vpop.permute.xlu0 %4496
      %4498 = vrot.lane.b32.xlu0 %v3785, 28
      %v4499 = vpop.permute.xlu0 %4498
      %4500 = vrot.lane.b32.xlu0 %v3788, 28
      %v4501 = vpop.permute.xlu0 %4500
      %4502 = vrot.lane.b32.xlu0 %v3790, 28
      %v4503 = vpop.permute.xlu0 %4502
      %4504 = vrot.lane.b32.xlu0 %v3873, 28
      %v4505 = vpop.permute.xlu0 %4504
      %4506 = vrot.lane.b32.xlu0 %v3875, 28
      %v4507 = vpop.permute.xlu0 %4506
      %4508 = vrot.lane.b32.xlu0 %v3715, 28
      %v4509 = vpop.permute.xlu0 %4508
      %4541 = vrot.lane.b32.xlu0 %v3801, 32
      %v4542 = vpop.permute.xlu0 %4541
      %4543 = vrot.lane.b32.xlu0 %v3803, 32
      %v4544 = vpop.permute.xlu0 %4543
      %4545 = vrot.lane.b32.xlu0 %v3806, 32
      %v4546 = vpop.permute.xlu0 %4545
      %4547 = vrot.lane.b32.xlu0 %v3808, 32
      %v4548 = vpop.permute.xlu0 %4547
      %4549 = vrot.lane.b32.xlu0 %v3811, 32
      %v4550 = vpop.permute.xlu0 %4549
      %4551 = vrot.lane.b32.xlu0 %v3813, 32
      %v4552 = vpop.permute.xlu0 %4551
      %4553 = vrot.lane.b32.xlu0 %v3816, 32
      %v4554 = vpop.permute.xlu0 %4553
      %4555 = vrot.lane.b32.xlu0 %v3818, 32
      %v4556 = vpop.permute.xlu0 %4555
      %4557 = vrot.lane.b32.xlu0 %v3821, 32
      %v4558 = vpop.permute.xlu0 %4557
      %4559 = vrot.lane.b32.xlu0 %v3823, 32
      %v4560 = vpop.permute.xlu0 %4559
      %4561 = vrot.lane.b32.xlu0 %v3826, 32
      %v4562 = vpop.permute.xlu0 %4561
      %4563 = vrot.lane.b32.xlu0 %v3828, 32
      %v4564 = vpop.permute.xlu0 %4563
      %4565 = vrot.lane.b32.xlu0 %v3831, 32
      %v4566 = vpop.permute.xlu0 %4565
      %4567 = vrot.lane.b32.xlu0 %v3833, 32
      %v4568 = vpop.permute.xlu0 %4567
      %4569 = vrot.lane.b32.xlu0 %v3836, 32
      %v4570 = vpop.permute.xlu0 %4569
      %4571 = vrot.lane.b32.xlu0 %v3838, 32
      %v4572 = vpop.permute.xlu0 %4571
      %4573 = vrot.lane.b32.xlu0 %v3841, 32
      %v4574 = vpop.permute.xlu0 %4573
      %4575 = vrot.lane.b32.xlu0 %v3843, 32
      %v4576 = vpop.permute.xlu0 %4575
      %4577 = vrot.lane.b32.xlu0 %v3846, 32
      %v4578 = vpop.permute.xlu0 %4577
      %4579 = vrot.lane.b32.xlu0 %v3848, 32
      %v4580 = vpop.permute.xlu0 %4579
      %4581 = vrot.lane.b32.xlu0 %v3851, 32
      %v4582 = vpop.permute.xlu0 %4581
      %4583 = vrot.lane.b32.xlu0 %v3853, 32
      %v4584 = vpop.permute.xlu0 %4583
      %4585 = vrot.lane.b32.xlu0 %v3856, 32
      %v4586 = vpop.permute.xlu0 %4585
      %4587 = vrot.lane.b32.xlu0 %v3858, 32
      %v4588 = vpop.permute.xlu0 %4587
      %4589 = vrot.lane.b32.xlu0 %v3861, 32
      %v4590 = vpop.permute.xlu0 %4589
      %4591 = vrot.lane.b32.xlu0 %v3863, 32
      %v4592 = vpop.permute.xlu0 %4591
      %4593 = vrot.lane.b32.xlu0 %v3866, 32
      %v4594 = vpop.permute.xlu0 %4593
      %4595 = vrot.lane.b32.xlu0 %v3868, 32
      %v4596 = vpop.permute.xlu0 %4595
      %4597 = vrot.lane.b32.xlu0 %v3878, 32
      %v4598 = vpop.permute.xlu0 %4597
      %4599 = vrot.lane.b32.xlu0 %v3880, 32
      %v4600 = vpop.permute.xlu0 %4599
      %4601 = vrot.lane.b32.xlu0 %v3793, 32
      %v4602 = vpop.permute.xlu0 %4601
      %vm4634 = vcmask 31744
      %v4635 = vsel %vm4634, 0.0, %v3882
      %v4636 = vsel %vm4634, %v3650, %v3884
      %v4637 = vsel %vm4634, %v3557, %v3886
      %v4638 = vsel %vm4634, %v3651, %v3888
      %v4639 = vsel %vm4634, %v3560, %v3890
      %v4640 = vsel %vm4634, %v3652, %v3892
      %v4641 = vsel %vm4634, %v3563, %v3894
      %v4642 = vsel %vm4634, %v3653, %v3896
      %v4643 = vsel %vm4634, %v3566, %v3898
      %v4644 = vsel %vm4634, %v3654, %v3900
      %v4645 = vsel %vm4634, %v3569, %v3902
      %v4646 = vsel %vm4634, %v3655, %v3904
      %v4647 = vsel %vm4634, %v3572, %v3906
      %v4648 = vsel %vm4634, %v3656, %v3908
      %v4649 = vsel %vm4634, %v3575, %v3910
      %v4650 = vsel %vm4634, %v3657, %v3912
      %v4651 = vsel %vm4634, %v3578, %v3914
      %v4652 = vsel %vm4634, %v3658, %v3916
      %v4653 = vsel %vm4634, %v3581, %v3918
      %v4654 = vsel %vm4634, %v3659, %v3920
      %v4655 = vsel %vm4634, %v3584, %v3922
      %v4656 = vsel %vm4634, %v3660, %v3924
      %v4657 = vsel %vm4634, %v3587, %v3926
      %v4658 = vsel %vm4634, %v3661, %v3928
      %v4659 = vsel %vm4634, %v3590, %v3930
      %v4660 = vsel %vm4634, %v3662, %v3932
      %v4661 = vsel %vm4634, %v3593, %v3934
      %v4662 = vsel %vm4634, %v3663, %v3936
      %v4663 = vsel %vm4634, %v3596, %v3938
      %v4664 = vsel %vm4634, %v3664, %v3940
      %v4665 = vsel %vm4634, %v3599, %v3942
      %vm4666 = vcmask 64512
      %v4667 = vsel %vm4666, %v4635, %v3975
      %v4668 = vsel %vm4666, %v4636, %v3977
      %v4669 = vsel %vm4666, %v4637, %v3979
      %v4670 = vsel %vm4666, %v4638, %v3981
      %v4671 = vsel %vm4666, %v4639, %v3983
      %v4672 = vsel %vm4666, %v4640, %v3985
      %v4673 = vsel %vm4666, %v4641, %v3987
      %v4674 = vsel %vm4666, %v4642, %v3989
      %v4675 = vsel %vm4666, %v4643, %v3991
      %v4676 = vsel %vm4666, %v4644, %v3993
      %v4677 = vsel %vm4666, %v4645, %v3995
      %v4678 = vsel %vm4666, %v4646, %v3997
      %v4679 = vsel %vm4666, %v4647, %v3999
      %v4680 = vsel %vm4666, %v4648, %v4001
      %v4681 = vsel %vm4666, %v4649, %v4003
      %v4682 = vsel %vm4666, %v4650, %v4005
      %v4683 = vsel %vm4666, %v4651, %v4007
      %v4684 = vsel %vm4666, %v4652, %v4009
      %v4685 = vsel %vm4666, %v4653, %v4011
      %v4686 = vsel %vm4666, %v4654, %v4013
      %v4687 = vsel %vm4666, %v4655, %v4015
      %v4688 = vsel %vm4666, %v4656, %v4017
      %v4689 = vsel %vm4666, %v4657, %v4019
      %v4690 = vsel %vm4666, %v4658, %v4021
      %v4691 = vsel %vm4666, %v4659, %v4023
      %v4692 = vsel %vm4666, %v4660, %v4025
      %v4693 = vsel %vm4666, %v4661, %v4027
      %v4694 = vsel %vm4666, %v4662, %v4029
      %v4695 = vsel %vm4666, %v4663, %v4031
      %v4696 = vsel %vm4666, %v4664, %v4033
      %v4697 = vsel %vm4666, %v4665, %v4035
      %vm4698 = vcmask 97280
      %v4699 = vsel %vm4698, %v4667, %v4068
      %v4700 = vsel %vm4698, %v4667, %v4070
      %v4701 = vsel %vm4698, %v4668, %v4072
      %v4702 = vsel %vm4698, %v4669, %v4074
      %v4703 = vsel %vm4698, %v4670, %v4076
      %v4704 = vsel %vm4698, %v4671, %v4078
      %v4705 = vsel %vm4698, %v4672, %v4080
      %v4706 = vsel %vm4698, %v4673, %v4082
      %v4707 = vsel %vm4698, %v4674, %v4084
      %v4708 = vsel %vm4698, %v4675, %v4086
      %v4709 = vsel %vm4698, %v4676, %v4088
      %v4710 = vsel %vm4698, %v4677, %v4090
      %v4711 = vsel %vm4698, %v4678, %v4092
      %v4712 = vsel %vm4698, %v4679, %v4094
      %v4713 = vsel %vm4698, %v4680, %v4096
      %v4714 = vsel %vm4698, %v4681, %v4098
      %v4715 = vsel %vm4698, %v4682, %v4100
      %v4716 = vsel %vm4698, %v4683, %v4102
      %v4717 = vsel %vm4698, %v4684, %v4104
      %v4718 = vsel %vm4698, %v4685, %v4106
      %v4719 = vsel %vm4698, %v4686, %v4108
      %v4720 = vsel %vm4698, %v4687, %v4110
      %v4721 = vsel %vm4698, %v4688, %v4112
      %v4722 = vsel %vm4698, %v4689, %v4114
      %v4723 = vsel %vm4698, %v4690, %v4116
      %v4724 = vsel %vm4698, %v4691, %v4118
      %v4725 = vsel %vm4698, %v4692, %v4120
      %v4726 = vsel %vm4698, %v4693, %v4122
      %v4727 = vsel %vm4698, %v4694, %v4124
      %v4728 = vsel %vm4698, %v4695, %v4126
      %v4729 = vsel %vm4698, %v4696, %v4128
      %v4730 = vsel %vm4698, %v4697, %v4130
      %vm4731 = vcmask 130048
      %v4732 = vsel %vm4731, %v4699, %v4164
      %v4733 = vsel %vm4731, %v4700, %v4166
      %v4734 = vsel %vm4731, %v4701, %v4168
      %v4735 = vsel %vm4731, %v4702, %v4170
      %v4736 = vsel %vm4731, %v4703, %v4172
      %v4737 = vsel %vm4731, %v4704, %v4174
      %v4738 = vsel %vm4731, %v4705, %v4176
      %v4739 = vsel %vm4731, %v4706, %v4178
      %v4740 = vsel %vm4731, %v4707, %v4180
      %v4741 = vsel %vm4731, %v4708, %v4182
      %v4742 = vsel %vm4731, %v4709, %v4184
      %v4743 = vsel %vm4731, %v4710, %v4186
      %v4744 = vsel %vm4731, %v4711, %v4188
      %v4745 = vsel %vm4731, %v4712, %v4190
      %v4746 = vsel %vm4731, %v4713, %v4192
      %v4747 = vsel %vm4731, %v4714, %v4194
      %v4748 = vsel %vm4731, %v4715, %v4196
      %v4749 = vsel %vm4731, %v4716, %v4198
      %v4750 = vsel %vm4731, %v4717, %v4200
      %v4751 = vsel %vm4731, %v4718, %v4202
      %v4752 = vsel %vm4731, %v4719, %v4204
      %v4753 = vsel %vm4731, %v4720, %v4206
      %v4754 = vsel %vm4731, %v4721, %v4208
      %v4755 = vsel %vm4731, %v4722, %v4210
      %v4756 = vsel %vm4731, %v4723, %v4212
      %v4757 = vsel %vm4731, %v4724, %v4214
      %v4758 = vsel %vm4731, %v4725, %v4216
      %v4759 = vsel %vm4731, %v4726, %v4218
      %v4760 = vsel %vm4731, %v4727, %v4220
      %v4761 = vsel %vm4731, %v4728, %v4222
      %v4762 = vsel %vm4731, %v4729, %v4224
      %v4763 = vsel %vm4731, %v4730, %v4226
      %vm4764 = vcmask 162816
      %v4765 = vsel %vm4764, %v4732, %v4260
      %v4766 = vsel %vm4764, %v4733, %v4262
      %v4767 = vsel %vm4764, %v4734, %v4264
      %v4768 = vsel %vm4764, %v4735, %v4266
      %v4769 = vsel %vm4764, %v4736, %v4268
      %v4770 = vsel %vm4764, %v4737, %v4270
      %v4771 = vsel %vm4764, %v4738, %v4272
      %v4772 = vsel %vm4764, %v4739, %v4274
      %v4773 = vsel %vm4764, %v4740, %v4276
      %v4774 = vsel %vm4764, %v4741, %v4278
      %v4775 = vsel %vm4764, %v4742, %v4280
      %v4776 = vsel %vm4764, %v4743, %v4282
      %v4777 = vsel %vm4764, %v4744, %v4284
      %v4778 = vsel %vm4764, %v4745, %v4286
      %v4779 = vsel %vm4764, %v4746, %v4288
      %v4780 = vsel %vm4764, %v4747, %v4290
      %v4781 = vsel %vm4764, %v4748, %v4292
      %v4782 = vsel %vm4764, %v4749, %v4294
      %v4783 = vsel %vm4764, %v4750, %v4296
      %v4784 = vsel %vm4764, %v4751, %v4298
      %v4785 = vsel %vm4764, %v4752, %v4300
      %v4786 = vsel %vm4764, %v4753, %v4302
      %v4787 = vsel %vm4764, %v4754, %v4304
      %v4788 = vsel %vm4764, %v4755, %v4306
      %v4789 = vsel %vm4764, %v4756, %v4308
      %v4790 = vsel %vm4764, %v4757, %v4310
      %v4791 = vsel %vm4764, %v4758, %v4312
      %v4792 = vsel %vm4764, %v4759, %v4314
      %v4793 = vsel %vm4764, %v4760, %v4316
      %v4794 = vsel %vm4764, %v4761, %v4318
      %v4795 = vsel %vm4764, %v4762, %v4320
      %v4796 = vsel %vm4764, %v4763, %v4322
      %vm4797 = vcmask 195584
      %v4798 = vsel %vm4797, %v4765, %v4356
      %v4799 = vsel %vm4797, %v4766, %v4358
      %v4800 = vsel %vm4797, %v4767, %v4360
      %v4801 = vsel %vm4797, %v4768, %v4362
      %v4802 = vsel %vm4797, %v4769, %v4364
      %v4803 = vsel %vm4797, %v4770, %v4366
      %v4804 = vsel %vm4797, %v4771, %v4368
      %v4805 = vsel %vm4797, %v4772, %v4370
      %v4806 = vsel %vm4797, %v4773, %v4372
      %v4807 = vsel %vm4797, %v4774, %v4374
      %v4808 = vsel %vm4797, %v4775, %v4376
      %v4809 = vsel %vm4797, %v4776, %v4378
      %v4810 = vsel %vm4797, %v4777, %v4380
      %v4811 = vsel %vm4797, %v4778, %v4382
      %v4812 = vsel %vm4797, %v4779, %v4384
      %v4813 = vsel %vm4797, %v4780, %v4386
      %v4814 = vsel %vm4797, %v4781, %v4388
      %v4815 = vsel %vm4797, %v4782, %v4390
      %v4816 = vsel %vm4797, %v4783, %v4392
      %v4817 = vsel %vm4797, %v4784, %v4394
      %v4818 = vsel %vm4797, %v4785, %v4396
      %v4819 = vsel %vm4797, %v4786, %v4398
      %v4820 = vsel %vm4797, %v4787, %v4400
      %v4821 = vsel %vm4797, %v4788, %v4402
      %v4822 = vsel %vm4797, %v4789, %v4404
      %v4823 = vsel %vm4797, %v4790, %v4406
      %v4824 = vsel %vm4797, %v4791, %v4408
      %v4825 = vsel %vm4797, %v4792, %v4410
      %v4826 = vsel %vm4797, %v4793, %v4412
      %v4827 = vsel %vm4797, %v4794, %v4414
      %v4828 = vsel %vm4797, %v4795, %v4416
      %v4829 = vsel %vm4797, %v4796, %v4416
      %vm4830 = vcmask 228352
      %v4831 = vsel %vm4830, %v4798, %v4449
      %v4832 = vsel %vm4830, %v4799, %v4451
      %v4833 = vsel %vm4830, %v4800, %v4453
      %v4834 = vsel %vm4830, %v4801, %v4455
      %v4835 = vsel %vm4830, %v4802, %v4457
      %v4836 = vsel %vm4830, %v4803, %v4459
      %v4837 = vsel %vm4830, %v4804, %v4461
      %v4838 = vsel %vm4830, %v4805, %v4463
      %v4839 = vsel %vm4830, %v4806, %v4465
      %v4840 = vsel %vm4830, %v4807, %v4467
      %v4841 = vsel %vm4830, %v4808, %v4469
      %v4842 = vsel %vm4830, %v4809, %v4471
      %v4843 = vsel %vm4830, %v4810, %v4473
      %v4844 = vsel %vm4830, %v4811, %v4475
      %v4845 = vsel %vm4830, %v4812, %v4477
      %v4846 = vsel %vm4830, %v4813, %v4479
      %v4847 = vsel %vm4830, %v4814, %v4481
      %v4848 = vsel %vm4830, %v4815, %v4483
      %v4849 = vsel %vm4830, %v4816, %v4485
      %v4850 = vsel %vm4830, %v4817, %v4487
      %v4851 = vsel %vm4830, %v4818, %v4489
      %v4852 = vsel %vm4830, %v4819, %v4491
      %v4853 = vsel %vm4830, %v4820, %v4493
      %v4854 = vsel %vm4830, %v4821, %v4495
      %v4855 = vsel %vm4830, %v4822, %v4497
      %v4856 = vsel %vm4830, %v4823, %v4499
      %v4857 = vsel %vm4830, %v4824, %v4501
      %v4858 = vsel %vm4830, %v4825, %v4503
      %v4859 = vsel %vm4830, %v4826, %v4505
      %v4860 = vsel %vm4830, %v4827, %v4507
      %v4861 = vsel %vm4830, %v4828, %v4509
      %v4862 = vsel %vm4830, %v4829, %v4509
      %vm4863 = vcmask 261120
      %v4864 = vsel %vm4863, %v4831, %v4542
      %v4865 = vsel %vm4863, %v4832, %v4544
      %v4866 = vsel %vm4863, %v4833, %v4546
      %v4867 = vsel %vm4863, %v4834, %v4548
      %v4868 = vsel %vm4863, %v4835, %v4550
      %v4869 = vsel %vm4863, %v4836, %v4552
      %v4870 = vsel %vm4863, %v4837, %v4554
      %v4871 = vsel %vm4863, %v4838, %v4556
      %v4872 = vsel %vm4863, %v4839, %v4558
      %v4873 = vsel %vm4863, %v4840, %v4560
      %v4874 = vsel %vm4863, %v4841, %v4562
      %v4875 = vsel %vm4863, %v4842, %v4564
      %v4876 = vsel %vm4863, %v4843, %v4566
      %v4877 = vsel %vm4863, %v4844, %v4568
      %v4878 = vsel %vm4863, %v4845, %v4570
      %v4879 = vsel %vm4863, %v4846, %v4572
      %v4880 = vsel %vm4863, %v4847, %v4574
      %v4881 = vsel %vm4863, %v4848, %v4576
      %v4882 = vsel %vm4863, %v4849, %v4578
      %v4883 = vsel %vm4863, %v4850, %v4580
      %v4884 = vsel %vm4863, %v4851, %v4582
      %v4885 = vsel %vm4863, %v4852, %v4584
      %v4886 = vsel %vm4863, %v4853, %v4586
      %v4887 = vsel %vm4863, %v4854, %v4588
      %v4888 = vsel %vm4863, %v4855, %v4590
      %v4889 = vsel %vm4863, %v4856, %v4592
      %v4890 = vsel %vm4863, %v4857, %v4594
      %v4891 = vsel %vm4863, %v4858, %v4596
      %v4892 = vsel %vm4863, %v4859, %v4598
      %v4893 = vsel %vm4863, %v4860, %v4600
      %v4894 = vsel %vm4863, %v4861, %v4602
      %v4895 = vsel %vm4863, %v4862, %v4602
      %v4896 = vld [vmem:[%s2] sm:$0xff]
      %v4897 = vld [vmem:[%s2 + $0x8] sm:$0xff]
      %v4898 = vld [vmem:[%s2 + $0x10] sm:$0xff]
      %v4899 = vld [vmem:[%s2 + $0x18] sm:$0xff]
      %v4900 = vld [vmem:[%s2 + $0x20] sm:$0xf]
      %v4901 = vld [vmem:[%s3] sm:$0x1]
      %v4903 = vlaneseq
      %v4904 = vshrl.u32 %v4903, 7
      %v4905 = vsub.s32 0, %v4904
      %v4906 = vrot.slane %v4901, %v4905
      %vm4908 = vcmask 293888
      %v4910 = vsel %vm4908, %v4864, 0
      %v4913 = vsel %vm4908, %v4865, 0
      %v4916 = vsel %vm4908, %v4866, 0
      %v4919 = vsel %vm4908, %v4867, 0
      %v4922 = vsel %vm4908, %v4868, 0
      %v4925 = vsel %vm4908, %v4869, 0
      %v4928 = vsel %vm4908, %v4870, 0
      %v4931 = vsel %vm4908, %v4871, 0
      %v4934 = vsel %vm4908, %v4872, 0
      %v4937 = vsel %vm4908, %v4873, 0
      %v4940 = vsel %vm4908, %v4874, 0
      %v4943 = vsel %vm4908, %v4875, 0
      %v4946 = vsel %vm4908, %v4876, 0
      %v4949 = vsel %vm4908, %v4877, 0
      %v4952 = vsel %vm4908, %v4878, 0
      %v4955 = vsel %vm4908, %v4879, 0
      %v4958 = vsel %vm4908, %v4880, 0
      %v4961 = vsel %vm4908, %v4881, 0
      %v4964 = vsel %vm4908, %v4882, 0
      %v4967 = vsel %vm4908, %v4883, 0
      %v4970 = vsel %vm4908, %v4884, 0
      %v4973 = vsel %vm4908, %v4885, 0
      %v4976 = vsel %vm4908, %v4886, 0
      %v4979 = vsel %vm4908, %v4887, 0
      %v4982 = vsel %vm4908, %v4888, 0
      %v4985 = vsel %vm4908, %v4889, 0
      %v4988 = vsel %vm4908, %v4890, 0
      %v4991 = vsel %vm4908, %v4891, 0
      %v4994 = vsel %vm4908, %v4892, 0
      %v4997 = vsel %vm4908, %v4893, 0
      %v5000 = vsel %vm4908, %v4894, 0
      %v5003 = vsel %vm4908, %v4895, 0
      %vm5005 = vcmask 1043456
      %v5007 = vsel %vm5005, %v4900, 0
      %5009 = vmatprep.subr.mxu0 0.0
      %5010 = vmatpush1.msra.mxu0 0.0
      %5011 = vmatprep.subr.mxu0 0.0
      %5012 = vmatpush1.msra.mxu0 0.0
      %5013 = vmatprep.subr.mxu0 0.0
      %5014 = vmatpush1.msra.mxu0 0.0
      %5015 = vmatprep.subr.mxu0 0.0
      %5016 = vmatpush1.msra.mxu0 0.0
      %5017 = vmatprep.subr.mxu0 0.0
      %5018 = vmatpush1.msra.mxu0 0.0
      %5019 = vmatprep.subr.mxu0 0.0
      %5020 = vmatpush1.msra.mxu0 0.0
      %5021 = vmatprep.subr.mxu0 0.0
      %5022 = vmatpush1.msra.mxu0 0.0
      %5023 = vmatprep.subr.mxu0 0.0
      %5024 = vmatpush1.msra.mxu0 0.0
      %5025 = vmatprep.subr.mxu0 0.0
      %5026 = vmatpush1.msra.mxu0 0.0
      %5027 = vmatprep.subr.mxu0 0.0
      %5028 = vmatpush1.msra.mxu0 0.0
      %5029 = vmatprep.subr.mxu0 0.0
      %5030 = vmatpush1.msra.mxu0 0.0
      %5031 = vmatprep.subr.mxu0 0.0
      %5032 = vmatpush1.msra.mxu0 %v5007
      %5033 = vmatprep.subr.mxu0 0.0
      %5034 = vmatpush1.msra.mxu0 %v4899
      %5035 = vmatprep.subr.mxu0 0.0
      %5036 = vmatpush1.msra.mxu0 %v4898
      %5037 = vmatprep.subr.mxu0 0.0
      %5038 = vmatpush1.msra.mxu0 %v4897
      %5039 = vmatprep.subr.mxu0 0.0
      %5040 = vmatpush1.msra.mxu0 %v4896
      %5041 = vmatprep.subr.mxu0 0.0
      %5042 = vmatpush2.msra.mxu0 0.0
      %5043 = vmatprep.subr.mxu0 0.0
      %5044 = vmatpush2.msra.mxu0 0.0
      %5045 = vmatprep.subr.mxu0 0.0
      %5046 = vmatpush2.msra.mxu0 0.0
      %5047 = vmatprep.subr.mxu0 0.0
      %5048 = vmatpush2.msra.mxu0 0.0
      %5049 = vmatprep.subr.mxu0 0.0
      %5050 = vmatpush2.msra.mxu0 0.0
      %5051 = vmatprep.subr.mxu0 0.0
      %5052 = vmatpush2.msra.mxu0 0.0
      %5053 = vmatprep.subr.mxu0 0.0
      %5054 = vmatpush2.msra.mxu0 0.0
      %5055 = vmatprep.subr.mxu0 0.0
      %5056 = vmatpush2.msra.mxu0 0.0
      %5057 = vmatprep.subr.mxu0 0.0
      %5058 = vmatpush2.msra.mxu0 0.0
      %5059 = vmatprep.subr.mxu0 0.0
      %5060 = vmatpush2.msra.mxu0 0.0
      %5061 = vmatprep.subr.mxu0 0.0
      %5062 = vmatpush2.msra.mxu0 0.0
      %5063 = vmatprep.subr.mxu0 0.0
      %5064 = vmatpush2.msra.mxu0 0.0
      %5065 = vmatprep.subr.mxu0 0.0
      %5066 = vmatpush2.msra.mxu0 0.0
      %5067 = vmatprep.subr.mxu0 0.0
      %5068 = vmatpush2.msra.mxu0 0.0
      %5069 = vmatprep.subr.mxu0 0.0
      %5070 = vmatpush2.msra.mxu0 0.0
      %5071 = vmatprep.subr.mxu0 0.0
      %5072 = vmatpush2.msra.mxu0 0.0
      %5073 = vmatprep.mubr.f32.mxu0 0.0
      %5074 = vmatmul.mubr.f32.gmra.mxu0 %v4910
      %v5075 = vpop.f32.mrf.mxu0
      %v5076 = vadd.f32 %v4906, %v5075
      %v5077 = vpop.f32.mrf.mxu0
      %5078 = vmatprep.mubr.f32.mxu0 0.0
      %5079 = vmatmul.mubr.f32.gmra.mxu0 %v4913
      %v5080 = vpop.f32.mrf.mxu0
      %v5081 = vadd.f32 %v4906, %v5080
      %v5082 = vpop.f32.mrf.mxu0
      %5083 = vmatprep.mubr.f32.mxu0 0.0
      %5084 = vmatmul.mubr.f32.gmra.mxu0 %v4916
      %v5085 = vpop.f32.mrf.mxu0
      %v5086 = vadd.f32 %v4906, %v5085
      %v5087 = vpop.f32.mrf.mxu0
      %5088 = vmatprep.mubr.f32.mxu0 0.0
      %5089 = vmatmul.mubr.f32.gmra.mxu0 %v4919
      %v5090 = vpop.f32.mrf.mxu0
      %v5091 = vadd.f32 %v4906, %v5090
      %v5092 = vpop.f32.mrf.mxu0
      %5093 = vmatprep.mubr.f32.mxu0 0.0
      %5094 = vmatmul.mubr.f32.gmra.mxu0 %v4922
      %v5095 = vpop.f32.mrf.mxu0
      %v5096 = vadd.f32 %v4906, %v5095
      %v5097 = vpop.f32.mrf.mxu0
      %5098 = vmatprep.mubr.f32.mxu0 0.0
      %5099 = vmatmul.mubr.f32.gmra.mxu0 %v4925
      %v5100 = vpop.f32.mrf.mxu0
      %v5101 = vadd.f32 %v4906, %v5100
      %v5102 = vpop.f32.mrf.mxu0
      %5103 = vmatprep.mubr.f32.mxu0 0.0
      %5104 = vmatmul.mubr.f32.gmra.mxu0 %v4928
      %v5105 = vpop.f32.mrf.mxu0
      %v5106 = vadd.f32 %v4906, %v5105
      %v5107 = vpop.f32.mrf.mxu0
      %5108 = vmatprep.mubr.f32.mxu0 0.0
      %5109 = vmatmul.mubr.f32.gmra.mxu0 %v4931
      %v5110 = vpop.f32.mrf.mxu0
      %v5111 = vadd.f32 %v4906, %v5110
      %v5112 = vpop.f32.mrf.mxu0
      %5113 = vmatprep.mubr.f32.mxu0 0.0
      %5114 = vmatmul.mubr.f32.gmra.mxu0 %v4934
      %v5115 = vpop.f32.mrf.mxu0
      %v5116 = vadd.f32 %v4906, %v5115
      %v5117 = vpop.f32.mrf.mxu0
      %5118 = vmatprep.mubr.f32.mxu0 0.0
      %5119 = vmatmul.mubr.f32.gmra.mxu0 %v4937
      %v5120 = vpop.f32.mrf.mxu0
      %v5121 = vadd.f32 %v4906, %v5120
      %v5122 = vpop.f32.mrf.mxu0
      %5123 = vmatprep.mubr.f32.mxu0 0.0
      %5124 = vmatmul.mubr.f32.gmra.mxu0 %v4940
      %v5125 = vpop.f32.mrf.mxu0
      %v5126 = vadd.f32 %v4906, %v5125
      %v5127 = vpop.f32.mrf.mxu0
      %5128 = vmatprep.mubr.f32.mxu0 0.0
      %5129 = vmatmul.mubr.f32.gmra.mxu0 %v4943
      %v5130 = vpop.f32.mrf.mxu0
      %v5131 = vadd.f32 %v4906, %v5130
      %v5132 = vpop.f32.mrf.mxu0
      %5133 = vmatprep.mubr.f32.mxu0 0.0
      %5134 = vmatmul.mubr.f32.gmra.mxu0 %v4946
      %v5135 = vpop.f32.mrf.mxu0
      %v5136 = vadd.f32 %v4906, %v5135
      %v5137 = vpop.f32.mrf.mxu0
      %5138 = vmatprep.mubr.f32.mxu0 0.0
      %5139 = vmatmul.mubr.f32.gmra.mxu0 %v4949
      %v5140 = vpop.f32.mrf.mxu0
      %v5141 = vadd.f32 %v4906, %v5140
      %v5142 = vpop.f32.mrf.mxu0
      %5143 = vmatprep.mubr.f32.mxu0 0.0
      %5144 = vmatmul.mubr.f32.gmra.mxu0 %v4952
      %v5145 = vpop.f32.mrf.mxu0
      %v5146 = vadd.f32 %v4906, %v5145
      %v5147 = vpop.f32.mrf.mxu0
      %5148 = vmatprep.mubr.f32.mxu0 0.0
      %5149 = vmatmul.mubr.f32.gmra.mxu0 %v4955
      %v5150 = vpop.f32.mrf.mxu0
      %v5151 = vadd.f32 %v4906, %v5150
      %v5152 = vpop.f32.mrf.mxu0
      %5153 = vmatprep.mubr.f32.mxu0 0.0
      %5154 = vmatmul.mubr.f32.gmra.mxu0 %v4958
      %v5155 = vpop.f32.mrf.mxu0
      %v5156 = vadd.f32 %v4906, %v5155
      %v5157 = vpop.f32.mrf.mxu0
      %5158 = vmatprep.mubr.f32.mxu0 0.0
      %5159 = vmatmul.mubr.f32.gmra.mxu0 %v4961
      %v5160 = vpop.f32.mrf.mxu0
      %v5161 = vadd.f32 %v4906, %v5160
      %v5162 = vpop.f32.mrf.mxu0
      %5163 = vmatprep.mubr.f32.mxu0 0.0
      %5164 = vmatmul.mubr.f32.gmra.mxu0 %v4964
      %v5165 = vpop.f32.mrf.mxu0
      %v5166 = vadd.f32 %v4906, %v5165
      %v5167 = vpop.f32.mrf.mxu0
      %5168 = vmatprep.mubr.f32.mxu0 0.0
      %5169 = vmatmul.mubr.f32.gmra.mxu0 %v4967
      %v5170 = vpop.f32.mrf.mxu0
      %v5171 = vadd.f32 %v4906, %v5170
      %v5172 = vpop.f32.mrf.mxu0
      %5173 = vmatprep.mubr.f32.mxu0 0.0
      %5174 = vmatmul.mubr.f32.gmra.mxu0 %v4970
      %v5175 = vpop.f32.mrf.mxu0
      %v5176 = vadd.f32 %v4906, %v5175
      %v5177 = vpop.f32.mrf.mxu0
      %5178 = vmatprep.mubr.f32.mxu0 0.0
      %5179 = vmatmul.mubr.f32.gmra.mxu0 %v4973
      %v5180 = vpop.f32.mrf.mxu0
      %v5181 = vadd.f32 %v4906, %v5180
      %v5182 = vpop.f32.mrf.mxu0
      %5183 = vmatprep.mubr.f32.mxu0 0.0
      %5184 = vmatmul.mubr.f32.gmra.mxu0 %v4976
      %v5185 = vpop.f32.mrf.mxu0
      %v5186 = vadd.f32 %v4906, %v5185
      %v5187 = vpop.f32.mrf.mxu0
      %5188 = vmatprep.mubr.f32.mxu0 0.0
      %5189 = vmatmul.mubr.f32.gmra.mxu0 %v4979
      %v5190 = vpop.f32.mrf.mxu0
      %v5191 = vadd.f32 %v4906, %v5190
      %v5192 = vpop.f32.mrf.mxu0
      %5193 = vmatprep.mubr.f32.mxu0 0.0
      %5194 = vmatmul.mubr.f32.gmra.mxu0 %v4982
      %v5195 = vpop.f32.mrf.mxu0
      %v5196 = vadd.f32 %v4906, %v5195
      %v5197 = vpop.f32.mrf.mxu0
      %5198 = vmatprep.mubr.f32.mxu0 0.0
      %5199 = vmatmul.mubr.f32.gmra.mxu0 %v4985
      %v5200 = vpop.f32.mrf.mxu0
      %v5201 = vadd.f32 %v4906, %v5200
      %v5202 = vpop.f32.mrf.mxu0
      %5203 = vmatprep.mubr.f32.mxu0 0.0
      %5204 = vmatmul.mubr.f32.gmra.mxu0 %v4988
      %v5205 = vpop.f32.mrf.mxu0
      %v5206 = vadd.f32 %v4906, %v5205
      %v5207 = vpop.f32.mrf.mxu0
      %5208 = vmatprep.mubr.f32.mxu0 0.0
      %5209 = vmatmul.mubr.f32.gmra.mxu0 %v4991
      %v5210 = vpop.f32.mrf.mxu0
      %v5211 = vadd.f32 %v4906, %v5210
      %v5212 = vpop.f32.mrf.mxu0
      %5213 = vmatprep.mubr.f32.mxu0 0.0
      %5214 = vmatmul.mubr.f32.gmra.mxu0 %v4994
      %v5215 = vpop.f32.mrf.mxu0
      %v5216 = vadd.f32 %v4906, %v5215
      %v5217 = vpop.f32.mrf.mxu0
      %5218 = vmatprep.mubr.f32.mxu0 0.0
      %5219 = vmatmul.mubr.f32.gmra.mxu0 %v4997
      %v5220 = vpop.f32.mrf.mxu0
      %v5221 = vadd.f32 %v4906, %v5220
      %v5222 = vpop.f32.mrf.mxu0
      %5223 = vmatprep.mubr.f32.mxu0 0.0
      %5224 = vmatmul.mubr.f32.gmra.mxu0 %v5000
      %v5225 = vpop.f32.mrf.mxu0
      %v5226 = vadd.f32 %v4906, %v5225
      %v5227 = vpop.f32.mrf.mxu0
      %5228 = vmatprep.mubr.f32.mxu0 0.0
      %5229 = vmatmul.mubr.f32.gmra.mxu0 %v5003
      %v5230 = vpop.f32.mrf.mxu0
      %v5231 = vadd.f32 %v4906, %v5230
      %v5232 = vpop.f32.mrf.mxu0
      %5233 = vdwg.mxu0
      %v5234 = vmax.f32 %v5076, 0.0
      %v5235 = vmax.f32 %v5081, 0.0
      %v5236 = vmax.f32 %v5086, 0.0
      %v5237 = vmax.f32 %v5091, 0.0
      %v5238 = vmax.f32 %v5096, 0.0
      %v5239 = vmax.f32 %v5101, 0.0
      %v5240 = vmax.f32 %v5106, 0.0
      %v5241 = vmax.f32 %v5111, 0.0
      %v5242 = vmax.f32 %v5116, 0.0
      %v5243 = vmax.f32 %v5121, 0.0
      %v5244 = vmax.f32 %v5126, 0.0
      %v5245 = vmax.f32 %v5131, 0.0
      %v5246 = vmax.f32 %v5136, 0.0
      %v5247 = vmax.f32 %v5141, 0.0
      %v5248 = vmax.f32 %v5146, 0.0
      %v5249 = vmax.f32 %v5151, 0.0
      %v5250 = vmax.f32 %v5156, 0.0
      %v5251 = vmax.f32 %v5161, 0.0
      %v5252 = vmax.f32 %v5166, 0.0
      %v5253 = vmax.f32 %v5171, 0.0
      %v5254 = vmax.f32 %v5176, 0.0
      %v5255 = vmax.f32 %v5181, 0.0
      %v5256 = vmax.f32 %v5186, 0.0
      %v5257 = vmax.f32 %v5191, 0.0
      %v5258 = vmax.f32 %v5196, 0.0
      %v5259 = vmax.f32 %v5201, 0.0
      %v5260 = vmax.f32 %v5206, 0.0
      %v5261 = vmax.f32 %v5211, 0.0
      %v5262 = vmax.f32 %v5216, 0.0
      %v5263 = vmax.f32 %v5221, 0.0
      %v5264 = vmax.f32 %v5226, 0.0
      %v5265 = vmax.f32 %v5231, 0.0
      %v5298 = vrot.slane %v5234, 7
      %v5299 = vrot.slane %v5235, 7
      %v5300 = vsel %vm1522, %v5298, %v5299
      %v5301 = vrot.slane %v5236, 7
      %v5302 = vrot.slane %v5237, 7
      %v5303 = vsel %vm1522, %v5301, %v5302
      %v5304 = vrot.slane %v5238, 7
      %v5305 = vrot.slane %v5239, 7
      %v5306 = vsel %vm1522, %v5304, %v5305
      %v5307 = vrot.slane %v5240, 7
      %v5308 = vrot.slane %v5241, 7
      %v5309 = vsel %vm1522, %v5307, %v5308
      %v5310 = vrot.slane %v5242, 7
      %v5311 = vrot.slane %v5243, 7
      %v5312 = vsel %vm1522, %v5310, %v5311
      %v5313 = vrot.slane %v5244, 7
      %v5314 = vrot.slane %v5245, 7
      %v5315 = vsel %vm1522, %v5313, %v5314
      %v5316 = vrot.slane %v5246, 7
      %v5317 = vrot.slane %v5247, 7
      %v5318 = vsel %vm1522, %v5316, %v5317
      %v5319 = vrot.slane %v5248, 7
      %v5320 = vrot.slane %v5249, 7
      %v5321 = vsel %vm1522, %v5319, %v5320
      %v5322 = vrot.slane %v5250, 7
      %v5323 = vrot.slane %v5251, 7
      %v5324 = vsel %vm1522, %v5322, %v5323
      %v5325 = vrot.slane %v5252, 7
      %v5326 = vrot.slane %v5253, 7
      %v5327 = vsel %vm1522, %v5325, %v5326
      %v5328 = vrot.slane %v5254, 7
      %v5329 = vrot.slane %v5255, 7
      %v5330 = vsel %vm1522, %v5328, %v5329
      %v5331 = vrot.slane %v5256, 7
      %v5332 = vrot.slane %v5257, 7
      %v5333 = vsel %vm1522, %v5331, %v5332
      %v5334 = vrot.slane %v5258, 7
      %v5335 = vrot.slane %v5259, 7
      %v5336 = vsel %vm1522, %v5334, %v5335
      %v5337 = vrot.slane %v5260, 7
      %v5338 = vrot.slane %v5261, 7
      %v5339 = vsel %vm1522, %v5337, %v5338
      %v5340 = vrot.slane %v5262, 7
      %v5341 = vrot.slane %v5263, 7
      %v5342 = vsel %vm1522, %v5340, %v5341
      %v5343 = vrot.slane %v5264, 7
      %v5344 = vrot.slane %v5265, 7
      %v5345 = vsel %vm1522, %v5343, %v5344
      %v5393 = vsel %vm1522, 0.0, %v5298
      %v5394 = vsel %vm1522, 0.0, %v5301
      %v5395 = vsel %vm1522, 0.0, %v5304
      %v5396 = vsel %vm1522, 0.0, %v5307
      %v5397 = vsel %vm1522, 0.0, %v5310
      %v5398 = vsel %vm1522, 0.0, %v5313
      %v5399 = vsel %vm1522, 0.0, %v5316
      %v5400 = vsel %vm1522, 0.0, %v5319
      %v5401 = vsel %vm1522, 0.0, %v5322
      %v5402 = vsel %vm1522, 0.0, %v5325
      %v5403 = vsel %vm1522, 0.0, %v5328
      %v5404 = vsel %vm1522, 0.0, %v5331
      %v5405 = vsel %vm1522, 0.0, %v5334
      %v5406 = vsel %vm1522, 0.0, %v5337
      %v5407 = vsel %vm1522, 0.0, %v5340
      %v5408 = vsel %vm1522, 0.0, %v5343
      %v5409 = vsel %vm1522, %v5299, 0.0
      %v5410 = vsel %vm1522, %v5302, 0.0
      %v5411 = vsel %vm1522, %v5305, 0.0
      %v5412 = vsel %vm1522, %v5308, 0.0
      %v5413 = vsel %vm1522, %v5311, 0.0
      %v5414 = vsel %vm1522, %v5314, 0.0
      %v5415 = vsel %vm1522, %v5317, 0.0
      %v5416 = vsel %vm1522, %v5320, 0.0
      %v5417 = vsel %vm1522, %v5323, 0.0
      %v5418 = vsel %vm1522, %v5326, 0.0
      %v5419 = vsel %vm1522, %v5329, 0.0
      %v5420 = vsel %vm1522, %v5332, 0.0
      %v5421 = vsel %vm1522, %v5335, 0.0
      %v5422 = vsel %vm1522, %v5338, 0.0
      %v5423 = vsel %vm1522, %v5341, 0.0
      %v5424 = vsel %vm1522, %v5344, 0.0
      %v5455 = vrot.slane %v5393, 1
      %v5456 = vrot.slane %v5300, 1
      %v5457 = vsel %vm3713, %v5455, %v5456
      %v5458 = vrot.slane %v5409, 1
      %v5459 = vsel %vm3713, %v5456, %v5458
      %v5460 = vrot.slane %v5394, 1
      %v5461 = vrot.slane %v5303, 1
      %v5462 = vsel %vm3713, %v5460, %v5461
      %v5463 = vrot.slane %v5410, 1
      %v5464 = vsel %vm3713, %v5461, %v5463
      %v5465 = vrot.slane %v5395, 1
      %v5466 = vrot.slane %v5306, 1
      %v5467 = vsel %vm3713, %v5465, %v5466
      %v5468 = vrot.slane %v5411, 1
      %v5469 = vsel %vm3713, %v5466, %v5468
      %v5470 = vrot.slane %v5396, 1
      %v5471 = vrot.slane %v5309, 1
      %v5472 = vsel %vm3713, %v5470, %v5471
      %v5473 = vrot.slane %v5412, 1
      %v5474 = vsel %vm3713, %v5471, %v5473
      %v5475 = vrot.slane %v5397, 1
      %v5476 = vrot.slane %v5312, 1
      %v5477 = vsel %vm3713, %v5475, %v5476
      %v5478 = vrot.slane %v5413, 1
      %v5479 = vsel %vm3713, %v5476, %v5478
      %v5480 = vrot.slane %v5398, 1
      %v5481 = vrot.slane %v5315, 1
      %v5482 = vsel %vm3713, %v5480, %v5481
      %v5483 = vrot.slane %v5414, 1
      %v5484 = vsel %vm3713, %v5481, %v5483
      %v5485 = vrot.slane %v5399, 1
      %v5486 = vrot.slane %v5318, 1
      %v5487 = vsel %vm3713, %v5485, %v5486
      %v5488 = vrot.slane %v5415, 1
      %v5489 = vsel %vm3713, %v5486, %v5488
      %v5490 = vrot.slane %v5400, 1
      %v5491 = vrot.slane %v5321, 1
      %v5492 = vsel %vm3713, %v5490, %v5491
      %v5493 = vrot.slane %v5416, 1
      %v5494 = vsel %vm3713, %v5491, %v5493
      %v5495 = vrot.slane %v5401, 1
      %v5496 = vrot.slane %v5324, 1
      %v5497 = vsel %vm3713, %v5495, %v5496
      %v5498 = vrot.slane %v5417, 1
      %v5499 = vsel %vm3713, %v5496, %v5498
      %v5500 = vrot.slane %v5402, 1
      %v5501 = vrot.slane %v5327, 1
      %v5502 = vsel %vm3713, %v5500, %v5501
      %v5503 = vrot.slane %v5418, 1
      %v5504 = vsel %vm3713, %v5501, %v5503
      %v5505 = vrot.slane %v5403, 1
      %v5506 = vrot.slane %v5330, 1
      %v5507 = vsel %vm3713, %v5505, %v5506
      %v5508 = vrot.slane %v5419, 1
      %v5509 = vsel %vm3713, %v5506, %v5508
      %v5510 = vrot.slane %v5404, 1
      %v5511 = vrot.slane %v5333, 1
      %v5512 = vsel %vm3713, %v5510, %v5511
      %v5513 = vrot.slane %v5420, 1
      %v5514 = vsel %vm3713, %v5511, %v5513
      %v5515 = vrot.slane %v5405, 1
      %v5516 = vrot.slane %v5336, 1
      %v5517 = vsel %vm3713, %v5515, %v5516
      %v5518 = vrot.slane %v5421, 1
      %v5519 = vsel %vm3713, %v5516, %v5518
      %v5520 = vrot.slane %v5406, 1
      %v5521 = vrot.slane %v5339, 1
      %v5522 = vsel %vm3713, %v5520, %v5521
      %v5523 = vrot.slane %v5422, 1
      %v5524 = vsel %vm3713, %v5521, %v5523
      %v5525 = vrot.slane %v5407, 1
      %v5526 = vrot.slane %v5342, 1
      %v5527 = vsel %vm3713, %v5525, %v5526
      %v5528 = vrot.slane %v5423, 1
      %v5529 = vsel %vm3713, %v5526, %v5528
      %v5530 = vrot.slane %v5393, 2
      %v5531 = vrot.slane %v5300, 2
      %v5532 = vsel %vm3791, %v5530, %v5531
      %v5533 = vrot.slane %v5409, 2
      %v5534 = vsel %vm3791, %v5531, %v5533
      %v5535 = vrot.slane %v5394, 2
      %v5536 = vrot.slane %v5303, 2
      %v5537 = vsel %vm3791, %v5535, %v5536
      %v5538 = vrot.slane %v5410, 2
      %v5539 = vsel %vm3791, %v5536, %v5538
      %v5540 = vrot.slane %v5395, 2
      %v5541 = vrot.slane %v5306, 2
      %v5542 = vsel %vm3791, %v5540, %v5541
      %v5543 = vrot.slane %v5411, 2
      %v5544 = vsel %vm3791, %v5541, %v5543
      %v5545 = vrot.slane %v5396, 2
      %v5546 = vrot.slane %v5309, 2
      %v5547 = vsel %vm3791, %v5545, %v5546
      %v5548 = vrot.slane %v5412, 2
      %v5549 = vsel %vm3791, %v5546, %v5548
      %v5550 = vrot.slane %v5397, 2
      %v5551 = vrot.slane %v5312, 2
      %v5552 = vsel %vm3791, %v5550, %v5551
      %v5553 = vrot.slane %v5413, 2
      %v5554 = vsel %vm3791, %v5551, %v5553
      %v5555 = vrot.slane %v5398, 2
      %v5556 = vrot.slane %v5315, 2
      %v5557 = vsel %vm3791, %v5555, %v5556
      %v5558 = vrot.slane %v5414, 2
      %v5559 = vsel %vm3791, %v5556, %v5558
      %v5560 = vrot.slane %v5399, 2
      %v5561 = vrot.slane %v5318, 2
      %v5562 = vsel %vm3791, %v5560, %v5561
      %v5563 = vrot.slane %v5415, 2
      %v5564 = vsel %vm3791, %v5561, %v5563
      %v5565 = vrot.slane %v5400, 2
      %v5566 = vrot.slane %v5321, 2
      %v5567 = vsel %vm3791, %v5565, %v5566
      %v5568 = vrot.slane %v5416, 2
      %v5569 = vsel %vm3791, %v5566, %v5568
      %v5570 = vrot.slane %v5401, 2
      %v5571 = vrot.slane %v5324, 2
      %v5572 = vsel %vm3791, %v5570, %v5571
      %v5573 = vrot.slane %v5417, 2
      %v5574 = vsel %vm3791, %v5571, %v5573
      %v5575 = vrot.slane %v5402, 2
      %v5576 = vrot.slane %v5327, 2
      %v5577 = vsel %vm3791, %v5575, %v5576
      %v5578 = vrot.slane %v5418, 2
      %v5579 = vsel %vm3791, %v5576, %v5578
      %v5580 = vrot.slane %v5403, 2
      %v5581 = vrot.slane %v5330, 2
      %v5582 = vsel %vm3791, %v5580, %v5581
      %v5583 = vrot.slane %v5419, 2
      %v5584 = vsel %vm3791, %v5581, %v5583
      %v5585 = vrot.slane %v5404, 2
      %v5586 = vrot.slane %v5333, 2
      %v5587 = vsel %vm3791, %v5585, %v5586
      %v5588 = vrot.slane %v5420, 2
      %v5589 = vsel %vm3791, %v5586, %v5588
      %v5590 = vrot.slane %v5405, 2
      %v5591 = vrot.slane %v5336, 2
      %v5592 = vsel %vm3791, %v5590, %v5591
      %v5593 = vrot.slane %v5421, 2
      %v5594 = vsel %vm3791, %v5591, %v5593
      %v5595 = vrot.slane %v5406, 2
      %v5596 = vrot.slane %v5339, 2
      %v5597 = vsel %vm3791, %v5595, %v5596
      %v5598 = vrot.slane %v5422, 2
      %v5599 = vsel %vm3791, %v5596, %v5598
      %v5600 = vrot.slane %v5407, 2
      %v5601 = vrot.slane %v5342, 2
      %v5602 = vsel %vm3791, %v5600, %v5601
      %v5603 = vrot.slane %v5423, 2
      %v5604 = vsel %vm3791, %v5601, %v5603
      %v5607 = vrot.slane %v5408, 1
      %v5608 = vrot.slane %v5345, 1
      %v5609 = vsel %vm3713, %v5607, %v5608
      %v5610 = vrot.slane %v5424, 1
      %v5611 = vsel %vm3713, %v5608, %v5610
      %v5612 = vrot.slane %v5408, 2
      %v5613 = vrot.slane %v5345, 2
      %v5614 = vsel %vm3791, %v5612, %v5613
      %v5615 = vrot.slane %v5424, 2
      %v5616 = vsel %vm3791, %v5613, %v5615
      %5617 = vrot.lane.b32.xlu0 %v5457, 4
      %v5618 = vpop.permute.xlu0 %5617
      %5619 = vrot.lane.b32.xlu0 %v5459, 4
      %v5620 = vpop.permute.xlu0 %5619
      %5621 = vrot.lane.b32.xlu0 %v5462, 4
      %v5622 = vpop.permute.xlu0 %5621
      %5623 = vrot.lane.b32.xlu0 %v5464, 4
      %v5624 = vpop.permute.xlu0 %5623
      %5625 = vrot.lane.b32.xlu0 %v5467, 4
      %v5626 = vpop.permute.xlu0 %5625
      %5627 = vrot.lane.b32.xlu0 %v5469, 4
      %v5628 = vpop.permute.xlu0 %5627
      %5629 = vrot.lane.b32.xlu0 %v5472, 4
      %v5630 = vpop.permute.xlu0 %5629
      %5631 = vrot.lane.b32.xlu0 %v5474, 4
      %v5632 = vpop.permute.xlu0 %5631
      %5633 = vrot.lane.b32.xlu0 %v5477, 4
      %v5634 = vpop.permute.xlu0 %5633
      %5635 = vrot.lane.b32.xlu0 %v5479, 4
      %v5636 = vpop.permute.xlu0 %5635
      %5637 = vrot.lane.b32.xlu0 %v5482, 4
      %v5638 = vpop.permute.xlu0 %5637
      %5639 = vrot.lane.b32.xlu0 %v5484, 4
      %v5640 = vpop.permute.xlu0 %5639
      %5641 = vrot.lane.b32.xlu0 %v5487, 4
      %v5642 = vpop.permute.xlu0 %5641
      %5643 = vrot.lane.b32.xlu0 %v5489, 4
      %v5644 = vpop.permute.xlu0 %5643
      %5645 = vrot.lane.b32.xlu0 %v5492, 4
      %v5646 = vpop.permute.xlu0 %5645
      %5647 = vrot.lane.b32.xlu0 %v5494, 4
      %v5648 = vpop.permute.xlu0 %5647
      %5649 = vrot.lane.b32.xlu0 %v5497, 4
      %v5650 = vpop.permute.xlu0 %5649
      %5651 = vrot.lane.b32.xlu0 %v5499, 4
      %v5652 = vpop.permute.xlu0 %5651
      %5653 = vrot.lane.b32.xlu0 %v5502, 4
      %v5654 = vpop.permute.xlu0 %5653
      %5655 = vrot.lane.b32.xlu0 %v5504, 4
      %v5656 = vpop.permute.xlu0 %5655
      %5657 = vrot.lane.b32.xlu0 %v5507, 4
      %v5658 = vpop.permute.xlu0 %5657
      %5659 = vrot.lane.b32.xlu0 %v5509, 4
      %v5660 = vpop.permute.xlu0 %5659
      %5661 = vrot.lane.b32.xlu0 %v5512, 4
      %v5662 = vpop.permute.xlu0 %5661
      %5663 = vrot.lane.b32.xlu0 %v5514, 4
      %v5664 = vpop.permute.xlu0 %5663
      %5665 = vrot.lane.b32.xlu0 %v5517, 4
      %v5666 = vpop.permute.xlu0 %5665
      %5667 = vrot.lane.b32.xlu0 %v5519, 4
      %v5668 = vpop.permute.xlu0 %5667
      %5669 = vrot.lane.b32.xlu0 %v5522, 4
      %v5670 = vpop.permute.xlu0 %5669
      %5671 = vrot.lane.b32.xlu0 %v5524, 4
      %v5672 = vpop.permute.xlu0 %5671
      %5673 = vrot.lane.b32.xlu0 %v5527, 4
      %v5674 = vpop.permute.xlu0 %5673
      %5675 = vrot.lane.b32.xlu0 %v5529, 4
      %v5676 = vpop.permute.xlu0 %5675
      %5707 = vrot.lane.b32.xlu0 %v5532, 8
      %v5708 = vpop.permute.xlu0 %5707
      %5709 = vrot.lane.b32.xlu0 %v5534, 8
      %v5710 = vpop.permute.xlu0 %5709
      %5711 = vrot.lane.b32.xlu0 %v5537, 8
      %v5712 = vpop.permute.xlu0 %5711
      %5713 = vrot.lane.b32.xlu0 %v5539, 8
      %v5714 = vpop.permute.xlu0 %5713
      %5715 = vrot.lane.b32.xlu0 %v5542, 8
      %v5716 = vpop.permute.xlu0 %5715
      %5717 = vrot.lane.b32.xlu0 %v5544, 8
      %v5718 = vpop.permute.xlu0 %5717
      %5719 = vrot.lane.b32.xlu0 %v5547, 8
      %v5720 = vpop.permute.xlu0 %5719
      %5721 = vrot.lane.b32.xlu0 %v5549, 8
      %v5722 = vpop.permute.xlu0 %5721
      %5723 = vrot.lane.b32.xlu0 %v5552, 8
      %v5724 = vpop.permute.xlu0 %5723
      %5725 = vrot.lane.b32.xlu0 %v5554, 8
      %v5726 = vpop.permute.xlu0 %5725
      %5727 = vrot.lane.b32.xlu0 %v5557, 8
      %v5728 = vpop.permute.xlu0 %5727
      %5729 = vrot.lane.b32.xlu0 %v5559, 8
      %v5730 = vpop.permute.xlu0 %5729
      %5731 = vrot.lane.b32.xlu0 %v5562, 8
      %v5732 = vpop.permute.xlu0 %5731
      %5733 = vrot.lane.b32.xlu0 %v5564, 8
      %v5734 = vpop.permute.xlu0 %5733
      %5735 = vrot.lane.b32.xlu0 %v5567, 8
      %v5736 = vpop.permute.xlu0 %5735
      %5737 = vrot.lane.b32.xlu0 %v5569, 8
      %v5738 = vpop.permute.xlu0 %5737
      %5739 = vrot.lane.b32.xlu0 %v5572, 8
      %v5740 = vpop.permute.xlu0 %5739
      %5741 = vrot.lane.b32.xlu0 %v5574, 8
      %v5742 = vpop.permute.xlu0 %5741
      %5743 = vrot.lane.b32.xlu0 %v5577, 8
      %v5744 = vpop.permute.xlu0 %5743
      %5745 = vrot.lane.b32.xlu0 %v5579, 8
      %v5746 = vpop.permute.xlu0 %5745
      %5747 = vrot.lane.b32.xlu0 %v5582, 8
      %v5748 = vpop.permute.xlu0 %5747
      %5749 = vrot.lane.b32.xlu0 %v5584, 8
      %v5750 = vpop.permute.xlu0 %5749
      %5751 = vrot.lane.b32.xlu0 %v5587, 8
      %v5752 = vpop.permute.xlu0 %5751
      %5753 = vrot.lane.b32.xlu0 %v5589, 8
      %v5754 = vpop.permute.xlu0 %5753
      %5755 = vrot.lane.b32.xlu0 %v5592, 8
      %v5756 = vpop.permute.xlu0 %5755
      %5757 = vrot.lane.b32.xlu0 %v5594, 8
      %v5758 = vpop.permute.xlu0 %5757
      %5759 = vrot.lane.b32.xlu0 %v5597, 8
      %v5760 = vpop.permute.xlu0 %5759
      %5761 = vrot.lane.b32.xlu0 %v5599, 8
      %v5762 = vpop.permute.xlu0 %5761
      %5763 = vrot.lane.b32.xlu0 %v5602, 8
      %v5764 = vpop.permute.xlu0 %5763
      %5765 = vrot.lane.b32.xlu0 %v5604, 8
      %v5766 = vpop.permute.xlu0 %5765
      %5797 = vrot.lane.b32.xlu0 %v5393, 12
      %v5798 = vpop.permute.xlu0 %5797
      %5799 = vrot.lane.b32.xlu0 %v5300, 12
      %v5800 = vpop.permute.xlu0 %5799
      %5801 = vrot.lane.b32.xlu0 %v5394, 12
      %v5802 = vpop.permute.xlu0 %5801
      %5803 = vrot.lane.b32.xlu0 %v5303, 12
      %v5804 = vpop.permute.xlu0 %5803
      %5805 = vrot.lane.b32.xlu0 %v5395, 12
      %v5806 = vpop.permute.xlu0 %5805
      %5807 = vrot.lane.b32.xlu0 %v5306, 12
      %v5808 = vpop.permute.xlu0 %5807
      %5809 = vrot.lane.b32.xlu0 %v5396, 12
      %v5810 = vpop.permute.xlu0 %5809
      %5811 = vrot.lane.b32.xlu0 %v5309, 12
      %v5812 = vpop.permute.xlu0 %5811
      %5813 = vrot.lane.b32.xlu0 %v5397, 12
      %v5814 = vpop.permute.xlu0 %5813
      %5815 = vrot.lane.b32.xlu0 %v5312, 12
      %v5816 = vpop.permute.xlu0 %5815
      %5817 = vrot.lane.b32.xlu0 %v5398, 12
      %v5818 = vpop.permute.xlu0 %5817
      %5819 = vrot.lane.b32.xlu0 %v5315, 12
      %v5820 = vpop.permute.xlu0 %5819
      %5821 = vrot.lane.b32.xlu0 %v5399, 12
      %v5822 = vpop.permute.xlu0 %5821
      %5823 = vrot.lane.b32.xlu0 %v5318, 12
      %v5824 = vpop.permute.xlu0 %5823
      %5825 = vrot.lane.b32.xlu0 %v5400, 12
      %v5826 = vpop.permute.xlu0 %5825
      %5827 = vrot.lane.b32.xlu0 %v5321, 12
      %v5828 = vpop.permute.xlu0 %5827
      %5829 = vrot.lane.b32.xlu0 %v5401, 12
      %v5830 = vpop.permute.xlu0 %5829
      %5831 = vrot.lane.b32.xlu0 %v5324, 12
      %v5832 = vpop.permute.xlu0 %5831
      %5833 = vrot.lane.b32.xlu0 %v5402, 12
      %v5834 = vpop.permute.xlu0 %5833
      %5835 = vrot.lane.b32.xlu0 %v5327, 12
      %v5836 = vpop.permute.xlu0 %5835
      %5837 = vrot.lane.b32.xlu0 %v5403, 12
      %v5838 = vpop.permute.xlu0 %5837
      %5839 = vrot.lane.b32.xlu0 %v5330, 12
      %v5840 = vpop.permute.xlu0 %5839
      %5841 = vrot.lane.b32.xlu0 %v5404, 12
      %v5842 = vpop.permute.xlu0 %5841
      %5843 = vrot.lane.b32.xlu0 %v5333, 12
      %v5844 = vpop.permute.xlu0 %5843
      %5845 = vrot.lane.b32.xlu0 %v5405, 12
      %v5846 = vpop.permute.xlu0 %5845
      %5847 = vrot.lane.b32.xlu0 %v5336, 12
      %v5848 = vpop.permute.xlu0 %5847
      %5849 = vrot.lane.b32.xlu0 %v5406, 12
      %v5850 = vpop.permute.xlu0 %5849
      %5851 = vrot.lane.b32.xlu0 %v5339, 12
      %v5852 = vpop.permute.xlu0 %5851
      %5853 = vrot.lane.b32.xlu0 %v5407, 12
      %v5854 = vpop.permute.xlu0 %5853
      %5855 = vrot.lane.b32.xlu0 %v5342, 12
      %v5856 = vpop.permute.xlu0 %5855
      %5857 = vrot.lane.b32.xlu0 %v5408, 12
      %v5858 = vpop.permute.xlu0 %5857
      %5859 = vrot.lane.b32.xlu0 %v5345, 12
      %v5860 = vpop.permute.xlu0 %5859
      %5893 = vrot.lane.b32.xlu0 %v5457, 16
      %v5894 = vpop.permute.xlu0 %5893
      %5895 = vrot.lane.b32.xlu0 %v5459, 16
      %v5896 = vpop.permute.xlu0 %5895
      %5897 = vrot.lane.b32.xlu0 %v5462, 16
      %v5898 = vpop.permute.xlu0 %5897
      %5899 = vrot.lane.b32.xlu0 %v5464, 16
      %v5900 = vpop.permute.xlu0 %5899
      %5901 = vrot.lane.b32.xlu0 %v5467, 16
      %v5902 = vpop.permute.xlu0 %5901
      %5903 = vrot.lane.b32.xlu0 %v5469, 16
      %v5904 = vpop.permute.xlu0 %5903
      %5905 = vrot.lane.b32.xlu0 %v5472, 16
      %v5906 = vpop.permute.xlu0 %5905
      %5907 = vrot.lane.b32.xlu0 %v5474, 16
      %v5908 = vpop.permute.xlu0 %5907
      %5909 = vrot.lane.b32.xlu0 %v5477, 16
      %v5910 = vpop.permute.xlu0 %5909
      %5911 = vrot.lane.b32.xlu0 %v5479, 16
      %v5912 = vpop.permute.xlu0 %5911
      %5913 = vrot.lane.b32.xlu0 %v5482, 16
      %v5914 = vpop.permute.xlu0 %5913
      %5915 = vrot.lane.b32.xlu0 %v5484, 16
      %v5916 = vpop.permute.xlu0 %5915
      %5917 = vrot.lane.b32.xlu0 %v5487, 16
      %v5918 = vpop.permute.xlu0 %5917
      %5919 = vrot.lane.b32.xlu0 %v5489, 16
      %v5920 = vpop.permute.xlu0 %5919
      %5921 = vrot.lane.b32.xlu0 %v5492, 16
      %v5922 = vpop.permute.xlu0 %5921
      %5923 = vrot.lane.b32.xlu0 %v5494, 16
      %v5924 = vpop.permute.xlu0 %5923
      %5925 = vrot.lane.b32.xlu0 %v5497, 16
      %v5926 = vpop.permute.xlu0 %5925
      %5927 = vrot.lane.b32.xlu0 %v5499, 16
      %v5928 = vpop.permute.xlu0 %5927
      %5929 = vrot.lane.b32.xlu0 %v5502, 16
      %v5930 = vpop.permute.xlu0 %5929
      %5931 = vrot.lane.b32.xlu0 %v5504, 16
      %v5932 = vpop.permute.xlu0 %5931
      %5933 = vrot.lane.b32.xlu0 %v5507, 16
      %v5934 = vpop.permute.xlu0 %5933
      %5935 = vrot.lane.b32.xlu0 %v5509, 16
      %v5936 = vpop.permute.xlu0 %5935
      %5937 = vrot.lane.b32.xlu0 %v5512, 16
      %v5938 = vpop.permute.xlu0 %5937
      %5939 = vrot.lane.b32.xlu0 %v5514, 16
      %v5940 = vpop.permute.xlu0 %5939
      %5941 = vrot.lane.b32.xlu0 %v5517, 16
      %v5942 = vpop.permute.xlu0 %5941
      %5943 = vrot.lane.b32.xlu0 %v5519, 16
      %v5944 = vpop.permute.xlu0 %5943
      %5945 = vrot.lane.b32.xlu0 %v5522, 16
      %v5946 = vpop.permute.xlu0 %5945
      %5947 = vrot.lane.b32.xlu0 %v5524, 16
      %v5948 = vpop.permute.xlu0 %5947
      %5949 = vrot.lane.b32.xlu0 %v5527, 16
      %v5950 = vpop.permute.xlu0 %5949
      %5951 = vrot.lane.b32.xlu0 %v5529, 16
      %v5952 = vpop.permute.xlu0 %5951
      %5953 = vrot.lane.b32.xlu0 %v5609, 16
      %v5954 = vpop.permute.xlu0 %5953
      %5955 = vrot.lane.b32.xlu0 %v5611, 16
      %v5956 = vpop.permute.xlu0 %5955
      %5989 = vrot.lane.b32.xlu0 %v5532, 20
      %v5990 = vpop.permute.xlu0 %5989
      %5991 = vrot.lane.b32.xlu0 %v5534, 20
      %v5992 = vpop.permute.xlu0 %5991
      %5993 = vrot.lane.b32.xlu0 %v5537, 20
      %v5994 = vpop.permute.xlu0 %5993
      %5995 = vrot.lane.b32.xlu0 %v5539, 20
      %v5996 = vpop.permute.xlu0 %5995
      %5997 = vrot.lane.b32.xlu0 %v5542, 20
      %v5998 = vpop.permute.xlu0 %5997
      %5999 = vrot.lane.b32.xlu0 %v5544, 20
      %v6000 = vpop.permute.xlu0 %5999
      %6001 = vrot.lane.b32.xlu0 %v5547, 20
      %v6002 = vpop.permute.xlu0 %6001
      %6003 = vrot.lane.b32.xlu0 %v5549, 20
      %v6004 = vpop.permute.xlu0 %6003
      %6005 = vrot.lane.b32.xlu0 %v5552, 20
      %v6006 = vpop.permute.xlu0 %6005
      %6007 = vrot.lane.b32.xlu0 %v5554, 20
      %v6008 = vpop.permute.xlu0 %6007
      %6009 = vrot.lane.b32.xlu0 %v5557, 20
      %v6010 = vpop.permute.xlu0 %6009
      %6011 = vrot.lane.b32.xlu0 %v5559, 20
      %v6012 = vpop.permute.xlu0 %6011
      %6013 = vrot.lane.b32.xlu0 %v5562, 20
      %v6014 = vpop.permute.xlu0 %6013
      %6015 = vrot.lane.b32.xlu0 %v5564, 20
      %v6016 = vpop.permute.xlu0 %6015
      %6017 = vrot.lane.b32.xlu0 %v5567, 20
      %v6018 = vpop.permute.xlu0 %6017
      %6019 = vrot.lane.b32.xlu0 %v5569, 20
      %v6020 = vpop.permute.xlu0 %6019
      %6021 = vrot.lane.b32.xlu0 %v5572, 20
      %v6022 = vpop.permute.xlu0 %6021
      %6023 = vrot.lane.b32.xlu0 %v5574, 20
      %v6024 = vpop.permute.xlu0 %6023
      %6025 = vrot.lane.b32.xlu0 %v5577, 20
      %v6026 = vpop.permute.xlu0 %6025
      %6027 = vrot.lane.b32.xlu0 %v5579, 20
      %v6028 = vpop.permute.xlu0 %6027
      %6029 = vrot.lane.b32.xlu0 %v5582, 20
      %v6030 = vpop.permute.xlu0 %6029
      %6031 = vrot.lane.b32.xlu0 %v5584, 20
      %v6032 = vpop.permute.xlu0 %6031
      %6033 = vrot.lane.b32.xlu0 %v5587, 20
      %v6034 = vpop.permute.xlu0 %6033
      %6035 = vrot.lane.b32.xlu0 %v5589, 20
      %v6036 = vpop.permute.xlu0 %6035
      %6037 = vrot.lane.b32.xlu0 %v5592, 20
      %v6038 = vpop.permute.xlu0 %6037
      %6039 = vrot.lane.b32.xlu0 %v5594, 20
      %v6040 = vpop.permute.xlu0 %6039
      %6041 = vrot.lane.b32.xlu0 %v5597, 20
      %v6042 = vpop.permute.xlu0 %6041
      %6043 = vrot.lane.b32.xlu0 %v5599, 20
      %v6044 = vpop.permute.xlu0 %6043
      %6045 = vrot.lane.b32.xlu0 %v5602, 20
      %v6046 = vpop.permute.xlu0 %6045
      %6047 = vrot.lane.b32.xlu0 %v5604, 20
      %v6048 = vpop.permute.xlu0 %6047
      %6049 = vrot.lane.b32.xlu0 %v5614, 20
      %v6050 = vpop.permute.xlu0 %6049
      %6051 = vrot.lane.b32.xlu0 %v5616, 20
      %v6052 = vpop.permute.xlu0 %6051
      %6085 = vrot.lane.b32.xlu0 %v5394, 24
      %v6086 = vpop.permute.xlu0 %6085
      %6087 = vrot.lane.b32.xlu0 %v5303, 24
      %v6088 = vpop.permute.xlu0 %6087
      %6089 = vrot.lane.b32.xlu0 %v5395, 24
      %v6090 = vpop.permute.xlu0 %6089
      %6091 = vrot.lane.b32.xlu0 %v5306, 24
      %v6092 = vpop.permute.xlu0 %6091
      %6093 = vrot.lane.b32.xlu0 %v5396, 24
      %v6094 = vpop.permute.xlu0 %6093
      %6095 = vrot.lane.b32.xlu0 %v5309, 24
      %v6096 = vpop.permute.xlu0 %6095
      %6097 = vrot.lane.b32.xlu0 %v5397, 24
      %v6098 = vpop.permute.xlu0 %6097
      %6099 = vrot.lane.b32.xlu0 %v5312, 24
      %v6100 = vpop.permute.xlu0 %6099
      %6101 = vrot.lane.b32.xlu0 %v5398, 24
      %v6102 = vpop.permute.xlu0 %6101
      %6103 = vrot.lane.b32.xlu0 %v5315, 24
      %v6104 = vpop.permute.xlu0 %6103
      %6105 = vrot.lane.b32.xlu0 %v5399, 24
      %v6106 = vpop.permute.xlu0 %6105
      %6107 = vrot.lane.b32.xlu0 %v5318, 24
      %v6108 = vpop.permute.xlu0 %6107
      %6109 = vrot.lane.b32.xlu0 %v5400, 24
      %v6110 = vpop.permute.xlu0 %6109
      %6111 = vrot.lane.b32.xlu0 %v5321, 24
      %v6112 = vpop.permute.xlu0 %6111
      %6113 = vrot.lane.b32.xlu0 %v5401, 24
      %v6114 = vpop.permute.xlu0 %6113
      %6115 = vrot.lane.b32.xlu0 %v5324, 24
      %v6116 = vpop.permute.xlu0 %6115
      %6117 = vrot.lane.b32.xlu0 %v5402, 24
      %v6118 = vpop.permute.xlu0 %6117
      %6119 = vrot.lane.b32.xlu0 %v5327, 24
      %v6120 = vpop.permute.xlu0 %6119
      %6121 = vrot.lane.b32.xlu0 %v5403, 24
      %v6122 = vpop.permute.xlu0 %6121
      %6123 = vrot.lane.b32.xlu0 %v5330, 24
      %v6124 = vpop.permute.xlu0 %6123
      %6125 = vrot.lane.b32.xlu0 %v5404, 24
      %v6126 = vpop.permute.xlu0 %6125
      %6127 = vrot.lane.b32.xlu0 %v5333, 24
      %v6128 = vpop.permute.xlu0 %6127
      %6129 = vrot.lane.b32.xlu0 %v5405, 24
      %v6130 = vpop.permute.xlu0 %6129
      %6131 = vrot.lane.b32.xlu0 %v5336, 24
      %v6132 = vpop.permute.xlu0 %6131
      %6133 = vrot.lane.b32.xlu0 %v5406, 24
      %v6134 = vpop.permute.xlu0 %6133
      %6135 = vrot.lane.b32.xlu0 %v5339, 24
      %v6136 = vpop.permute.xlu0 %6135
      %6137 = vrot.lane.b32.xlu0 %v5407, 24
      %v6138 = vpop.permute.xlu0 %6137
      %6139 = vrot.lane.b32.xlu0 %v5342, 24
      %v6140 = vpop.permute.xlu0 %6139
      %6141 = vrot.lane.b32.xlu0 %v5408, 24
      %v6142 = vpop.permute.xlu0 %6141
      %6143 = vrot.lane.b32.xlu0 %v5345, 24
      %v6144 = vpop.permute.xlu0 %6143
      %6175 = vrot.lane.b32.xlu0 %v5462, 28
      %v6176 = vpop.permute.xlu0 %6175
      %6177 = vrot.lane.b32.xlu0 %v5464, 28
      %v6178 = vpop.permute.xlu0 %6177
      %6179 = vrot.lane.b32.xlu0 %v5467, 28
      %v6180 = vpop.permute.xlu0 %6179
      %6181 = vrot.lane.b32.xlu0 %v5469, 28
      %v6182 = vpop.permute.xlu0 %6181
      %6183 = vrot.lane.b32.xlu0 %v5472, 28
      %v6184 = vpop.permute.xlu0 %6183
      %6185 = vrot.lane.b32.xlu0 %v5474, 28
      %v6186 = vpop.permute.xlu0 %6185
      %6187 = vrot.lane.b32.xlu0 %v5477, 28
      %v6188 = vpop.permute.xlu0 %6187
      %6189 = vrot.lane.b32.xlu0 %v5479, 28
      %v6190 = vpop.permute.xlu0 %6189
      %6191 = vrot.lane.b32.xlu0 %v5482, 28
      %v6192 = vpop.permute.xlu0 %6191
      %6193 = vrot.lane.b32.xlu0 %v5484, 28
      %v6194 = vpop.permute.xlu0 %6193
      %6195 = vrot.lane.b32.xlu0 %v5487, 28
      %v6196 = vpop.permute.xlu0 %6195
      %6197 = vrot.lane.b32.xlu0 %v5489, 28
      %v6198 = vpop.permute.xlu0 %6197
      %6199 = vrot.lane.b32.xlu0 %v5492, 28
      %v6200 = vpop.permute.xlu0 %6199
      %6201 = vrot.lane.b32.xlu0 %v5494, 28
      %v6202 = vpop.permute.xlu0 %6201
      %6203 = vrot.lane.b32.xlu0 %v5497, 28
      %v6204 = vpop.permute.xlu0 %6203
      %6205 = vrot.lane.b32.xlu0 %v5499, 28
      %v6206 = vpop.permute.xlu0 %6205
      %6207 = vrot.lane.b32.xlu0 %v5502, 28
      %v6208 = vpop.permute.xlu0 %6207
      %6209 = vrot.lane.b32.xlu0 %v5504, 28
      %v6210 = vpop.permute.xlu0 %6209
      %6211 = vrot.lane.b32.xlu0 %v5507, 28
      %v6212 = vpop.permute.xlu0 %6211
      %6213 = vrot.lane.b32.xlu0 %v5509, 28
      %v6214 = vpop.permute.xlu0 %6213
      %6215 = vrot.lane.b32.xlu0 %v5512, 28
      %v6216 = vpop.permute.xlu0 %6215
      %6217 = vrot.lane.b32.xlu0 %v5514, 28
      %v6218 = vpop.permute.xlu0 %6217
      %6219 = vrot.lane.b32.xlu0 %v5517, 28
      %v6220 = vpop.permute.xlu0 %6219
      %6221 = vrot.lane.b32.xlu0 %v5519, 28
      %v6222 = vpop.permute.xlu0 %6221
      %6223 = vrot.lane.b32.xlu0 %v5522, 28
      %v6224 = vpop.permute.xlu0 %6223
      %6225 = vrot.lane.b32.xlu0 %v5524, 28
      %v6226 = vpop.permute.xlu0 %6225
      %6227 = vrot.lane.b32.xlu0 %v5527, 28
      %v6228 = vpop.permute.xlu0 %6227
      %6229 = vrot.lane.b32.xlu0 %v5529, 28
      %v6230 = vpop.permute.xlu0 %6229
      %6231 = vrot.lane.b32.xlu0 %v5609, 28
      %v6232 = vpop.permute.xlu0 %6231
      %6233 = vrot.lane.b32.xlu0 %v5611, 28
      %v6234 = vpop.permute.xlu0 %6233
      %6265 = vrot.lane.b32.xlu0 %v5537, 32
      %v6266 = vpop.permute.xlu0 %6265
      %6267 = vrot.lane.b32.xlu0 %v5539, 32
      %v6268 = vpop.permute.xlu0 %6267
      %6269 = vrot.lane.b32.xlu0 %v5542, 32
      %v6270 = vpop.permute.xlu0 %6269
      %6271 = vrot.lane.b32.xlu0 %v5544, 32
      %v6272 = vpop.permute.xlu0 %6271
      %6273 = vrot.lane.b32.xlu0 %v5547, 32
      %v6274 = vpop.permute.xlu0 %6273
      %6275 = vrot.lane.b32.xlu0 %v5549, 32
      %v6276 = vpop.permute.xlu0 %6275
      %6277 = vrot.lane.b32.xlu0 %v5552, 32
      %v6278 = vpop.permute.xlu0 %6277
      %6279 = vrot.lane.b32.xlu0 %v5554, 32
      %v6280 = vpop.permute.xlu0 %6279
      %6281 = vrot.lane.b32.xlu0 %v5557, 32
      %v6282 = vpop.permute.xlu0 %6281
      %6283 = vrot.lane.b32.xlu0 %v5559, 32
      %v6284 = vpop.permute.xlu0 %6283
      %6285 = vrot.lane.b32.xlu0 %v5562, 32
      %v6286 = vpop.permute.xlu0 %6285
      %6287 = vrot.lane.b32.xlu0 %v5564, 32
      %v6288 = vpop.permute.xlu0 %6287
      %6289 = vrot.lane.b32.xlu0 %v5567, 32
      %v6290 = vpop.permute.xlu0 %6289
      %6291 = vrot.lane.b32.xlu0 %v5569, 32
      %v6292 = vpop.permute.xlu0 %6291
      %6293 = vrot.lane.b32.xlu0 %v5572, 32
      %v6294 = vpop.permute.xlu0 %6293
      %6295 = vrot.lane.b32.xlu0 %v5574, 32
      %v6296 = vpop.permute.xlu0 %6295
      %6297 = vrot.lane.b32.xlu0 %v5577, 32
      %v6298 = vpop.permute.xlu0 %6297
      %6299 = vrot.lane.b32.xlu0 %v5579, 32
      %v6300 = vpop.permute.xlu0 %6299
      %6301 = vrot.lane.b32.xlu0 %v5582, 32
      %v6302 = vpop.permute.xlu0 %6301
      %6303 = vrot.lane.b32.xlu0 %v5584, 32
      %v6304 = vpop.permute.xlu0 %6303
      %6305 = vrot.lane.b32.xlu0 %v5587, 32
      %v6306 = vpop.permute.xlu0 %6305
      %6307 = vrot.lane.b32.xlu0 %v5589, 32
      %v6308 = vpop.permute.xlu0 %6307
      %6309 = vrot.lane.b32.xlu0 %v5592, 32
      %v6310 = vpop.permute.xlu0 %6309
      %6311 = vrot.lane.b32.xlu0 %v5594, 32
      %v6312 = vpop.permute.xlu0 %6311
      %6313 = vrot.lane.b32.xlu0 %v5597, 32
      %v6314 = vpop.permute.xlu0 %6313
      %6315 = vrot.lane.b32.xlu0 %v5599, 32
      %v6316 = vpop.permute.xlu0 %6315
      %6317 = vrot.lane.b32.xlu0 %v5602, 32
      %v6318 = vpop.permute.xlu0 %6317
      %6319 = vrot.lane.b32.xlu0 %v5604, 32
      %v6320 = vpop.permute.xlu0 %6319
      %6321 = vrot.lane.b32.xlu0 %v5614, 32
      %v6322 = vpop.permute.xlu0 %6321
      %6323 = vrot.lane.b32.xlu0 %v5616, 32
      %v6324 = vpop.permute.xlu0 %6323
      %v6355 = vsel %vm4634, %v5393, %v5618
      %v6356 = vsel %vm4634, %v5300, %v5620
      %v6357 = vsel %vm4634, %v5394, %v5622
      %v6358 = vsel %vm4634, %v5303, %v5624
      %v6359 = vsel %vm4634, %v5395, %v5626
      %v6360 = vsel %vm4634, %v5306, %v5628
      %v6361 = vsel %vm4634, %v5396, %v5630
      %v6362 = vsel %vm4634, %v5309, %v5632
      %v6363 = vsel %vm4634, %v5397, %v5634
      %v6364 = vsel %vm4634, %v5312, %v5636
      %v6365 = vsel %vm4634, %v5398, %v5638
      %v6366 = vsel %vm4634, %v5315, %v5640
      %v6367 = vsel %vm4634, %v5399, %v5642
      %v6368 = vsel %vm4634, %v5318, %v5644
      %v6369 = vsel %vm4634, %v5400, %v5646
      %v6370 = vsel %vm4634, %v5321, %v5648
      %v6371 = vsel %vm4634, %v5401, %v5650
      %v6372 = vsel %vm4634, %v5324, %v5652
      %v6373 = vsel %vm4634, %v5402, %v5654
      %v6374 = vsel %vm4634, %v5327, %v5656
      %v6375 = vsel %vm4634, %v5403, %v5658
      %v6376 = vsel %vm4634, %v5330, %v5660
      %v6377 = vsel %vm4634, %v5404, %v5662
      %v6378 = vsel %vm4634, %v5333, %v5664
      %v6379 = vsel %vm4634, %v5405, %v5666
      %v6380 = vsel %vm4634, %v5336, %v5668
      %v6381 = vsel %vm4634, %v5406, %v5670
      %v6382 = vsel %vm4634, %v5339, %v5672
      %v6383 = vsel %vm4634, %v5407, %v5674
      %v6384 = vsel %vm4634, %v5342, %v5676
      %v6385 = vsel %vm4666, %v6355, %v5708
      %v6386 = vsel %vm4666, %v6356, %v5710
      %v6387 = vsel %vm4666, %v6357, %v5712
      %v6388 = vsel %vm4666, %v6358, %v5714
      %v6389 = vsel %vm4666, %v6359, %v5716
      %v6390 = vsel %vm4666, %v6360, %v5718
      %v6391 = vsel %vm4666, %v6361, %v5720
      %v6392 = vsel %vm4666, %v6362, %v5722
      %v6393 = vsel %vm4666, %v6363, %v5724
      %v6394 = vsel %vm4666, %v6364, %v5726
      %v6395 = vsel %vm4666, %v6365, %v5728
      %v6396 = vsel %vm4666, %v6366, %v5730
      %v6397 = vsel %vm4666, %v6367, %v5732
      %v6398 = vsel %vm4666, %v6368, %v5734
      %v6399 = vsel %vm4666, %v6369, %v5736
      %v6400 = vsel %vm4666, %v6370, %v5738
      %v6401 = vsel %vm4666, %v6371, %v5740
      %v6402 = vsel %vm4666, %v6372, %v5742
      %v6403 = vsel %vm4666, %v6373, %v5744
      %v6404 = vsel %vm4666, %v6374, %v5746
      %v6405 = vsel %vm4666, %v6375, %v5748
      %v6406 = vsel %vm4666, %v6376, %v5750
      %v6407 = vsel %vm4666, %v6377, %v5752
      %v6408 = vsel %vm4666, %v6378, %v5754
      %v6409 = vsel %vm4666, %v6379, %v5756
      %v6410 = vsel %vm4666, %v6380, %v5758
      %v6411 = vsel %vm4666, %v6381, %v5760
      %v6412 = vsel %vm4666, %v6382, %v5762
      %v6413 = vsel %vm4666, %v6383, %v5764
      %v6414 = vsel %vm4666, %v6384, %v5766
      %v6415 = vsel %vm4698, %v4667, %v5798
      %v6416 = vsel %vm4698, %v4667, %v5800
      %v6417 = vsel %vm4698, %v6385, %v5802
      %v6418 = vsel %vm4698, %v6386, %v5804
      %v6419 = vsel %vm4698, %v6387, %v5806
      %v6420 = vsel %vm4698, %v6388, %v5808
      %v6421 = vsel %vm4698, %v6389, %v5810
      %v6422 = vsel %vm4698, %v6390, %v5812
      %v6423 = vsel %vm4698, %v6391, %v5814
      %v6424 = vsel %vm4698, %v6392, %v5816
      %v6425 = vsel %vm4698, %v6393, %v5818
      %v6426 = vsel %vm4698, %v6394, %v5820
      %v6427 = vsel %vm4698, %v6395, %v5822
      %v6428 = vsel %vm4698, %v6396, %v5824
      %v6429 = vsel %vm4698, %v6397, %v5826
      %v6430 = vsel %vm4698, %v6398, %v5828
      %v6431 = vsel %vm4698, %v6399, %v5830
      %v6432 = vsel %vm4698, %v6400, %v5832
      %v6433 = vsel %vm4698, %v6401, %v5834
      %v6434 = vsel %vm4698, %v6402, %v5836
      %v6435 = vsel %vm4698, %v6403, %v5838
      %v6436 = vsel %vm4698, %v6404, %v5840
      %v6437 = vsel %vm4698, %v6405, %v5842
      %v6438 = vsel %vm4698, %v6406, %v5844
      %v6439 = vsel %vm4698, %v6407, %v5846
      %v6440 = vsel %vm4698, %v6408, %v5848
      %v6441 = vsel %vm4698, %v6409, %v5850
      %v6442 = vsel %vm4698, %v6410, %v5852
      %v6443 = vsel %vm4698, %v6411, %v5854
      %v6444 = vsel %vm4698, %v6412, %v5856
      %v6445 = vsel %vm4698, %v6413, %v5858
      %v6446 = vsel %vm4698, %v6414, %v5860
      %v6447 = vsel %vm4731, %v6415, %v5894
      %v6448 = vsel %vm4731, %v6416, %v5896
      %v6449 = vsel %vm4731, %v6417, %v5898
      %v6450 = vsel %vm4731, %v6418, %v5900
      %v6451 = vsel %vm4731, %v6419, %v5902
      %v6452 = vsel %vm4731, %v6420, %v5904
      %v6453 = vsel %vm4731, %v6421, %v5906
      %v6454 = vsel %vm4731, %v6422, %v5908
      %v6455 = vsel %vm4731, %v6423, %v5910
      %v6456 = vsel %vm4731, %v6424, %v5912
      %v6457 = vsel %vm4731, %v6425, %v5914
      %v6458 = vsel %vm4731, %v6426, %v5916
      %v6459 = vsel %vm4731, %v6427, %v5918
      %v6460 = vsel %vm4731, %v6428, %v5920
      %v6461 = vsel %vm4731, %v6429, %v5922
      %v6462 = vsel %vm4731, %v6430, %v5924
      %v6463 = vsel %vm4731, %v6431, %v5926
      %v6464 = vsel %vm4731, %v6432, %v5928
      %v6465 = vsel %vm4731, %v6433, %v5930
      %v6466 = vsel %vm4731, %v6434, %v5932
      %v6467 = vsel %vm4731, %v6435, %v5934
      %v6468 = vsel %vm4731, %v6436, %v5936
      %v6469 = vsel %vm4731, %v6437, %v5938
      %v6470 = vsel %vm4731, %v6438, %v5940
      %v6471 = vsel %vm4731, %v6439, %v5942
      %v6472 = vsel %vm4731, %v6440, %v5944
      %v6473 = vsel %vm4731, %v6441, %v5946
      %v6474 = vsel %vm4731, %v6442, %v5948
      %v6475 = vsel %vm4731, %v6443, %v5950
      %v6476 = vsel %vm4731, %v6444, %v5952
      %v6477 = vsel %vm4731, %v6445, %v5954
      %v6478 = vsel %vm4731, %v6446, %v5956
      %v6479 = vsel %vm4764, %v6447, %v5990
      %v6480 = vsel %vm4764, %v6448, %v5992
      %v6481 = vsel %vm4764, %v6449, %v5994
      %v6482 = vsel %vm4764, %v6450, %v5996
      %v6483 = vsel %vm4764, %v6451, %v5998
      %v6484 = vsel %vm4764, %v6452, %v6000
      %v6485 = vsel %vm4764, %v6453, %v6002
      %v6486 = vsel %vm4764, %v6454, %v6004
      %v6487 = vsel %vm4764, %v6455, %v6006
      %v6488 = vsel %vm4764, %v6456, %v6008
      %v6489 = vsel %vm4764, %v6457, %v6010
      %v6490 = vsel %vm4764, %v6458, %v6012
      %v6491 = vsel %vm4764, %v6459, %v6014
      %v6492 = vsel %vm4764, %v6460, %v6016
      %v6493 = vsel %vm4764, %v6461, %v6018
      %v6494 = vsel %vm4764, %v6462, %v6020
      %v6495 = vsel %vm4764, %v6463, %v6022
      %v6496 = vsel %vm4764, %v6464, %v6024
      %v6497 = vsel %vm4764, %v6465, %v6026
      %v6498 = vsel %vm4764, %v6466, %v6028
      %v6499 = vsel %vm4764, %v6467, %v6030
      %v6500 = vsel %vm4764, %v6468, %v6032
      %v6501 = vsel %vm4764, %v6469, %v6034
      %v6502 = vsel %vm4764, %v6470, %v6036
      %v6503 = vsel %vm4764, %v6471, %v6038
      %v6504 = vsel %vm4764, %v6472, %v6040
      %v6505 = vsel %vm4764, %v6473, %v6042
      %v6506 = vsel %vm4764, %v6474, %v6044
      %v6507 = vsel %vm4764, %v6475, %v6046
      %v6508 = vsel %vm4764, %v6476, %v6048
      %v6509 = vsel %vm4764, %v6477, %v6050
      %v6510 = vsel %vm4764, %v6478, %v6052
      %v6511 = vsel %vm4797, %v6479, %v6086
      %v6512 = vsel %vm4797, %v6480, %v6088
      %v6513 = vsel %vm4797, %v6481, %v6090
      %v6514 = vsel %vm4797, %v6482, %v6092
      %v6515 = vsel %vm4797, %v6483, %v6094
      %v6516 = vsel %vm4797, %v6484, %v6096
      %v6517 = vsel %vm4797, %v6485, %v6098
      %v6518 = vsel %vm4797, %v6486, %v6100
      %v6519 = vsel %vm4797, %v6487, %v6102
      %v6520 = vsel %vm4797, %v6488, %v6104
      %v6521 = vsel %vm4797, %v6489, %v6106
      %v6522 = vsel %vm4797, %v6490, %v6108
      %v6523 = vsel %vm4797, %v6491, %v6110
      %v6524 = vsel %vm4797, %v6492, %v6112
      %v6525 = vsel %vm4797, %v6493, %v6114
      %v6526 = vsel %vm4797, %v6494, %v6116
      %v6527 = vsel %vm4797, %v6495, %v6118
      %v6528 = vsel %vm4797, %v6496, %v6120
      %v6529 = vsel %vm4797, %v6497, %v6122
      %v6530 = vsel %vm4797, %v6498, %v6124
      %v6531 = vsel %vm4797, %v6499, %v6126
      %v6532 = vsel %vm4797, %v6500, %v6128
      %v6533 = vsel %vm4797, %v6501, %v6130
      %v6534 = vsel %vm4797, %v6502, %v6132
      %v6535 = vsel %vm4797, %v6503, %v6134
      %v6536 = vsel %vm4797, %v6504, %v6136
      %v6537 = vsel %vm4797, %v6505, %v6138
      %v6538 = vsel %vm4797, %v6506, %v6140
      %v6539 = vsel %vm4797, %v6507, %v6142
      %v6540 = vsel %vm4797, %v6508, %v6144
      %v6541 = vsel %vm4797, %v6509, %v4416
      %v6542 = vsel %vm4797, %v6510, %v4416
      %v6543 = vsel %vm4830, %v6511, %v6176
      %v6544 = vsel %vm4830, %v6512, %v6178
      %v6545 = vsel %vm4830, %v6513, %v6180
      %v6546 = vsel %vm4830, %v6514, %v6182
      %v6547 = vsel %vm4830, %v6515, %v6184
      %v6548 = vsel %vm4830, %v6516, %v6186
      %v6549 = vsel %vm4830, %v6517, %v6188
      %v6550 = vsel %vm4830, %v6518, %v6190
      %v6551 = vsel %vm4830, %v6519, %v6192
      %v6552 = vsel %vm4830, %v6520, %v6194
      %v6553 = vsel %vm4830, %v6521, %v6196
      %v6554 = vsel %vm4830, %v6522, %v6198
      %v6555 = vsel %vm4830, %v6523, %v6200
      %v6556 = vsel %vm4830, %v6524, %v6202
      %v6557 = vsel %vm4830, %v6525, %v6204
      %v6558 = vsel %vm4830, %v6526, %v6206
      %v6559 = vsel %vm4830, %v6527, %v6208
      %v6560 = vsel %vm4830, %v6528, %v6210
      %v6561 = vsel %vm4830, %v6529, %v6212
      %v6562 = vsel %vm4830, %v6530, %v6214
      %v6563 = vsel %vm4830, %v6531, %v6216
      %v6564 = vsel %vm4830, %v6532, %v6218
      %v6565 = vsel %vm4830, %v6533, %v6220
      %v6566 = vsel %vm4830, %v6534, %v6222
      %v6567 = vsel %vm4830, %v6535, %v6224
      %v6568 = vsel %vm4830, %v6536, %v6226
      %v6569 = vsel %vm4830, %v6537, %v6228
      %v6570 = vsel %vm4830, %v6538, %v6230
      %v6571 = vsel %vm4830, %v6539, %v6232
      %v6572 = vsel %vm4830, %v6540, %v6234
      %v6573 = vsel %vm4830, %v6541, %v4509
      %v6574 = vsel %vm4830, %v6542, %v4509
      %v6575 = vsel %vm4863, %v6543, %v6266
      %v6576 = vsel %vm4863, %v6544, %v6268
      %v6577 = vsel %vm4863, %v6545, %v6270
      %v6578 = vsel %vm4863, %v6546, %v6272
      %v6579 = vsel %vm4863, %v6547, %v6274
      %v6580 = vsel %vm4863, %v6548, %v6276
      %v6581 = vsel %vm4863, %v6549, %v6278
      %v6582 = vsel %vm4863, %v6550, %v6280
      %v6583 = vsel %vm4863, %v6551, %v6282
      %v6584 = vsel %vm4863, %v6552, %v6284
      %v6585 = vsel %vm4863, %v6553, %v6286
      %v6586 = vsel %vm4863, %v6554, %v6288
      %v6587 = vsel %vm4863, %v6555, %v6290
      %v6588 = vsel %vm4863, %v6556, %v6292
      %v6589 = vsel %vm4863, %v6557, %v6294
      %v6590 = vsel %vm4863, %v6558, %v6296
      %v6591 = vsel %vm4863, %v6559, %v6298
      %v6592 = vsel %vm4863, %v6560, %v6300
      %v6593 = vsel %vm4863, %v6561, %v6302
      %v6594 = vsel %vm4863, %v6562, %v6304
      %v6595 = vsel %vm4863, %v6563, %v6306
      %v6596 = vsel %vm4863, %v6564, %v6308
      %v6597 = vsel %vm4863, %v6565, %v6310
      %v6598 = vsel %vm4863, %v6566, %v6312
      %v6599 = vsel %vm4863, %v6567, %v6314
      %v6600 = vsel %vm4863, %v6568, %v6316
      %v6601 = vsel %vm4863, %v6569, %v6318
      %v6602 = vsel %vm4863, %v6570, %v6320
      %v6603 = vsel %vm4863, %v6571, %v6322
      %v6604 = vsel %vm4863, %v6572, %v6324
      %v6605 = vsel %vm4863, %v6573, %v4602
      %v6606 = vsel %vm4863, %v6574, %v4602
      %v6607 = vld [vmem:[%s4] sm:$0xff]
      %v6608 = vld [vmem:[%s4 + $0x8] sm:$0xff]
      %v6609 = vld [vmem:[%s4 + $0x10] sm:$0xff]
      %v6610 = vld [vmem:[%s4 + $0x18] sm:$0xff]
      %v6611 = vld [vmem:[%s4 + $0x20] sm:$0xf]
      %v6612 = vld [vmem:[%s5] sm:$0x1]
      %v6614 = vlaneseq
      %v6615 = vshrl.u32 %v6614, 7
      %v6616 = vsub.s32 0, %v6615
      %v6617 = vrot.slane %v6612, %v6616
      %v6620 = vsel %vm4908, %v6575, 0
      %v6623 = vsel %vm4908, %v6576, 0
      %v6626 = vsel %vm4908, %v6577, 0
      %v6629 = vsel %vm4908, %v6578, 0
      %v6632 = vsel %vm4908, %v6579, 0
      %v6635 = vsel %vm4908, %v6580, 0
      %v6638 = vsel %vm4908, %v6581, 0
      %v6641 = vsel %vm4908, %v6582, 0
      %v6644 = vsel %vm4908, %v6583, 0
      %v6647 = vsel %vm4908, %v6584, 0
      %v6650 = vsel %vm4908, %v6585, 0
      %v6653 = vsel %vm4908, %v6586, 0
      %v6656 = vsel %vm4908, %v6587, 0
      %v6659 = vsel %vm4908, %v6588, 0
      %v6662 = vsel %vm4908, %v6589, 0
      %v6665 = vsel %vm4908, %v6590, 0
      %v6668 = vsel %vm4908, %v6591, 0
      %v6671 = vsel %vm4908, %v6592, 0
      %v6674 = vsel %vm4908, %v6593, 0
      %v6677 = vsel %vm4908, %v6594, 0
      %v6680 = vsel %vm4908, %v6595, 0
      %v6683 = vsel %vm4908, %v6596, 0
      %v6686 = vsel %vm4908, %v6597, 0
      %v6689 = vsel %vm4908, %v6598, 0
      %v6692 = vsel %vm4908, %v6599, 0
      %v6695 = vsel %vm4908, %v6600, 0
      %v6698 = vsel %vm4908, %v6601, 0
      %v6701 = vsel %vm4908, %v6602, 0
      %v6704 = vsel %vm4908, %v6603, 0
      %v6707 = vsel %vm4908, %v6604, 0
      %v6710 = vsel %vm4908, %v6605, 0
      %v6713 = vsel %vm4908, %v6606, 0
      %v6716 = vsel %vm5005, %v6611, 0
      %6718 = vmatprep.subr.mxu0 0.0
      %6719 = vmatpush1.msra.mxu0 0.0
      %6720 = vmatprep.subr.mxu0 0.0
      %6721 = vmatpush1.msra.mxu0 0.0
      %6722 = vmatprep.subr.mxu0 0.0
      %6723 = vmatpush1.msra.mxu0 0.0
      %6724 = vmatprep.subr.mxu0 0.0
      %6725 = vmatpush1.msra.mxu0 0.0
      %6726 = vmatprep.subr.mxu0 0.0
      %6727 = vmatpush1.msra.mxu0 0.0
      %6728 = vmatprep.subr.mxu0 0.0
      %6729 = vmatpush1.msra.mxu0 0.0
      %6730 = vmatprep.subr.mxu0 0.0
      %6731 = vmatpush1.msra.mxu0 0.0
      %6732 = vmatprep.subr.mxu0 0.0
      %6733 = vmatpush1.msra.mxu0 0.0
      %6734 = vmatprep.subr.mxu0 0.0
      %6735 = vmatpush1.msra.mxu0 0.0
      %6736 = vmatprep.subr.mxu0 0.0
      %6737 = vmatpush1.msra.mxu0 0.0
      %6738 = vmatprep.subr.mxu0 0.0
      %6739 = vmatpush1.msra.mxu0 0.0
      %6740 = vmatprep.subr.mxu0 0.0
      %6741 = vmatpush1.msra.mxu0 %v6716
      %6742 = vmatprep.subr.mxu0 0.0
      %6743 = vmatpush1.msra.mxu0 %v6610
      %6744 = vmatprep.subr.mxu0 0.0
      %6745 = vmatpush1.msra.mxu0 %v6609
      %6746 = vmatprep.subr.mxu0 0.0
      %6747 = vmatpush1.msra.mxu0 %v6608
      %6748 = vmatprep.subr.mxu0 0.0
      %6749 = vmatpush1.msra.mxu0 %v6607
      %6750 = vmatprep.subr.mxu0 0.0
      %6751 = vmatpush2.msra.mxu0 0.0
      %6752 = vmatprep.subr.mxu0 0.0
      %6753 = vmatpush2.msra.mxu0 0.0
      %6754 = vmatprep.subr.mxu0 0.0
      %6755 = vmatpush2.msra.mxu0 0.0
      %6756 = vmatprep.subr.mxu0 0.0
      %6757 = vmatpush2.msra.mxu0 0.0
      %6758 = vmatprep.subr.mxu0 0.0
      %6759 = vmatpush2.msra.mxu0 0.0
      %6760 = vmatprep.subr.mxu0 0.0
      %6761 = vmatpush2.msra.mxu0 0.0
      %6762 = vmatprep.subr.mxu0 0.0
      %6763 = vmatpush2.msra.mxu0 0.0
      %6764 = vmatprep.subr.mxu0 0.0
      %6765 = vmatpush2.msra.mxu0 0.0
      %6766 = vmatprep.subr.mxu0 0.0
      %6767 = vmatpush2.msra.mxu0 0.0
      %6768 = vmatprep.subr.mxu0 0.0
      %6769 = vmatpush2.msra.mxu0 0.0
      %6770 = vmatprep.subr.mxu0 0.0
      %6771 = vmatpush2.msra.mxu0 0.0
      %6772 = vmatprep.subr.mxu0 0.0
      %6773 = vmatpush2.msra.mxu0 0.0
      %6774 = vmatprep.subr.mxu0 0.0
      %6775 = vmatpush2.msra.mxu0 0.0
      %6776 = vmatprep.subr.mxu0 0.0
      %6777 = vmatpush2.msra.mxu0 0.0
      %6778 = vmatprep.subr.mxu0 0.0
      %6779 = vmatpush2.msra.mxu0 0.0
      %6780 = vmatprep.subr.mxu0 0.0
      %6781 = vmatpush2.msra.mxu0 0.0
      %6782 = vmatprep.mubr.f32.mxu0 0.0
      %6783 = vmatmul.mubr.f32.gmra.mxu0 %v6620
      %v6784 = vpop.f32.mrf.mxu0
      %v6785 = vadd.f32 %v6617, %v6784
      %v6786 = vpop.f32.mrf.mxu0
      %6787 = vmatprep.mubr.f32.mxu0 0.0
      %6788 = vmatmul.mubr.f32.gmra.mxu0 %v6623
      %v6789 = vpop.f32.mrf.mxu0
      %v6790 = vadd.f32 %v6617, %v6789
      %v6791 = vpop.f32.mrf.mxu0
      %6792 = vmatprep.mubr.f32.mxu0 0.0
      %6793 = vmatmul.mubr.f32.gmra.mxu0 %v6626
      %v6794 = vpop.f32.mrf.mxu0
      %v6795 = vadd.f32 %v6617, %v6794
      %v6796 = vpop.f32.mrf.mxu0
      %6797 = vmatprep.mubr.f32.mxu0 0.0
      %6798 = vmatmul.mubr.f32.gmra.mxu0 %v6629
      %v6799 = vpop.f32.mrf.mxu0
      %v6800 = vadd.f32 %v6617, %v6799
      %v6801 = vpop.f32.mrf.mxu0
      %6802 = vmatprep.mubr.f32.mxu0 0.0
      %6803 = vmatmul.mubr.f32.gmra.mxu0 %v6632
      %v6804 = vpop.f32.mrf.mxu0
      %v6805 = vadd.f32 %v6617, %v6804
      %v6806 = vpop.f32.mrf.mxu0
      %6807 = vmatprep.mubr.f32.mxu0 0.0
      %6808 = vmatmul.mubr.f32.gmra.mxu0 %v6635
      %v6809 = vpop.f32.mrf.mxu0
      %v6810 = vadd.f32 %v6617, %v6809
      %v6811 = vpop.f32.mrf.mxu0
      %6812 = vmatprep.mubr.f32.mxu0 0.0
      %6813 = vmatmul.mubr.f32.gmra.mxu0 %v6638
      %v6814 = vpop.f32.mrf.mxu0
      %v6815 = vadd.f32 %v6617, %v6814
      %v6816 = vpop.f32.mrf.mxu0
      %6817 = vmatprep.mubr.f32.mxu0 0.0
      %6818 = vmatmul.mubr.f32.gmra.mxu0 %v6641
      %v6819 = vpop.f32.mrf.mxu0
      %v6820 = vadd.f32 %v6617, %v6819
      %v6821 = vpop.f32.mrf.mxu0
      %6822 = vmatprep.mubr.f32.mxu0 0.0
      %6823 = vmatmul.mubr.f32.gmra.mxu0 %v6644
      %v6824 = vpop.f32.mrf.mxu0
      %v6825 = vadd.f32 %v6617, %v6824
      %v6826 = vpop.f32.mrf.mxu0
      %6827 = vmatprep.mubr.f32.mxu0 0.0
      %6828 = vmatmul.mubr.f32.gmra.mxu0 %v6647
      %v6829 = vpop.f32.mrf.mxu0
      %v6830 = vadd.f32 %v6617, %v6829
      %v6831 = vpop.f32.mrf.mxu0
      %6832 = vmatprep.mubr.f32.mxu0 0.0
      %6833 = vmatmul.mubr.f32.gmra.mxu0 %v6650
      %v6834 = vpop.f32.mrf.mxu0
      %v6835 = vadd.f32 %v6617, %v6834
      %v6836 = vpop.f32.mrf.mxu0
      %6837 = vmatprep.mubr.f32.mxu0 0.0
      %6838 = vmatmul.mubr.f32.gmra.mxu0 %v6653
      %v6839 = vpop.f32.mrf.mxu0
      %v6840 = vadd.f32 %v6617, %v6839
      %v6841 = vpop.f32.mrf.mxu0
      %6842 = vmatprep.mubr.f32.mxu0 0.0
      %6843 = vmatmul.mubr.f32.gmra.mxu0 %v6656
      %v6844 = vpop.f32.mrf.mxu0
      %v6845 = vadd.f32 %v6617, %v6844
      %v6846 = vpop.f32.mrf.mxu0
      %6847 = vmatprep.mubr.f32.mxu0 0.0
      %6848 = vmatmul.mubr.f32.gmra.mxu0 %v6659
      %v6849 = vpop.f32.mrf.mxu0
      %v6850 = vadd.f32 %v6617, %v6849
      %v6851 = vpop.f32.mrf.mxu0
      %6852 = vmatprep.mubr.f32.mxu0 0.0
      %6853 = vmatmul.mubr.f32.gmra.mxu0 %v6662
      %v6854 = vpop.f32.mrf.mxu0
      %v6855 = vadd.f32 %v6617, %v6854
      %v6856 = vpop.f32.mrf.mxu0
      %6857 = vmatprep.mubr.f32.mxu0 0.0
      %6858 = vmatmul.mubr.f32.gmra.mxu0 %v6665
      %v6859 = vpop.f32.mrf.mxu0
      %v6860 = vadd.f32 %v6617, %v6859
      %v6861 = vpop.f32.mrf.mxu0
      %6862 = vmatprep.mubr.f32.mxu0 0.0
      %6863 = vmatmul.mubr.f32.gmra.mxu0 %v6668
      %v6864 = vpop.f32.mrf.mxu0
      %v6865 = vadd.f32 %v6617, %v6864
      %v6866 = vpop.f32.mrf.mxu0
      %6867 = vmatprep.mubr.f32.mxu0 0.0
      %6868 = vmatmul.mubr.f32.gmra.mxu0 %v6671
      %v6869 = vpop.f32.mrf.mxu0
      %v6870 = vadd.f32 %v6617, %v6869
      %v6871 = vpop.f32.mrf.mxu0
      %6872 = vmatprep.mubr.f32.mxu0 0.0
      %6873 = vmatmul.mubr.f32.gmra.mxu0 %v6674
      %v6874 = vpop.f32.mrf.mxu0
      %v6875 = vadd.f32 %v6617, %v6874
      %v6876 = vpop.f32.mrf.mxu0
      %6877 = vmatprep.mubr.f32.mxu0 0.0
      %6878 = vmatmul.mubr.f32.gmra.mxu0 %v6677
      %v6879 = vpop.f32.mrf.mxu0
      %v6880 = vadd.f32 %v6617, %v6879
      %v6881 = vpop.f32.mrf.mxu0
      %6882 = vmatprep.mubr.f32.mxu0 0.0
      %6883 = vmatmul.mubr.f32.gmra.mxu0 %v6680
      %v6884 = vpop.f32.mrf.mxu0
      %v6885 = vadd.f32 %v6617, %v6884
      %v6886 = vpop.f32.mrf.mxu0
      %6887 = vmatprep.mubr.f32.mxu0 0.0
      %6888 = vmatmul.mubr.f32.gmra.mxu0 %v6683
      %v6889 = vpop.f32.mrf.mxu0
      %v6890 = vadd.f32 %v6617, %v6889
      %v6891 = vpop.f32.mrf.mxu0
      %6892 = vmatprep.mubr.f32.mxu0 0.0
      %6893 = vmatmul.mubr.f32.gmra.mxu0 %v6686
      %v6894 = vpop.f32.mrf.mxu0
      %v6895 = vadd.f32 %v6617, %v6894
      %v6896 = vpop.f32.mrf.mxu0
      %6897 = vmatprep.mubr.f32.mxu0 0.0
      %6898 = vmatmul.mubr.f32.gmra.mxu0 %v6689
      %v6899 = vpop.f32.mrf.mxu0
      %v6900 = vadd.f32 %v6617, %v6899
      %v6901 = vpop.f32.mrf.mxu0
      %6902 = vmatprep.mubr.f32.mxu0 0.0
      %6903 = vmatmul.mubr.f32.gmra.mxu0 %v6692
      %v6904 = vpop.f32.mrf.mxu0
      %v6905 = vadd.f32 %v6617, %v6904
      %v6906 = vpop.f32.mrf.mxu0
      %6907 = vmatprep.mubr.f32.mxu0 0.0
      %6908 = vmatmul.mubr.f32.gmra.mxu0 %v6695
      %v6909 = vpop.f32.mrf.mxu0
      %v6910 = vadd.f32 %v6617, %v6909
      %v6911 = vpop.f32.mrf.mxu0
      %6912 = vmatprep.mubr.f32.mxu0 0.0
      %6913 = vmatmul.mubr.f32.gmra.mxu0 %v6698
      %v6914 = vpop.f32.mrf.mxu0
      %v6915 = vadd.f32 %v6617, %v6914
      %v6916 = vpop.f32.mrf.mxu0
      %6917 = vmatprep.mubr.f32.mxu0 0.0
      %6918 = vmatmul.mubr.f32.gmra.mxu0 %v6701
      %v6919 = vpop.f32.mrf.mxu0
      %v6920 = vadd.f32 %v6617, %v6919
      %v6921 = vpop.f32.mrf.mxu0
      %6922 = vmatprep.mubr.f32.mxu0 0.0
      %6923 = vmatmul.mubr.f32.gmra.mxu0 %v6704
      %v6924 = vpop.f32.mrf.mxu0
      %v6925 = vadd.f32 %v6617, %v6924
      %v6926 = vpop.f32.mrf.mxu0
      %6927 = vmatprep.mubr.f32.mxu0 0.0
      %6928 = vmatmul.mubr.f32.gmra.mxu0 %v6707
      %v6929 = vpop.f32.mrf.mxu0
      %v6930 = vadd.f32 %v6617, %v6929
      %v6931 = vpop.f32.mrf.mxu0
      %6932 = vmatprep.mubr.f32.mxu0 0.0
      %6933 = vmatmul.mubr.f32.gmra.mxu0 %v6710
      %v6934 = vpop.f32.mrf.mxu0
      %v6935 = vadd.f32 %v6617, %v6934
      %v6936 = vpop.f32.mrf.mxu0
      %6937 = vmatprep.mubr.f32.mxu0 0.0
      %6938 = vmatmul.mubr.f32.gmra.mxu0 %v6713
      %v6939 = vpop.f32.mrf.mxu0
      %v6940 = vadd.f32 %v6617, %v6939
      %v6941 = vpop.f32.mrf.mxu0
      %6942 = vdwg.mxu0
      %v6943 = vmax.f32 %v6785, 0.0
      %v6944 = vmax.f32 %v6790, 0.0
      %v6945 = vmax.f32 %v6795, 0.0
      %v6946 = vmax.f32 %v6800, 0.0
      %v6947 = vmax.f32 %v6805, 0.0
      %v6948 = vmax.f32 %v6810, 0.0
      %v6949 = vmax.f32 %v6815, 0.0
      %v6950 = vmax.f32 %v6820, 0.0
      %v6951 = vmax.f32 %v6825, 0.0
      %v6952 = vmax.f32 %v6830, 0.0
      %v6953 = vmax.f32 %v6835, 0.0
      %v6954 = vmax.f32 %v6840, 0.0
      %v6955 = vmax.f32 %v6845, 0.0
      %v6956 = vmax.f32 %v6850, 0.0
      %v6957 = vmax.f32 %v6855, 0.0
      %v6958 = vmax.f32 %v6860, 0.0
      %v6959 = vmax.f32 %v6865, 0.0
      %v6960 = vmax.f32 %v6870, 0.0
      %v6961 = vmax.f32 %v6875, 0.0
      %v6962 = vmax.f32 %v6880, 0.0
      %v6963 = vmax.f32 %v6885, 0.0
      %v6964 = vmax.f32 %v6890, 0.0
      %v6965 = vmax.f32 %v6895, 0.0
      %v6966 = vmax.f32 %v6900, 0.0
      %v6967 = vmax.f32 %v6905, 0.0
      %v6968 = vmax.f32 %v6910, 0.0
      %v6969 = vmax.f32 %v6915, 0.0
      %v6970 = vmax.f32 %v6920, 0.0
      %v6971 = vmax.f32 %v6925, 0.0
      %v6972 = vmax.f32 %v6930, 0.0
      %v6973 = vmax.f32 %v6935, 0.0
      %v6974 = vmax.f32 %v6940, 0.0
      %6975 = vxpose.xlu0.b32.start [1/16] %v6943, 128
      %6976 = vxpose.xlu0.b32.cont [2/16] %v6944, 128
      %6977 = vxpose.xlu0.b32.cont [3/16] %v6945, 128
      %6978 = vxpose.xlu0.b32.cont [4/16] %v6946, 128
      %6979 = vxpose.xlu0.b32.cont [5/16] %v6947, 128
      %6980 = vxpose.xlu0.b32.cont [6/16] %v6948, 128
      %6981 = vxpose.xlu0.b32.cont [7/16] %v6949, 128
      %6982 = vxpose.xlu0.b32.cont [8/16] %v6950, 128
      %6983 = vxpose.xlu0.b32.cont [9/16] %v6951, 128
      %6984 = vxpose.xlu0.b32.cont [10/16] %v6952, 128
      %6985 = vxpose.xlu0.b32.cont [11/16] %v6953, 128
      %6986 = vxpose.xlu0.b32.cont [12/16] %v6954, 128
      %6987 = vxpose.xlu0.b32.cont [13/16] %v6955, 128
      %6988 = vxpose.xlu0.b32.cont [14/16] %v6956, 128
      %6989 = vxpose.xlu0.b32.cont [15/16] %v6957, 128
      %6990 = vxpose.xlu0.b32.end [16/16] %v6958, 128
      %v6991 = vpop.trf.xlu0
      %v6992 = vpop.trf.xlu0
      %v6993 = vpop.trf.xlu0
      %v6994 = vpop.trf.xlu0
      %v6995 = vpop.trf.xlu0
      %v6996 = vpop.trf.xlu0
      %v6997 = vpop.trf.xlu0
      %v6998 = vpop.trf.xlu0
      %v6999 = vpop.trf.xlu0
      %v7000 = vpop.trf.xlu0
      %v7001 = vpop.trf.xlu0
      %v7002 = vpop.trf.xlu0
      %v7003 = vpop.trf.xlu0
      %v7004 = vpop.trf.xlu0
      %v7005 = vpop.trf.xlu0
      %v7006 = vpop.trf.xlu0
      %7007 = vxpose.xlu0.b32.start [1/16] %v6959, 128
      %7008 = vxpose.xlu0.b32.cont [2/16] %v6960, 128
      %7009 = vxpose.xlu0.b32.cont [3/16] %v6961, 128
      %7010 = vxpose.xlu0.b32.cont [4/16] %v6962, 128
      %7011 = vxpose.xlu0.b32.cont [5/16] %v6963, 128
      %7012 = vxpose.xlu0.b32.cont [6/16] %v6964, 128
      %7013 = vxpose.xlu0.b32.cont [7/16] %v6965, 128
      %7014 = vxpose.xlu0.b32.cont [8/16] %v6966, 128
      %7015 = vxpose.xlu0.b32.cont [9/16] %v6967, 128
      %7016 = vxpose.xlu0.b32.cont [10/16] %v6968, 128
      %7017 = vxpose.xlu0.b32.cont [11/16] %v6969, 128
      %7018 = vxpose.xlu0.b32.cont [12/16] %v6970, 128
      %7019 = vxpose.xlu0.b32.cont [13/16] %v6971, 128
      %7020 = vxpose.xlu0.b32.cont [14/16] %v6972, 128
      %7021 = vxpose.xlu0.b32.cont [15/16] %v6973, 128
      %7022 = vxpose.xlu0.b32.end [16/16] %v6974, 128
      %v7023 = vpop.trf.xlu0
      %v7024 = vpop.trf.xlu0
      %v7025 = vpop.trf.xlu0
      %v7026 = vpop.trf.xlu0
      %v7027 = vpop.trf.xlu0
      %v7028 = vpop.trf.xlu0
      %v7029 = vpop.trf.xlu0
      %v7030 = vpop.trf.xlu0
      %v7031 = vpop.trf.xlu0
      %v7032 = vpop.trf.xlu0
      %v7033 = vpop.trf.xlu0
      %v7034 = vpop.trf.xlu0
      %v7035 = vpop.trf.xlu0
      %v7036 = vpop.trf.xlu0
      %v7037 = vpop.trf.xlu0
      %v7038 = vpop.trf.xlu0
      %7039 = vst [vmem:[%s271] sm:$0xff] %v6991
      %7040 = vst [vmem:[%s271 + $0x8] sm:$0xff] %v7023
      %p7041 = scmp.lt.s32.totalorder %s17, 1
      %s7042 = scalar_select %p7041, %s17, 1
      %s7043 = smul.addr %s7042, 2
      %s7044 = smul.addr %s7043, 8
      %s7045 = scalar_lea.vmem %s6, %s7044
      // Predicated region
      $region45: #{upsample_block_forward.1} parent=43 // pred_check
        %p7046 = pneg %p171
      $region46: #{upsample_block_forward.1} parent=43 // pred_check_branch
        %7048 = sbr.rel (%p7046) target = $region48
      $region47: #{upsample_block_forward.1} parent=43 // pred_region
        _
      $region48: #{upsample_block_forward.1} parent=43 // pred_fallthru
        _
    $region44: #{upsample_block_forward.1} parent=5 // pred_fallthru
      _
    %p7049 = scmp.le.s32.totalorder 2, %s12
    // Predicated region
    $region49: #{upsample_block_forward.1} parent=5 // pred_check
      %p7050 = pneg %p7049
    $region50: #{upsample_block_forward.1} parent=5 // pred_check_branch
      %7052 = sbr.rel (%p7050) target = $region52
    $region51: #{upsample_block_forward.1} parent=5 // pred_region
      %s7053 = ssub.s32 %s12, 2
      // Predicated region
      $region53: #{upsample_block_forward.1} parent=51 // pred_check
        %p7054 = pneg %p177
      $region54: #{upsample_block_forward.1} parent=51 // pred_check_branch
        %7056 = sbr.rel (%p7054) target = $region56
      $region55: #{upsample_block_forward.1} parent=51 // pred_region
        %p7057 = scmp.lt.s32.totalorder %s18, 1
        %s7058 = scalar_select %p7057, %s18, 1
        %s7059 = smul.addr %s7058, 2
        %s7060 = smul.addr %s7059, 8
        %s7061 = scalar_lea.vmem %s6, %s7060
      $region56: #{upsample_block_forward.1} parent=51 // pred_fallthru
        _
    $region52: #{upsample_block_forward.1} parent=5 // pred_fallthru
      _
  $region6: #{upsample_block_forward.1} parent=0 // loop_footer
    %s16 = sadd.s32 1, %s12
  $region7: #{upsample_block_forward.1} parent=0 // loop_footer_branch
    %11 = sbr.rel target = $region3
  $region8: #{upsample_block_forward.1} parent=0 // loop_exit
    _

</llo_original>
